<compile_context>
chip_gen: v7x
topology: tpu7x:2x2x1
jax: 0.10.0
libtpu: 0.0.40
codegen_flags: <defaults>
</compile_context>

<pallas_src>
import jax
import jax.numpy as jnp
from jax.experimental import pallas as pl
from jax.experimental.pallas import tpu as pltpu

_PACK_MAX_K = 576   # pack the 9 conv taps along K when 9*C <= this (i.e. C <= 64)

# ----------------------------------------------------------------------------
# Rational (Pade) activation, degree (5,4):
#   R(x) = (a0 + a1 x + ... + a5 x^5) / (1 + |b1 x + b2 x^2 + b3 x^3 + b4 x^4|)
# Deterministic coefficients (synthetic init approximating LeakyReLU).
# ----------------------------------------------------------------------------
_RAT_NUM = (0.03, 0.62, 2.32, 3.05, 1.49, 0.25)   # a0..a5
_RAT_DEN = (2.40, 0.25, 1.20, 0.05)               # b1..b4


def _rational_poly(x):
    a0, a1, a2, a3, a4, a5 = _RAT_NUM
    b1, b2, b3, b4 = _RAT_DEN
    num = a0 + x * (a1 + x * (a2 + x * (a3 + x * (a4 + x * a5))))
    den = x * (b1 + x * (b2 + x * (b3 + x * b4)))
    return num, 1.0 + jnp.abs(den)


def _rational_kernel(x):
    # In-kernel: reciprocal goes to the EUP (own VLIW slot); den >= 1 so approx is safe.
    num, den = _rational_poly(x)
    return num * pl.reciprocal(den, approx=True)


def _rational_ref(x):
    num, den = _rational_poly(x)
    return num / den


# ----------------------------------------------------------------------------
# Fused RationalBasicBlock kernel (one batch image per grid step).
# ----------------------------------------------------------------------------
def _make_block_kernel(*, stride, Ho, Wo, Cin, Cout, has_down, pack1, pack2):
    M = Ho * Wo
    use_col = pack1 or pack2

    def conv3x3_acc(win_fn, w_ref, acc_ref, col_ref, packed, cch):
        """Accumulate a 3x3 conv into acc_ref (f32). win_fn(kh,kw) -> (Ho,Wo,cch) bf16."""
        if packed:
            # Pack the 9 taps along K into the im2col scratch -> ONE MXU GEMM (K = 9*cch).
            for kh in range(3):
                for kw in range(3):
                    t = kh * 3 + kw
                    col_ref[:, t * cch:(t + 1) * cch] = win_fn(kh, kw).reshape(M, cch)
            acc_ref[...] += jnp.dot(col_ref[:, :9 * cch], w_ref[...],
                                    preferred_element_type=jnp.float32)
        else:
            # Wide channels: 9 shifted GEMMs, f32 accumulation in the VMEM scratch.
            for kh in range(3):
                for kw in range(3):
                    acc_ref[...] += jnp.dot(win_fn(kh, kw).reshape(M, cch),
                                            w_ref[kh * 3 + kw],
                                            preferred_element_type=jnp.float32)

    def kernel(*refs):
        x_ref, w1_ref, b1_ref, w2_ref, b2_ref = refs[:5]
        i = 5
        if has_down:
            wd_ref, bd_ref = refs[5:7]
            i = 7
        o_ref, h1_ref, acc_ref = refs[i:i + 3]
        col_ref = refs[i + 3] if use_col else None

        # conv1 windows from the stride-phase planes of the zero-padded input.
        def win1(kh, kw):
            p = (kh % stride) * stride + (kw % stride)
            di, dj = kh // stride, kw // stride
            return x_ref[0, p, di:di + Ho, dj:dj + Wo, :]

        # ---- conv1 (3x3, stride s) + folded bn1 -----------------------------
        acc_ref[...] = jnp.broadcast_to(b1_ref[...], (M, Cout))
        conv3x3_acc(win1, w1_ref, acc_ref, col_ref, pack1, Cin)

        # ---- rational -> h1 (bf16) written into a zero-bordered VMEM scratch
        #      (the border IS conv2's padding=1; h1 never goes to HBM) --------
        h1_ref[...] = jnp.zeros_like(h1_ref)
        h1_ref[1:Ho + 1, 1:Wo + 1, :] = (
            _rational_kernel(acc_ref[...]).astype(h1_ref.dtype).reshape(Ho, Wo, Cout))

        # ---- conv2 (3x3, stride 1) + folded bn2, read straight from scratch -
        def win2(kh, kw):
            return h1_ref[kh:kh + Ho, kw:kw + Wo, :]

        acc_ref[...] = jnp.broadcast_to(b2_ref[...], (M, Cout))
        conv3x3_acc(win2, w2_ref, acc_ref, col_ref, pack2, Cout)

        # ---- residual, sourced from the already-resident conv1 input --------
        if stride == 1:
            xres = x_ref[0, 0, 1:1 + Ho, 1:1 + Wo, :]     # interior of padded x
        else:
            xres = x_ref[0, 3, 0:Ho, 0:Wo, :]             # == x[::2, ::2]
        if has_down:
            acc_ref[...] += (jnp.dot(xres.reshape(M, Cin), wd_ref[...],
                                     preferred_element_type=jnp.float32)
                             + bd_ref[...])
        else:
            acc_ref[...] += xres.reshape(M, Cout).astype(jnp.float32)

        # ---- rational -> block output ----------------------------------------
        o_ref[0] = _rational_kernel(acc_ref[...]).astype(o_ref.dtype)

    return kernel


def _const_index_map(ndim):
    return lambda n: (0,) * ndim


def _vmem_limit_bytes():
    # Size the scoped-VMEM budget per TPU generation (high on 128 MiB v5e/v6e,
    # conservative on 64 MiB v7x); fall back to a value safe on all parts.
    try:
        cap = pltpu.get_tpu_info().vmem_capacity_bytes
        return max(32 * 1024 * 1024, min(int(cap * 0.85), 100 * 1024 * 1024))
    except Exception:
        return 48 * 1024 * 1024


def fused_rational_block(phases, w1, b1, w2, b2, down, *, stride, Ho, Wo, out_dtype):
    """One fused RationalBasicBlock forward as a single pallas_call.

    phases : (N, P, Hr, Wr, Cin) bf16 stride-phase planes of the zero-padded input
    w1/w2  : tap-packed (9*Cin, Cout) or per-tap (9, Cin, Cout) bf16, BN scale folded in
    b1/b2  : (Cout,) f32 folded BN bias
    down   : (wd (Cin, Cout) bf16, bd (Cout,) f32) for the 1x1 downsample path, or None
    """
    N, P, Hr, Wr, Cin = phases.shape
    Cout = b1.shape[-1]
    M = Ho * Wo
    pack1, pack2 = (w1.ndim == 2), (w2.ndim == 2)
    use_col = pack1 or pack2
    has_down = down is not None

    b1_2 = b1.reshape(1, Cout).astype(jnp.float32)
    b2_2 = b2.reshape(1, Cout).astype(jnp.float32)

    inputs = [phases, w1, b1_2, w2, b2_2]
    in_specs = [
        pl.BlockSpec((1, P, Hr, Wr, Cin), lambda n: (n, 0, 0, 0, 0)),
        pl.BlockSpec(w1.shape, _const_index_map(w1.ndim)),    # constant index -> DMA'd once
        pl.BlockSpec(b1_2.shape, _const_index_map(2)),
        pl.BlockSpec(w2.shape, _const_index_map(w2.ndim)),
        pl.BlockSpec(b2_2.shape, _const_index_map(2)),
    ]
    if has_down:
        wd, bd = down
        bd_2 = bd.reshape(1, Cout).astype(jnp.float32)
        inputs += [wd, bd_2]
        in_specs += [pl.BlockSpec(wd.shape, _const_index_map(2)),
                     pl.BlockSpec(bd_2.shape, _const_index_map(2))]

    scratch = [pltpu.VMEM((Ho + 2, Wo + 2, Cout), jnp.bfloat16),   # h1 (zero border = conv2 pad)
               pltpu.VMEM((M, Cout), jnp.float32)]                 # f32 accumulator
    if use_col:
        kcands = []
        if pack1:
            kcands.append(9 * Cin)
        if pack2:
            kcands.append(9 * Cout)
        scratch.append(pltpu.VMEM((M, max(kcands)), jnp.bfloat16))  # tap-packed im2col

    kernel = _make_block_kernel(stride=stride, Ho=Ho, Wo=Wo, Cin=Cin, Cout=Cout,
                                has_down=has_down, pack1=pack1, pack2=pack2)

    return pl.pallas_call(
        kernel,
        out_shape=jax.ShapeDtypeStruct((N, M, Cout), out_dtype),
        grid=(N,),
        in_specs=in_specs,
        out_specs=pl.BlockSpec((1, M, Cout), lambda n: (n, 0, 0)),
        scratch_shapes=scratch,
        compiler_params=pltpu.CompilerParams(
            dimension_semantics=("parallel",),      # megacore: shard images across TCs
            vmem_limit_bytes=_vmem_limit_bytes(),
        ),
    )(*inputs)


# ----------------------------------------------------------------------------
# Plain-JAX glue (1x-sized data movement only)
# ----------------------------------------------------------------------------
def _phase_planes(x_nhwc, stride):
    """Zero-pad spatially by 1 and decompose into stride-phase planes (bf16)."""
    N, H, W, C = x_nhwc.shape
    xp = jnp.pad(x_nhwc.astype(jnp.bfloat16), ((0, 0), (1, 1), (1, 1), (0, 0)))
    if stride == 1:
        return xp[:, None]
    assert stride == 2 and H % 2 == 0 and W % 2 == 0, "stride-2 conv needs even H, W"
    planes = [xp[:, pr::2, pc::2, :] for pr in range(2) for pc in range(2)]
    return jnp.stack(planes, axis=1)


def _fold_bn(gamma, beta, mean, var, eps=1e-5):
    scale = gamma / jnp.sqrt(var + eps)
    return scale, beta - mean * scale


def _pack_taps(c):
    return 9 * c <= _PACK_MAX_K


def _prep_conv3x3(w_hwio, bn):
    scale, bias = _fold_bn(*bn)
    w = w_hwio * scale                                  # fold BN scale into conv weights
    _, _, cin, cout = w.shape
    w = w.reshape(9 * cin, cout) if _pack_taps(cin) else w.reshape(9, cin, cout)
    return w.astype(jnp.bfloat16), bias.astype(jnp.float32)


def _prep_conv1x1(w_io, bn):
    scale, bias = _fold_bn(*bn)
    return (w_io * scale).astype(jnp.bfloat16), bias.astype(jnp.float32)


def prepare_layer_params(raw_params):
    """Fold BN (inference mode) and lay out weights for the kernel (no channel padding)."""
    prepped = []
    for p in raw_params:
        blk = {"stride": p["stride"]}
        blk["w1"], blk["b1"] = _prep_conv3x3(p["conv1_w"], p["bn1"])
        blk["w2"], blk["b2"] = _prep_conv3x3(p["conv2_w"], p["bn2"])
        if "down_w" in p:
            blk["wd"], blk["bd"] = _prep_conv1x1(p["down_w"], p["down_bn"])
        prepped.append(blk)
    return prepped


def rational_basic_block(x_nhwc, p, *, out_dtype):
    """x_nhwc: (N, H, W, Cin) bf16. Returns (N, Ho, Wo, Cout) out_dtype."""
    stride = p["stride"]
    N, H, W, Cin = x_nhwc.shape
    Cout = p["b1"].shape[-1]
    assert H % stride == 0 and W % stride == 0
    Ho, Wo = H // stride, W // stride

    down = (p["wd"], p["bd"]) if "wd" in p else None
    if down is None:
        assert Cin == Cout, "identity residual needs matching channel counts"

    out = fused_rational_block(_phase_planes(x_nhwc, stride),
                               p["w1"], p["b1"], p["w2"], p["b2"], down,
                               stride=stride, Ho=Ho, Wo=Wo, out_dtype=out_dtype)
    return out.reshape(N, Ho, Wo, Cout)


def rational_resnet_layer(x_nchw, prepped_params):
    x = jnp.transpose(x_nchw, (0, 2, 3, 1)).astype(jnp.bfloat16)   # NCHW -> NHWC, bf16 path
    n_blk = len(prepped_params)
    for i, blk in enumerate(prepped_params):
        out_dtype = jnp.float32 if i == n_blk - 1 else jnp.bfloat16  # bf16 inter-block acts
        x = rational_basic_block(x, blk, out_dtype=out_dtype)
    return jnp.transpose(x, (0, 3, 1, 2))                           # NHWC -> NCHW


# ----------------------------------------------------------------------------
# Deterministic parameter init (shapes per module __init__)
# ----------------------------------------------------------------------------
def init_layer_params(key, num_blocks, planes_in, planes_out, stride, w_scale=0.1):
    params = []
    cin = planes_in
    for i in range(num_blocks):
        s = stride if i == 0 else 1
        key, *ks = jax.random.split(key, 16)

        def bn_init(k0, k1, k2, k3, c):
            return (jax.random.uniform(k0, (c,), jnp.float32, 0.5, 1.5),   # gamma
                    0.1 * jax.random.normal(k1, (c,), jnp.float32),        # beta
                    0.1 * jax.random.normal(k2, (c,), jnp.float32),        # running_mean
                    jax.random.uniform(k3, (c,), jnp.float32, 0.5, 1.5))   # running_var

        blk = {
            "stride": s,
            "conv1_w": w_scale * jax.random.normal(ks[0], (3, 3, cin, planes_out), jnp.float32),
            "bn1": bn_init(ks[1], ks[2], ks[3], ks[4], planes_out),
            "conv2_w": w_scale * jax.random.normal(ks[5], (3, 3, planes_out, planes_out), jnp.float32),
            "bn2": bn_init(ks[6], ks[7], ks[8], ks[9], planes_out),
        }
        if i == 0 and (s != 1 or cin != planes_out):
            blk["down_w"] = w_scale * jax.random.normal(ks[10], (cin, planes_out), jnp.float32)
            blk["down_bn"] = bn_init(ks[11], ks[12], ks[13], ks[14], planes_out)
        params.append(blk)
        cin = planes_out
    return params


# ----------------------------------------------------------------------------
# Pure-JAX f32 reference (HIGHEST precision) for correctness validation
# ----------------------------------------------------------------------------
def _ref_conv(x, w, stride, pad):
    return jax.lax.conv_general_dilated(
        x, w, (stride, stride), ((pad, pad), (pad, pad)),
        dimension_numbers=("NHWC", "HWIO", "NHWC"),
        precision=jax.lax.Precision.HIGHEST)


def _ref_layer(x_nchw, raw_params):
    x = jnp.transpose(x_nchw, (0, 2, 3, 1))
    for p in raw_params:
        s = p["stride"]
        h = _ref_conv(x, p["conv1_w"], s, 1)
        s1, b1 = _fold_bn(*p["bn1"])
        h = _rational_ref(h * s1 + b1)
        h2 = _ref_conv(h, p["conv2_w"], 1, 1)
        s2, b2 = _fold_bn(*p["bn2"])
        h2 = h2 * s2 + b2
        if "down_w" in p:
            idn = _ref_conv(x, p["down_w"][None, None], s, 0)
            sd, bd = _fold_bn(*p["down_bn"])
            idn = idn * sd + bd
        else:
            idn = x
        x = _rational_ref(h2 + idn)
    return jnp.transpose(x, (0, 3, 1, 2))


if __name__ == "__main__":
    key = jax.random.PRNGKey(0)
    k_x, k_p, k_x2, k_p2 = jax.random.split(key, 4)

    # Config 1: RationalResNetLayer(num_blocks=2, planes_in=4, planes_out=8, stride=2)
    #   block 0: stride-2 conv1 + fused 1x1 downsample residual (tap-packed small-C path)
    #   block 1: stride-1, identity residual sourced from the VMEM-resident input.
    N, C_in, H, W = 2, 4, 16, 16
    planes_out, num_blocks, stride = 8, 2, 2
    x = jax.random.normal(k_x, (N, C_in, H, W), jnp.float32)        # NCHW, like PyTorch
    raw = init_layer_params(k_p, num_blocks, C_in, planes_out, stride)
    prepped = prepare_layer_params(raw)

    fwd = jax.jit(lambda xx: rational_resnet_layer(xx, prepped))
    out = jax.block_until_ready(fwd(x))
    assert out.shape == (N, planes_out, H // stride, W // stride), out.shape
    ref = jax.block_until_ready(_ref_layer(x, raw))
    err1 = float(jnp.max(jnp.abs(out - ref)))
    # bf16 MXU operands + bf16 inter-block activations + approx EUP reciprocal vs f32 HIGHEST.
    assert jnp.allclose(out, ref, rtol=7e-2, atol=2e-1), f"config1 max_err={err1}"

    # Config 2: one identity block with 80 channels -> exercises the per-tap (wide-channel)
    # GEMM path and the fused identity-residual epilogue at stride 1.
    N2, C2, H2, W2 = 2, 80, 8, 8
    x2 = jax.random.normal(k_x2, (N2, C2, H2, W2), jnp.float32)
    raw2 = init_layer_params(k_p2, 1, C2, C2, 1, w_scale=0.05)
    prepped2 = prepare_layer_params(raw2)
    out2 = jax.block_until_ready(jax.jit(lambda xx: rational_resnet_layer(xx, prepped2))(x2))
    assert out2.shape == (N2, C2, H2, W2), out2.shape
    ref2 = jax.block_until_ready(_ref_layer(x2, raw2))
    err2 = float(jnp.max(jnp.abs(out2 - ref2)))
    assert jnp.allclose(out2, ref2, rtol=7e-2, atol=2e-1), f"config2 max_err={err2}"

    print("KERNEL_OK")
</pallas_src>

<mosaic_0001>
module attributes {stable_mosaic.version = 11 : i64} {
  func.func @kernel(%arg0: i32, %arg1: memref<1x4x9x9x4xbf16, #tpu.memory_space<vmem>>, %arg2: memref<36x8xbf16, #tpu.memory_space<vmem>>, %arg3: memref<1x8xf32, #tpu.memory_space<vmem>>, %arg4: memref<72x8xbf16, #tpu.memory_space<vmem>>, %arg5: memref<1x8xf32, #tpu.memory_space<vmem>>, %arg6: memref<4x8xbf16, #tpu.memory_space<vmem>>, %arg7: memref<1x8xf32, #tpu.memory_space<vmem>>, %arg8: memref<1x64x8xbf16, #tpu.memory_space<vmem>>, %arg9: memref<10x10x8xbf16, #tpu.memory_space<vmem>>, %arg10: memref<64x8xf32, #tpu.memory_space<vmem>>, %arg11: memref<64x72xbf16, #tpu.memory_space<vmem>>) attributes {dimension_semantics = [#tpu.dimension_semantics<parallel>], iteration_bounds = array<i64: 2>, scalar_prefetch = 0 : i64, scratch_operands = 3 : i64, tpu.core_type = #tpu.core_type<tc>, window_params = [{transform_indices = @transform_0, window_bounds = array<i64: 1, 4, 9, 9, 4>}, {pipeline_mode = #tpu.pipeline_mode<synchronous>, transform_indices = @transform_1, window_bounds = array<i64: 36, 8>}, {pipeline_mode = #tpu.pipeline_mode<synchronous>, transform_indices = @transform_2, window_bounds = array<i64: 1, 8>}, {pipeline_mode = #tpu.pipeline_mode<synchronous>, transform_indices = @transform_3, window_bounds = array<i64: 72, 8>}, {pipeline_mode = #tpu.pipeline_mode<synchronous>, transform_indices = @transform_4, window_bounds = array<i64: 1, 8>}, {pipeline_mode = #tpu.pipeline_mode<synchronous>, transform_indices = @transform_5, window_bounds = array<i64: 4, 8>}, {pipeline_mode = #tpu.pipeline_mode<synchronous>, transform_indices = @transform_6, window_bounds = array<i64: 1, 8>}, {transform_indices = @transform_7, window_bounds = array<i64: 1, 64, 8>}]} {
    %c0 = arith.constant 0 : index
    %c0_0 = arith.constant 0 : index
    %0 = vector.load %arg3[%c0, %c0_0] : memref<1x8xf32, #tpu.memory_space<vmem>>, vector<1x8xf32>
    %1 = vector.shape_cast %0 : vector<1x8xf32> to vector<1x8xf32>
    %2 = vector.broadcast %1 : vector<1x8xf32> to vector<64x8xf32>
    %c0_1 = arith.constant 0 : index
    %c0_2 = arith.constant 0 : index
    %3 = vector.load %arg10[%c0_1, %c0_2] : memref<64x8xf32, #tpu.memory_space<vmem>>, vector<64x8xf32>
    tpu.vector_store %arg10[%c0_1, %c0_2], %2 {strides = array<i32>} : memref<64x8xf32, #tpu.memory_space<vmem>>, vector<64x8xf32>,
    %c0_3 = arith.constant 0 : index
    %c0_4 = arith.constant 0 : index
    %c0_5 = arith.constant 0 : index
    %c0_6 = arith.constant 0 : index
    %c0_7 = arith.constant 0 : index
    %4 = vector.load %arg1[%c0_3, %c0_4, %c0_5, %c0_6, %c0_7] : memref<1x4x9x9x4xbf16, #tpu.memory_space<vmem>>, vector<1x1x8x8x4xbf16>
    %5 = vector.shape_cast %4 : vector<1x1x8x8x4xbf16> to vector<8x8x4xbf16>
    %6 = vector.shape_cast %5 : vector<8x8x4xbf16> to vector<64x4xbf16>
    %c0_8 = arith.constant 0 : index
    %c0_9 = arith.constant 0 : index
    %7 = vector.load %arg11[%c0_8, %c0_9] : memref<64x72xbf16, #tpu.memory_space<vmem>>, vector<64x4xbf16>
    tpu.vector_store %arg11[%c0_8, %c0_9], %6 {strides = array<i32>} : memref<64x72xbf16, #tpu.memory_space<vmem>>, vector<64x4xbf16>,
    %c0_10 = arith.constant 0 : index
    %c1 = arith.constant 1 : index
    %c0_11 = arith.constant 0 : index
    %c0_12 = arith.constant 0 : index
    %c0_13 = arith.constant 0 : index
    %8 = vector.load %arg1[%c0_10, %c1, %c0_11, %c0_12, %c0_13] : memref<1x4x9x9x4xbf16, #tpu.memory_space<vmem>>, vector<1x1x8x8x4xbf16>
    %9 = vector.shape_cast %8 : vector<1x1x8x8x4xbf16> to vector<8x8x4xbf16>
    %10 = vector.shape_cast %9 : vector<8x8x4xbf16> to vector<64x4xbf16>
    %c0_14 = arith.constant 0 : index
    %c4 = arith.constant 4 : index
    %11 = vector.load %arg11[%c0_14, %c4] : memref<64x72xbf16, #tpu.memory_space<vmem>>, vector<64x4xbf16>
    tpu.vector_store %arg11[%c0_14, %c4], %10 {strides = array<i32>} : memref<64x72xbf16, #tpu.memory_space<vmem>>, vector<64x4xbf16>,
    %c0_15 = arith.constant 0 : index
    %c0_16 = arith.constant 0 : index
    %c0_17 = arith.constant 0 : index
    %c1_18 = arith.constant 1 : index
    %c0_19 = arith.constant 0 : index
    %12 = vector.load %arg1[%c0_15, %c0_16, %c0_17, %c1_18, %c0_19] : memref<1x4x9x9x4xbf16, #tpu.memory_space<vmem>>, vector<1x1x8x8x4xbf16>
    %13 = vector.shape_cast %12 : vector<1x1x8x8x4xbf16> to vector<8x8x4xbf16>
    %14 = vector.shape_cast %13 : vector<8x8x4xbf16> to vector<64x4xbf16>
    %c0_20 = arith.constant 0 : index
    %c8 = arith.constant 8 : index
    %15 = vector.load %arg11[%c0_20, %c8] : memref<64x72xbf16, #tpu.memory_space<vmem>>, vector<64x4xbf16>
    tpu.vector_store %arg11[%c0_20, %c8], %14 {strides = array<i32>} : memref<64x72xbf16, #tpu.memory_space<vmem>>, vector<64x4xbf16>,
    %c0_21 = arith.constant 0 : index
    %c2 = arith.constant 2 : index
    %c0_22 = arith.constant 0 : index
    %c0_23 = arith.constant 0 : index
    %c0_24 = arith.constant 0 : index
    %16 = vector.load %arg1[%c0_21, %c2, %c0_22, %c0_23, %c0_24] : memref<1x4x9x9x4xbf16, #tpu.memory_space<vmem>>, vector<1x1x8x8x4xbf16>
    %17 = vector.shape_cast %16 : vector<1x1x8x8x4xbf16> to vector<8x8x4xbf16>
    %18 = vector.shape_cast %17 : vector<8x8x4xbf16> to vector<64x4xbf16>
    %c0_25 = arith.constant 0 : index
    %c12 = arith.constant 12 : index
    %19 = vector.load %arg11[%c0_25, %c12] : memref<64x72xbf16, #tpu.memory_space<vmem>>, vector<64x4xbf16>
    tpu.vector_store %arg11[%c0_25, %c12], %18 {strides = array<i32>} : memref<64x72xbf16, #tpu.memory_space<vmem>>, vector<64x4xbf16>,
    %c0_26 = arith.constant 0 : index
    %c3 = arith.constant 3 : index
    %c0_27 = arith.constant 0 : index
    %c0_28 = arith.constant 0 : index
    %c0_29 = arith.constant 0 : index
    %20 = vector.load %arg1[%c0_26, %c3, %c0_27, %c0_28, %c0_29] : memref<1x4x9x9x4xbf16, #tpu.memory_space<vmem>>, vector<1x1x8x8x4xbf16>
    %21 = vector.shape_cast %20 : vector<1x1x8x8x4xbf16> to vector<8x8x4xbf16>
    %22 = vector.shape_cast %21 : vector<8x8x4xbf16> to vector<64x4xbf16>
    %c0_30 = arith.constant 0 : index
    %c16 = arith.constant 16 : index
    %23 = vector.load %arg11[%c0_30, %c16] : memref<64x72xbf16, #tpu.memory_space<vmem>>, vector<64x4xbf16>
    tpu.vector_store %arg11[%c0_30, %c16], %22 {strides = array<i32>} : memref<64x72xbf16, #tpu.memory_space<vmem>>, vector<64x4xbf16>,
    %c0_31 = arith.constant 0 : index
    %c2_32 = arith.constant 2 : index
    %c0_33 = arith.constant 0 : index
    %c1_34 = arith.constant 1 : index
    %c0_35 = arith.constant 0 : index
    %24 = vector.load %arg1[%c0_31, %c2_32, %c0_33, %c1_34, %c0_35] : memref<1x4x9x9x4xbf16, #tpu.memory_space<vmem>>, vector<1x1x8x8x4xbf16>
    %25 = vector.shape_cast %24 : vector<1x1x8x8x4xbf16> to vector<8x8x4xbf16>
    %26 = vector.shape_cast %25 : vector<8x8x4xbf16> to vector<64x4xbf16>
    %c0_36 = arith.constant 0 : index
    %c20 = arith.constant 20 : index
    %27 = vector.load %arg11[%c0_36, %c20] : memref<64x72xbf16, #tpu.memory_space<vmem>>, vector<64x4xbf16>
    tpu.vector_store %arg11[%c0_36, %c20], %26 {strides = array<i32>} : memref<64x72xbf16, #tpu.memory_space<vmem>>, vector<64x4xbf16>,
    %c0_37 = arith.constant 0 : index
    %c0_38 = arith.constant 0 : index
    %c1_39 = arith.constant 1 : index
    %c0_40 = arith.constant 0 : index
    %c0_41 = arith.constant 0 : index
    %28 = vector.load %arg1[%c0_37, %c0_38, %c1_39, %c0_40, %c0_41] : memref<1x4x9x9x4xbf16, #tpu.memory_space<vmem>>, vector<1x1x8x8x4xbf16>
    %29 = vector.shape_cast %28 : vector<1x1x8x8x4xbf16> to vector<8x8x4xbf16>
    %30 = vector.shape_cast %29 : vector<8x8x4xbf16> to vector<64x4xbf16>
    %c0_42 = arith.constant 0 : index
    %c24 = arith.constant 24 : index
    %31 = vector.load %arg11[%c0_42, %c24] : memref<64x72xbf16, #tpu.memory_space<vmem>>, vector<64x4xbf16>
    tpu.vector_store %arg11[%c0_42, %c24], %30 {strides = array<i32>} : memref<64x72xbf16, #tpu.memory_space<vmem>>, vector<64x4xbf16>,
    %c0_43 = arith.constant 0 : index
    %c1_44 = arith.constant 1 : index
    %c1_45 = arith.constant 1 : index
    %c0_46 = arith.constant 0 : index
    %c0_47 = arith.constant 0 : index
    %32 = vector.load %arg1[%c0_43, %c1_44, %c1_45, %c0_46, %c0_47] : memref<1x4x9x9x4xbf16, #tpu.memory_space<vmem>>, vector<1x1x8x8x4xbf16>
    %33 = vector.shape_cast %32 : vector<1x1x8x8x4xbf16> to vector<8x8x4xbf16>
    %34 = vector.shape_cast %33 : vector<8x8x4xbf16> to vector<64x4xbf16>
    %c0_48 = arith.constant 0 : index
    %c28 = arith.constant 28 : index
    %35 = vector.load %arg11[%c0_48, %c28] : memref<64x72xbf16, #tpu.memory_space<vmem>>, vector<64x4xbf16>
    tpu.vector_store %arg11[%c0_48, %c28], %34 {strides = array<i32>} : memref<64x72xbf16, #tpu.memory_space<vmem>>, vector<64x4xbf16>,
    %c0_49 = arith.constant 0 : index
    %c0_50 = arith.constant 0 : index
    %c1_51 = arith.constant 1 : index
    %c1_52 = arith.constant 1 : index
    %c0_53 = arith.constant 0 : index
    %36 = vector.load %arg1[%c0_49, %c0_50, %c1_51, %c1_52, %c0_53] : memref<1x4x9x9x4xbf16, #tpu.memory_space<vmem>>, vector<1x1x8x8x4xbf16>
    %37 = vector.shape_cast %36 : vector<1x1x8x8x4xbf16> to vector<8x8x4xbf16>
    %38 = vector.shape_cast %37 : vector<8x8x4xbf16> to vector<64x4xbf16>
    %c0_54 = arith.constant 0 : index
    %c32 = arith.constant 32 : index
    %39 = vector.load %arg11[%c0_54, %c32] : memref<64x72xbf16, #tpu.memory_space<vmem>>, vector<64x4xbf16>
    tpu.vector_store %arg11[%c0_54, %c32], %38 {strides = array<i32>} : memref<64x72xbf16, #tpu.memory_space<vmem>>, vector<64x4xbf16>,
    %c0_55 = arith.constant 0 : index
    %c0_56 = arith.constant 0 : index
    %40 = vector.load %arg10[%c0_55, %c0_56] : memref<64x8xf32, #tpu.memory_space<vmem>>, vector<64x8xf32>
    %c0_57 = arith.constant 0 : index
    %c0_58 = arith.constant 0 : index
    %41 = vector.load %arg11[%c0_57, %c0_58] : memref<64x72xbf16, #tpu.memory_space<vmem>>, vector<64x36xbf16>
    %c0_59 = arith.constant 0 : index
    %c0_60 = arith.constant 0 : index
    %42 = vector.load %arg2[%c0_59, %c0_60] : memref<36x8xbf16, #tpu.memory_space<vmem>>, vector<36x8xbf16>
    %cst = arith.constant dense<0.000000e+00> : vector<64x8xf32>
    %43 = tpu.matmul %41, %42, %cst {dimension_numbers = #tpu.dot_dimension_numbers<[1], [0], [0], [1], [0, 0, 1, 1], [], []>} : vector<64x36xbf16>, vector<36x8xbf16>, vector<64x8xf32> -> vector<64x8xf32>
    %44 = arith.addf %40, %43 : vector<64x8xf32>
    %c0_61 = arith.constant 0 : index
    %c0_62 = arith.constant 0 : index
    %45 = vector.load %arg10[%c0_61, %c0_62] : memref<64x8xf32, #tpu.memory_space<vmem>>, vector<64x8xf32>
    tpu.vector_store %arg10[%c0_61, %c0_62], %44 {strides = array<i32>} : memref<64x8xf32, #tpu.memory_space<vmem>>, vector<64x8xf32>,
    %cst_63 = arith.constant 0.000000e+00 : bf16
    %46 = vector.broadcast %cst_63 : bf16 to vector<10x10x8xbf16>
    %c0_64 = arith.constant 0 : index
    %c0_65 = arith.constant 0 : index
    %c0_66 = arith.constant 0 : index
    %47 = vector.load %arg9[%c0_64, %c0_65, %c0_66] : memref<10x10x8xbf16, #tpu.memory_space<vmem>>, vector<10x10x8xbf16>
    tpu.vector_store %arg9[%c0_64, %c0_65, %c0_66], %46 {strides = array<i32>} : memref<10x10x8xbf16, #tpu.memory_space<vmem>>, vector<10x10x8xbf16>,
    %c0_67 = arith.constant 0 : index
    %c0_68 = arith.constant 0 : index
    %48 = vector.load %arg10[%c0_67, %c0_68] : memref<64x8xf32, #tpu.memory_space<vmem>>, vector<64x8xf32>
    %cst_69 = arith.constant 2.500000e-01 : f32
    %49 = vector.broadcast %cst_69 : f32 to vector<64x8xf32>
    %50 = arith.mulf %48, %49 : vector<64x8xf32>
    %cst_70 = arith.constant 1.490000e+00 : f32
    %51 = vector.broadcast %cst_70 : f32 to vector<64x8xf32>
    %52 = arith.addf %51, %50 : vector<64x8xf32>
    %53 = arith.mulf %48, %52 : vector<64x8xf32>
    %cst_71 = arith.constant 3.050000e+00 : f32
    %54 = vector.broadcast %cst_71 : f32 to vector<64x8xf32>
    %55 = arith.addf %54, %53 : vector<64x8xf32>
    %56 = arith.mulf %48, %55 : vector<64x8xf32>
    %cst_72 = arith.constant 2.320000e+00 : f32
    %57 = vector.broadcast %cst_72 : f32 to vector<64x8xf32>
    %58 = arith.addf %57, %56 : vector<64x8xf32>
    %59 = arith.mulf %48, %58 : vector<64x8xf32>
    %cst_73 = arith.constant 6.200000e-01 : f32
    %60 = vector.broadcast %cst_73 : f32 to vector<64x8xf32>
    %61 = arith.addf %60, %59 : vector<64x8xf32>
    %62 = arith.mulf %48, %61 : vector<64x8xf32>
    %cst_74 = arith.constant 3.000000e-02 : f32
    %63 = vector.broadcast %cst_74 : f32 to vector<64x8xf32>
    %64 = arith.addf %63, %62 : vector<64x8xf32>
    %cst_75 = arith.constant 5.000000e-02 : f32
    %65 = vector.broadcast %cst_75 : f32 to vector<64x8xf32>
    %66 = arith.mulf %48, %65 : vector<64x8xf32>
    %cst_76 = arith.constant 1.200000e+00 : f32
    %67 = vector.broadcast %cst_76 : f32 to vector<64x8xf32>
    %68 = arith.addf %67, %66 : vector<64x8xf32>
    %69 = arith.mulf %48, %68 : vector<64x8xf32>
    %cst_77 = arith.constant 2.500000e-01 : f32
    %70 = vector.broadcast %cst_77 : f32 to vector<64x8xf32>
    %71 = arith.addf %70, %69 : vector<64x8xf32>
    %72 = arith.mulf %48, %71 : vector<64x8xf32>
    %cst_78 = arith.constant 2.400000e+00 : f32
    %73 = vector.broadcast %cst_78 : f32 to vector<64x8xf32>
    %74 = arith.addf %73, %72 : vector<64x8xf32>
    %75 = arith.mulf %48, %74 : vector<64x8xf32>
    %76 = math.absf %75 : vector<64x8xf32>
    %cst_79 = arith.constant 1.000000e+00 : f32
    %77 = vector.broadcast %cst_79 : f32 to vector<64x8xf32>
    %78 = arith.addf %77, %76 : vector<64x8xf32>
    %79 = tpu.reciprocal %78 {approx = true} : vector<64x8xf32> -> vector<64x8xf32>
    %80 = arith.mulf %64, %79 : vector<64x8xf32>
    %81 = arith.truncf %80 : vector<64x8xf32> to vector<64x8xbf16>
    %82 = vector.shape_cast %81 : vector<64x8xbf16> to vector<8x8x8xbf16>
    %c1_80 = arith.constant 1 : index
    %c1_81 = arith.constant 1 : index
    %c0_82 = arith.constant 0 : index
    %83 = vector.load %arg9[%c1_80, %c1_81, %c0_82] : memref<10x10x8xbf16, #tpu.memory_space<vmem>>, vector<8x8x8xbf16>
    tpu.vector_store %arg9[%c1_80, %c1_81, %c0_82], %82 {strides = array<i32>} : memref<10x10x8xbf16, #tpu.memory_space<vmem>>, vector<8x8x8xbf16>,
    %c0_83 = arith.constant 0 : index
    %c0_84 = arith.constant 0 : index
    %84 = vector.load %arg5[%c0_83, %c0_84] : memref<1x8xf32, #tpu.memory_space<vmem>>, vector<1x8xf32>
    %85 = vector.shape_cast %84 : vector<1x8xf32> to vector<1x8xf32>
    %86 = vector.broadcast %85 : vector<1x8xf32> to vector<64x8xf32>
    %c0_85 = arith.constant 0 : index
    %c0_86 = arith.constant 0 : index
    %87 = vector.load %arg10[%c0_85, %c0_86] : memref<64x8xf32, #tpu.memory_space<vmem>>, vector<64x8xf32>
    tpu.vector_store %arg10[%c0_85, %c0_86], %86 {strides = array<i32>} : memref<64x8xf32, #tpu.memory_space<vmem>>, vector<64x8xf32>,
    %c0_87 = arith.constant 0 : index
    %c0_88 = arith.constant 0 : index
    %c0_89 = arith.constant 0 : index
    %88 = vector.load %arg9[%c0_87, %c0_88, %c0_89] : memref<10x10x8xbf16, #tpu.memory_space<vmem>>, vector<8x8x8xbf16>
    %89 = vector.shape_cast %88 : vector<8x8x8xbf16> to vector<64x8xbf16>
    %c0_90 = arith.constant 0 : index
    %c0_91 = arith.constant 0 : index
    %90 = vector.load %arg11[%c0_90, %c0_91] : memref<64x72xbf16, #tpu.memory_space<vmem>>, vector<64x8xbf16>
    tpu.vector_store %arg11[%c0_90, %c0_91], %89 {strides = array<i32>} : memref<64x72xbf16, #tpu.memory_space<vmem>>, vector<64x8xbf16>,
    %c0_92 = arith.constant 0 : index
    %c1_93 = arith.constant 1 : index
    %c0_94 = arith.constant 0 : index
    %91 = vector.load %arg9[%c0_92, %c1_93, %c0_94] : memref<10x10x8xbf16, #tpu.memory_space<vmem>>, vector<8x8x8xbf16>
    %92 = vector.shape_cast %91 : vector<8x8x8xbf16> to vector<64x8xbf16>
    %c0_95 = arith.constant 0 : index
    %c8_96 = arith.constant 8 : index
    %93 = vector.load %arg11[%c0_95, %c8_96] : memref<64x72xbf16, #tpu.memory_space<vmem>>, vector<64x8xbf16>
    tpu.vector_store %arg11[%c0_95, %c8_96], %92 {strides = array<i32>} : memref<64x72xbf16, #tpu.memory_space<vmem>>, vector<64x8xbf16>,
    %c0_97 = arith.constant 0 : index
    %c2_98 = arith.constant 2 : index
    %c0_99 = arith.constant 0 : index
    %94 = vector.load %arg9[%c0_97, %c2_98, %c0_99] : memref<10x10x8xbf16, #tpu.memory_space<vmem>>, vector<8x8x8xbf16>
    %95 = vector.shape_cast %94 : vector<8x8x8xbf16> to vector<64x8xbf16>
    %c0_100 = arith.constant 0 : index
    %c16_101 = arith.constant 16 : index
    %96 = vector.load %arg11[%c0_100, %c16_101] : memref<64x72xbf16, #tpu.memory_space<vmem>>, vector<64x8xbf16>
    tpu.vector_store %arg11[%c0_100, %c16_101], %95 {strides = array<i32>} : memref<64x72xbf16, #tpu.memory_space<vmem>>, vector<64x8xbf16>,
    %c1_102 = arith.constant 1 : index
    %c0_103 = arith.constant 0 : index
    %c0_104 = arith.constant 0 : index
    %97 = vector.load %arg9[%c1_102, %c0_103, %c0_104] : memref<10x10x8xbf16, #tpu.memory_space<vmem>>, vector<8x8x8xbf16>
    %98 = vector.shape_cast %97 : vector<8x8x8xbf16> to vector<64x8xbf16>
    %c0_105 = arith.constant 0 : index
    %c24_106 = arith.constant 24 : index
    %99 = vector.load %arg11[%c0_105, %c24_106] : memref<64x72xbf16, #tpu.memory_space<vmem>>, vector<64x8xbf16>
    tpu.vector_store %arg11[%c0_105, %c24_106], %98 {strides = array<i32>} : memref<64x72xbf16, #tpu.memory_space<vmem>>, vector<64x8xbf16>,
    %c1_107 = arith.constant 1 : index
    %c1_108 = arith.constant 1 : index
    %c0_109 = arith.constant 0 : index
    %100 = vector.load %arg9[%c1_107, %c1_108, %c0_109] : memref<10x10x8xbf16, #tpu.memory_space<vmem>>, vector<8x8x8xbf16>
    %101 = vector.shape_cast %100 : vector<8x8x8xbf16> to vector<64x8xbf16>
    %c0_110 = arith.constant 0 : index
    %c32_111 = arith.constant 32 : index
    %102 = vector.load %arg11[%c0_110, %c32_111] : memref<64x72xbf16, #tpu.memory_space<vmem>>, vector<64x8xbf16>
    tpu.vector_store %arg11[%c0_110, %c32_111], %101 {strides = array<i32>} : memref<64x72xbf16, #tpu.memory_space<vmem>>, vector<64x8xbf16>,
    %c1_112 = arith.constant 1 : index
    %c2_113 = arith.constant 2 : index
    %c0_114 = arith.constant 0 : index
    %103 = vector.load %arg9[%c1_112, %c2_113, %c0_114] : memref<10x10x8xbf16, #tpu.memory_space<vmem>>, vector<8x8x8xbf16>
    %104 = vector.shape_cast %103 : vector<8x8x8xbf16> to vector<64x8xbf16>
    %c0_115 = arith.constant 0 : index
    %c40 = arith.constant 40 : index
    %105 = vector.load %arg11[%c0_115, %c40] : memref<64x72xbf16, #tpu.memory_space<vmem>>, vector<64x8xbf16>
    tpu.vector_store %arg11[%c0_115, %c40], %104 {strides = array<i32>} : memref<64x72xbf16, #tpu.memory_space<vmem>>, vector<64x8xbf16>,
    %c2_116 = arith.constant 2 : index
    %c0_117 = arith.constant 0 : index
    %c0_118 = arith.constant 0 : index
    %106 = vector.load %arg9[%c2_116, %c0_117, %c0_118] : memref<10x10x8xbf16, #tpu.memory_space<vmem>>, vector<8x8x8xbf16>
    %107 = vector.shape_cast %106 : vector<8x8x8xbf16> to vector<64x8xbf16>
    %c0_119 = arith.constant 0 : index
    %c48 = arith.constant 48 : index
    %108 = vector.load %arg11[%c0_119, %c48] : memref<64x72xbf16, #tpu.memory_space<vmem>>, vector<64x8xbf16>
    tpu.vector_store %arg11[%c0_119, %c48], %107 {strides = array<i32>} : memref<64x72xbf16, #tpu.memory_space<vmem>>, vector<64x8xbf16>,
    %c2_120 = arith.constant 2 : index
    %c1_121 = arith.constant 1 : index
    %c0_122 = arith.constant 0 : index
    %109 = vector.load %arg9[%c2_120, %c1_121, %c0_122] : memref<10x10x8xbf16, #tpu.memory_space<vmem>>, vector<8x8x8xbf16>
    %110 = vector.shape_cast %109 : vector<8x8x8xbf16> to vector<64x8xbf16>
    %c0_123 = arith.constant 0 : index
    %c56 = arith.constant 56 : index
    %111 = vector.load %arg11[%c0_123, %c56] : memref<64x72xbf16, #tpu.memory_space<vmem>>, vector<64x8xbf16>
    tpu.vector_store %arg11[%c0_123, %c56], %110 {strides = array<i32>} : memref<64x72xbf16, #tpu.memory_space<vmem>>, vector<64x8xbf16>,
    %c2_124 = arith.constant 2 : index
    %c2_125 = arith.constant 2 : index
    %c0_126 = arith.constant 0 : index
    %112 = vector.load %arg9[%c2_124, %c2_125, %c0_126] : memref<10x10x8xbf16, #tpu.memory_space<vmem>>, vector<8x8x8xbf16>
    %113 = vector.shape_cast %112 : vector<8x8x8xbf16> to vector<64x8xbf16>
    %c0_127 = arith.constant 0 : index
    %c64 = arith.constant 64 : index
    %114 = vector.load %arg11[%c0_127, %c64] : memref<64x72xbf16, #tpu.memory_space<vmem>>, vector<64x8xbf16>
    tpu.vector_store %arg11[%c0_127, %c64], %113 {strides = array<i32>} : memref<64x72xbf16, #tpu.memory_space<vmem>>, vector<64x8xbf16>,
    %c0_128 = arith.constant 0 : index
    %c0_129 = arith.constant 0 : index
    %115 = vector.load %arg10[%c0_128, %c0_129] : memref<64x8xf32, #tpu.memory_space<vmem>>, vector<64x8xf32>
    %c0_130 = arith.constant 0 : index
    %c0_131 = arith.constant 0 : index
    %116 = vector.load %arg11[%c0_130, %c0_131] : memref<64x72xbf16, #tpu.memory_space<vmem>>, vector<64x72xbf16>
    %c0_132 = arith.constant 0 : index
    %c0_133 = arith.constant 0 : index
    %117 = vector.load %arg4[%c0_132, %c0_133] : memref<72x8xbf16, #tpu.memory_space<vmem>>, vector<72x8xbf16>
    %cst_134 = arith.constant dense<0.000000e+00> : vector<64x8xf32>
    %118 = tpu.matmul %116, %117, %cst_134 {dimension_numbers = #tpu.dot_dimension_numbers<[1], [0], [0], [1], [0, 0, 1, 1], [], []>} : vector<64x72xbf16>, vector<72x8xbf16>, vector<64x8xf32> -> vector<64x8xf32>
    %119 = arith.addf %115, %118 : vector<64x8xf32>
    %c0_135 = arith.constant 0 : index
    %c0_136 = arith.constant 0 : index
    %120 = vector.load %arg10[%c0_135, %c0_136] : memref<64x8xf32, #tpu.memory_space<vmem>>, vector<64x8xf32>
    tpu.vector_store %arg10[%c0_135, %c0_136], %119 {strides = array<i32>} : memref<64x8xf32, #tpu.memory_space<vmem>>, vector<64x8xf32>,
    %c0_137 = arith.constant 0 : index
    %c3_138 = arith.constant 3 : index
    %c0_139 = arith.constant 0 : index
    %c0_140 = arith.constant 0 : index
    %c0_141 = arith.constant 0 : index
    %121 = vector.load %arg1[%c0_137, %c3_138, %c0_139, %c0_140, %c0_141] : memref<1x4x9x9x4xbf16, #tpu.memory_space<vmem>>, vector<1x1x8x8x4xbf16>
    %122 = vector.shape_cast %121 : vector<1x1x8x8x4xbf16> to vector<8x8x4xbf16>
    %c0_142 = arith.constant 0 : index
    %c0_143 = arith.constant 0 : index
    %123 = vector.load %arg10[%c0_142, %c0_143] : memref<64x8xf32, #tpu.memory_space<vmem>>, vector<64x8xf32>
    %124 = vector.shape_cast %122 : vector<8x8x4xbf16> to vector<64x4xbf16>
    %c0_144 = arith.constant 0 : index
    %c0_145 = arith.constant 0 : index
    %125 = vector.load %arg6[%c0_144, %c0_145] : memref<4x8xbf16, #tpu.memory_space<vmem>>, vector<4x8xbf16>
    %cst_146 = arith.constant dense<0.000000e+00> : vector<64x8xf32>
    %126 = tpu.matmul %124, %125, %cst_146 {dimension_numbers = #tpu.dot_dimension_numbers<[1], [0], [0], [1], [0, 0, 1, 1], [], []>} : vector<64x4xbf16>, vector<4x8xbf16>, vector<64x8xf32> -> vector<64x8xf32>
    %c0_147 = arith.constant 0 : index
    %c0_148 = arith.constant 0 : index
    %127 = vector.load %arg7[%c0_147, %c0_148] : memref<1x8xf32, #tpu.memory_space<vmem>>, vector<1x8xf32>
    %128 = vector.broadcast %127 : vector<1x8xf32> to vector<64x8xf32>
    %129 = arith.addf %126, %128 : vector<64x8xf32>
    %130 = arith.addf %123, %129 : vector<64x8xf32>
    %c0_149 = arith.constant 0 : index
    %c0_150 = arith.constant 0 : index
    %131 = vector.load %arg10[%c0_149, %c0_150] : memref<64x8xf32, #tpu.memory_space<vmem>>, vector<64x8xf32>
    tpu.vector_store %arg10[%c0_149, %c0_150], %130 {strides = array<i32>} : memref<64x8xf32, #tpu.memory_space<vmem>>, vector<64x8xf32>,
    %c0_151 = arith.constant 0 : index
    %c0_152 = arith.constant 0 : index
    %132 = vector.load %arg10[%c0_151, %c0_152] : memref<64x8xf32, #tpu.memory_space<vmem>>, vector<64x8xf32>
    %cst_153 = arith.constant 2.500000e-01 : f32
    %133 = vector.broadcast %cst_153 : f32 to vector<64x8xf32>
    %134 = arith.mulf %132, %133 : vector<64x8xf32>
    %cst_154 = arith.constant 1.490000e+00 : f32
    %135 = vector.broadcast %cst_154 : f32 to vector<64x8xf32>
    %136 = arith.addf %135, %134 : vector<64x8xf32>
    %137 = arith.mulf %132, %136 : vector<64x8xf32>
    %cst_155 = arith.constant 3.050000e+00 : f32
    %138 = vector.broadcast %cst_155 : f32 to vector<64x8xf32>
    %139 = arith.addf %138, %137 : vector<64x8xf32>
    %140 = arith.mulf %132, %139 : vector<64x8xf32>
    %cst_156 = arith.constant 2.320000e+00 : f32
    %141 = vector.broadcast %cst_156 : f32 to vector<64x8xf32>
    %142 = arith.addf %141, %140 : vector<64x8xf32>
    %143 = arith.mulf %132, %142 : vector<64x8xf32>
    %cst_157 = arith.constant 6.200000e-01 : f32
    %144 = vector.broadcast %cst_157 : f32 to vector<64x8xf32>
    %145 = arith.addf %144, %143 : vector<64x8xf32>
    %146 = arith.mulf %132, %145 : vector<64x8xf32>
    %cst_158 = arith.constant 3.000000e-02 : f32
    %147 = vector.broadcast %cst_158 : f32 to vector<64x8xf32>
    %148 = arith.addf %147, %146 : vector<64x8xf32>
    %cst_159 = arith.constant 5.000000e-02 : f32
    %149 = vector.broadcast %cst_159 : f32 to vector<64x8xf32>
    %150 = arith.mulf %132, %149 : vector<64x8xf32>
    %cst_160 = arith.constant 1.200000e+00 : f32
    %151 = vector.broadcast %cst_160 : f32 to vector<64x8xf32>
    %152 = arith.addf %151, %150 : vector<64x8xf32>
    %153 = arith.mulf %132, %152 : vector<64x8xf32>
    %cst_161 = arith.constant 2.500000e-01 : f32
    %154 = vector.broadcast %cst_161 : f32 to vector<64x8xf32>
    %155 = arith.addf %154, %153 : vector<64x8xf32>
    %156 = arith.mulf %132, %155 : vector<64x8xf32>
    %cst_162 = arith.constant 2.400000e+00 : f32
    %157 = vector.broadcast %cst_162 : f32 to vector<64x8xf32>
    %158 = arith.addf %157, %156 : vector<64x8xf32>
    %159 = arith.mulf %132, %158 : vector<64x8xf32>
    %160 = math.absf %159 : vector<64x8xf32>
    %cst_163 = arith.constant 1.000000e+00 : f32
    %161 = vector.broadcast %cst_163 : f32 to vector<64x8xf32>
    %162 = arith.addf %161, %160 : vector<64x8xf32>
    %163 = tpu.reciprocal %162 {approx = true} : vector<64x8xf32> -> vector<64x8xf32>
    %164 = arith.mulf %148, %163 : vector<64x8xf32>
    %165 = arith.truncf %164 : vector<64x8xf32> to vector<64x8xbf16>
    %c0_164 = arith.constant 0 : index
    %c0_165 = arith.constant 0 : index
    %c0_166 = arith.constant 0 : index
    %166 = vector.load %arg8[%c0_164, %c0_165, %c0_166] : memref<1x64x8xbf16, #tpu.memory_space<vmem>>, vector<1x64x8xbf16>
    %167 = vector.shape_cast %166 : vector<1x64x8xbf16> to vector<64x8xbf16>
    %168 = vector.shape_cast %165 : vector<64x8xbf16> to vector<1x64x8xbf16>
    tpu.vector_store %arg8[%c0_164, %c0_165, %c0_166], %168 {strides = array<i32>} : memref<1x64x8xbf16, #tpu.memory_space<vmem>>, vector<1x64x8xbf16>,
    return
  }
  func.func @transform_0(%arg0: i32) -> (i32, i32, i32, i32, i32) {
    %c0_i32 = arith.constant 0 : i32
    %c0_i32_0 = arith.constant 0 : i32
    %c0_i32_1 = arith.constant 0 : i32
    %c0_i32_2 = arith.constant 0 : i32
    %c0_i32_3 = arith.constant 0 : i32
    return %arg0, %c0_i32, %c0_i32_0, %c0_i32_1, %c0_i32_2 : i32, i32, i32, i32, i32
  }
  func.func @transform_1(%arg0: i32) -> (i32, i32) {
    %c0_i32 = arith.constant 0 : i32
    %c0_i32_0 = arith.constant 0 : i32
    %c0_i32_1 = arith.constant 0 : i32
    return %c0_i32, %c0_i32_0 : i32, i32
  }
  func.func @transform_2(%arg0: i32) -> (i32, i32) {
    %c0_i32 = arith.constant 0 : i32
    %c0_i32_0 = arith.constant 0 : i32
    %c0_i32_1 = arith.constant 0 : i32
    return %c0_i32, %c0_i32_0 : i32, i32
  }
  func.func @transform_3(%arg0: i32) -> (i32, i32) {
    %c0_i32 = arith.constant 0 : i32
    %c0_i32_0 = arith.constant 0 : i32
    %c0_i32_1 = arith.constant 0 : i32
    return %c0_i32, %c0_i32_0 : i32, i32
  }
  func.func @transform_4(%arg0: i32) -> (i32, i32) {
    %c0_i32 = arith.constant 0 : i32
    %c0_i32_0 = arith.constant 0 : i32
    %c0_i32_1 = arith.constant 0 : i32
    return %c0_i32, %c0_i32_0 : i32, i32
  }
  func.func @transform_5(%arg0: i32) -> (i32, i32) {
    %c0_i32 = arith.constant 0 : i32
    %c0_i32_0 = arith.constant 0 : i32
    %c0_i32_1 = arith.constant 0 : i32
    return %c0_i32, %c0_i32_0 : i32, i32
  }
  func.func @transform_6(%arg0: i32) -> (i32, i32) {
    %c0_i32 = arith.constant 0 : i32
    %c0_i32_0 = arith.constant 0 : i32
    %c0_i32_1 = arith.constant 0 : i32
    return %c0_i32, %c0_i32_0 : i32, i32
  }
  func.func @transform_7(%arg0: i32) -> (i32, i32, i32) {
    %c0_i32 = arith.constant 0 : i32
    %c0_i32_0 = arith.constant 0 : i32
    %c0_i32_1 = arith.constant 0 : i32
    return %arg0, %c0_i32, %c0_i32_0 : i32, i32, i32
  }
}

module attributes {stable_mosaic.version = 11 : i64} {
  func.func @kernel(%arg0: i32, %arg1: memref<1x1x10x10x8xbf16, #tpu.memory_space<vmem>>, %arg2: memref<72x8xbf16, #tpu.memory_space<vmem>>, %arg3: memref<1x8xf32, #tpu.memory_space<vmem>>, %arg4: memref<72x8xbf16, #tpu.memory_space<vmem>>, %arg5: memref<1x8xf32, #tpu.memory_space<vmem>>, %arg6: memref<1x64x8xf32, #tpu.memory_space<vmem>>, %arg7: memref<10x10x8xbf16, #tpu.memory_space<vmem>>, %arg8: memref<64x8xf32, #tpu.memory_space<vmem>>, %arg9: memref<64x72xbf16, #tpu.memory_space<vmem>>) attributes {dimension_semantics = [#tpu.dimension_semantics<parallel>], iteration_bounds = array<i64: 2>, scalar_prefetch = 0 : i64, scratch_operands = 3 : i64, tpu.core_type = #tpu.core_type<tc>, window_params = [{transform_indices = @transform_0, window_bounds = array<i64: 1, 1, 10, 10, 8>}, {pipeline_mode = #tpu.pipeline_mode<synchronous>, transform_indices = @transform_1, window_bounds = array<i64: 72, 8>}, {pipeline_mode = #tpu.pipeline_mode<synchronous>, transform_indices = @transform_2, window_bounds = array<i64: 1, 8>}, {pipeline_mode = #tpu.pipeline_mode<synchronous>, transform_indices = @transform_3, window_bounds = array<i64: 72, 8>}, {pipeline_mode = #tpu.pipeline_mode<synchronous>, transform_indices = @transform_4, window_bounds = array<i64: 1, 8>}, {transform_indices = @transform_5, window_bounds = array<i64: 1, 64, 8>}]} {
    %c0 = arith.constant 0 : index
    %c0_0 = arith.constant 0 : index
    %0 = vector.load %arg3[%c0, %c0_0] : memref<1x8xf32, #tpu.memory_space<vmem>>, vector<1x8xf32>
    %1 = vector.shape_cast %0 : vector<1x8xf32> to vector<1x8xf32>
    %2 = vector.broadcast %1 : vector<1x8xf32> to vector<64x8xf32>
    %c0_1 = arith.constant 0 : index
    %c0_2 = arith.constant 0 : index
    %3 = vector.load %arg8[%c0_1, %c0_2] : memref<64x8xf32, #tpu.memory_space<vmem>>, vector<64x8xf32>
    tpu.vector_store %arg8[%c0_1, %c0_2], %2 {strides = array<i32>} : memref<64x8xf32, #tpu.memory_space<vmem>>, vector<64x8xf32>,
    %c0_3 = arith.constant 0 : index
    %c0_4 = arith.constant 0 : index
    %c0_5 = arith.constant 0 : index
    %c0_6 = arith.constant 0 : index
    %c0_7 = arith.constant 0 : index
    %4 = vector.load %arg1[%c0_3, %c0_4, %c0_5, %c0_6, %c0_7] : memref<1x1x10x10x8xbf16, #tpu.memory_space<vmem>>, vector<1x1x8x8x8xbf16>
    %5 = vector.shape_cast %4 : vector<1x1x8x8x8xbf16> to vector<8x8x8xbf16>
    %6 = vector.shape_cast %5 : vector<8x8x8xbf16> to vector<64x8xbf16>
    %c0_8 = arith.constant 0 : index
    %c0_9 = arith.constant 0 : index
    %7 = vector.load %arg9[%c0_8, %c0_9] : memref<64x72xbf16, #tpu.memory_space<vmem>>, vector<64x8xbf16>
    tpu.vector_store %arg9[%c0_8, %c0_9], %6 {strides = array<i32>} : memref<64x72xbf16, #tpu.memory_space<vmem>>, vector<64x8xbf16>,
    %c0_10 = arith.constant 0 : index
    %c0_11 = arith.constant 0 : index
    %c0_12 = arith.constant 0 : index
    %c1 = arith.constant 1 : index
    %c0_13 = arith.constant 0 : index
    %8 = vector.load %arg1[%c0_10, %c0_11, %c0_12, %c1, %c0_13] : memref<1x1x10x10x8xbf16, #tpu.memory_space<vmem>>, vector<1x1x8x8x8xbf16>
    %9 = vector.shape_cast %8 : vector<1x1x8x8x8xbf16> to vector<8x8x8xbf16>
    %10 = vector.shape_cast %9 : vector<8x8x8xbf16> to vector<64x8xbf16>
    %c0_14 = arith.constant 0 : index
    %c8 = arith.constant 8 : index
    %11 = vector.load %arg9[%c0_14, %c8] : memref<64x72xbf16, #tpu.memory_space<vmem>>, vector<64x8xbf16>
    tpu.vector_store %arg9[%c0_14, %c8], %10 {strides = array<i32>} : memref<64x72xbf16, #tpu.memory_space<vmem>>, vector<64x8xbf16>,
    %c0_15 = arith.constant 0 : index
    %c0_16 = arith.constant 0 : index
    %c0_17 = arith.constant 0 : index
    %c2 = arith.constant 2 : index
    %c0_18 = arith.constant 0 : index
    %12 = vector.load %arg1[%c0_15, %c0_16, %c0_17, %c2, %c0_18] : memref<1x1x10x10x8xbf16, #tpu.memory_space<vmem>>, vector<1x1x8x8x8xbf16>
    %13 = vector.shape_cast %12 : vector<1x1x8x8x8xbf16> to vector<8x8x8xbf16>
    %14 = vector.shape_cast %13 : vector<8x8x8xbf16> to vector<64x8xbf16>
    %c0_19 = arith.constant 0 : index
    %c16 = arith.constant 16 : index
    %15 = vector.load %arg9[%c0_19, %c16] : memref<64x72xbf16, #tpu.memory_space<vmem>>, vector<64x8xbf16>
    tpu.vector_store %arg9[%c0_19, %c16], %14 {strides = array<i32>} : memref<64x72xbf16, #tpu.memory_space<vmem>>, vector<64x8xbf16>,
    %c0_20 = arith.constant 0 : index
    %c0_21 = arith.constant 0 : index
    %c1_22 = arith.constant 1 : index
    %c0_23 = arith.constant 0 : index
    %c0_24 = arith.constant 0 : index
    %16 = vector.load %arg1[%c0_20, %c0_21, %c1_22, %c0_23, %c0_24] : memref<1x1x10x10x8xbf16, #tpu.memory_space<vmem>>, vector<1x1x8x8x8xbf16>
    %17 = vector.shape_cast %16 : vector<1x1x8x8x8xbf16> to vector<8x8x8xbf16>
    %18 = vector.shape_cast %17 : vector<8x8x8xbf16> to vector<64x8xbf16>
    %c0_25 = arith.constant 0 : index
    %c24 = arith.constant 24 : index
    %19 = vector.load %arg9[%c0_25, %c24] : memref<64x72xbf16, #tpu.memory_space<vmem>>, vector<64x8xbf16>
    tpu.vector_store %arg9[%c0_25, %c24], %18 {strides = array<i32>} : memref<64x72xbf16, #tpu.memory_space<vmem>>, vector<64x8xbf16>,
    %c0_26 = arith.constant 0 : index
    %c0_27 = arith.constant 0 : index
    %c1_28 = arith.constant 1 : index
    %c1_29 = arith.constant 1 : index
    %c0_30 = arith.constant 0 : index
    %20 = vector.load %arg1[%c0_26, %c0_27, %c1_28, %c1_29, %c0_30] : memref<1x1x10x10x8xbf16, #tpu.memory_space<vmem>>, vector<1x1x8x8x8xbf16>
    %21 = vector.shape_cast %20 : vector<1x1x8x8x8xbf16> to vector<8x8x8xbf16>
    %22 = vector.shape_cast %21 : vector<8x8x8xbf16> to vector<64x8xbf16>
    %c0_31 = arith.constant 0 : index
    %c32 = arith.constant 32 : index
    %23 = vector.load %arg9[%c0_31, %c32] : memref<64x72xbf16, #tpu.memory_space<vmem>>, vector<64x8xbf16>
    tpu.vector_store %arg9[%c0_31, %c32], %22 {strides = array<i32>} : memref<64x72xbf16, #tpu.memory_space<vmem>>, vector<64x8xbf16>,
    %c0_32 = arith.constant 0 : index
    %c0_33 = arith.constant 0 : index
    %c1_34 = arith.constant 1 : index
    %c2_35 = arith.constant 2 : index
    %c0_36 = arith.constant 0 : index
    %24 = vector.load %arg1[%c0_32, %c0_33, %c1_34, %c2_35, %c0_36] : memref<1x1x10x10x8xbf16, #tpu.memory_space<vmem>>, vector<1x1x8x8x8xbf16>
    %25 = vector.shape_cast %24 : vector<1x1x8x8x8xbf16> to vector<8x8x8xbf16>
    %26 = vector.shape_cast %25 : vector<8x8x8xbf16> to vector<64x8xbf16>
    %c0_37 = arith.constant 0 : index
    %c40 = arith.constant 40 : index
    %27 = vector.load %arg9[%c0_37, %c40] : memref<64x72xbf16, #tpu.memory_space<vmem>>, vector<64x8xbf16>
    tpu.vector_store %arg9[%c0_37, %c40], %26 {strides = array<i32>} : memref<64x72xbf16, #tpu.memory_space<vmem>>, vector<64x8xbf16>,
    %c0_38 = arith.constant 0 : index
    %c0_39 = arith.constant 0 : index
    %c2_40 = arith.constant 2 : index
    %c0_41 = arith.constant 0 : index
    %c0_42 = arith.constant 0 : index
    %28 = vector.load %arg1[%c0_38, %c0_39, %c2_40, %c0_41, %c0_42] : memref<1x1x10x10x8xbf16, #tpu.memory_space<vmem>>, vector<1x1x8x8x8xbf16>
    %29 = vector.shape_cast %28 : vector<1x1x8x8x8xbf16> to vector<8x8x8xbf16>
    %30 = vector.shape_cast %29 : vector<8x8x8xbf16> to vector<64x8xbf16>
    %c0_43 = arith.constant 0 : index
    %c48 = arith.constant 48 : index
    %31 = vector.load %arg9[%c0_43, %c48] : memref<64x72xbf16, #tpu.memory_space<vmem>>, vector<64x8xbf16>
    tpu.vector_store %arg9[%c0_43, %c48], %30 {strides = array<i32>} : memref<64x72xbf16, #tpu.memory_space<vmem>>, vector<64x8xbf16>,
    %c0_44 = arith.constant 0 : index
    %c0_45 = arith.constant 0 : index
    %c2_46 = arith.constant 2 : index
    %c1_47 = arith.constant 1 : index
    %c0_48 = arith.constant 0 : index
    %32 = vector.load %arg1[%c0_44, %c0_45, %c2_46, %c1_47, %c0_48] : memref<1x1x10x10x8xbf16, #tpu.memory_space<vmem>>, vector<1x1x8x8x8xbf16>
    %33 = vector.shape_cast %32 : vector<1x1x8x8x8xbf16> to vector<8x8x8xbf16>
    %34 = vector.shape_cast %33 : vector<8x8x8xbf16> to vector<64x8xbf16>
    %c0_49 = arith.constant 0 : index
    %c56 = arith.constant 56 : index
    %35 = vector.load %arg9[%c0_49, %c56] : memref<64x72xbf16, #tpu.memory_space<vmem>>, vector<64x8xbf16>
    tpu.vector_store %arg9[%c0_49, %c56], %34 {strides = array<i32>} : memref<64x72xbf16, #tpu.memory_space<vmem>>, vector<64x8xbf16>,
    %c0_50 = arith.constant 0 : index
    %c0_51 = arith.constant 0 : index
    %c2_52 = arith.constant 2 : index
    %c2_53 = arith.constant 2 : index
    %c0_54 = arith.constant 0 : index
    %36 = vector.load %arg1[%c0_50, %c0_51, %c2_52, %c2_53, %c0_54] : memref<1x1x10x10x8xbf16, #tpu.memory_space<vmem>>, vector<1x1x8x8x8xbf16>
    %37 = vector.shape_cast %36 : vector<1x1x8x8x8xbf16> to vector<8x8x8xbf16>
    %38 = vector.shape_cast %37 : vector<8x8x8xbf16> to vector<64x8xbf16>
    %c0_55 = arith.constant 0 : index
    %c64 = arith.constant 64 : index
    %39 = vector.load %arg9[%c0_55, %c64] : memref<64x72xbf16, #tpu.memory_space<vmem>>, vector<64x8xbf16>
    tpu.vector_store %arg9[%c0_55, %c64], %38 {strides = array<i32>} : memref<64x72xbf16, #tpu.memory_space<vmem>>, vector<64x8xbf16>,
    %c0_56 = arith.constant 0 : index
    %c0_57 = arith.constant 0 : index
    %40 = vector.load %arg8[%c0_56, %c0_57] : memref<64x8xf32, #tpu.memory_space<vmem>>, vector<64x8xf32>
    %c0_58 = arith.constant 0 : index
    %c0_59 = arith.constant 0 : index
    %41 = vector.load %arg9[%c0_58, %c0_59] : memref<64x72xbf16, #tpu.memory_space<vmem>>, vector<64x72xbf16>
    %c0_60 = arith.constant 0 : index
    %c0_61 = arith.constant 0 : index
    %42 = vector.load %arg2[%c0_60, %c0_61] : memref<72x8xbf16, #tpu.memory_space<vmem>>, vector<72x8xbf16>
    %cst = arith.constant dense<0.000000e+00> : vector<64x8xf32>
    %43 = tpu.matmul %41, %42, %cst {dimension_numbers = #tpu.dot_dimension_numbers<[1], [0], [0], [1], [0, 0, 1, 1], [], []>} : vector<64x72xbf16>, vector<72x8xbf16>, vector<64x8xf32> -> vector<64x8xf32>
    %44 = arith.addf %40, %43 : vector<64x8xf32>
    %c0_62 = arith.constant 0 : index
    %c0_63 = arith.constant 0 : index
    %45 = vector.load %arg8[%c0_62, %c0_63] : memref<64x8xf32, #tpu.memory_space<vmem>>, vector<64x8xf32>
    tpu.vector_store %arg8[%c0_62, %c0_63], %44 {strides = array<i32>} : memref<64x8xf32, #tpu.memory_space<vmem>>, vector<64x8xf32>,
    %cst_64 = arith.constant 0.000000e+00 : bf16
    %46 = vector.broadcast %cst_64 : bf16 to vector<10x10x8xbf16>
    %c0_65 = arith.constant 0 : index
    %c0_66 = arith.constant 0 : index
    %c0_67 = arith.constant 0 : index
    %47 = vector.load %arg7[%c0_65, %c0_66, %c0_67] : memref<10x10x8xbf16, #tpu.memory_space<vmem>>, vector<10x10x8xbf16>
    tpu.vector_store %arg7[%c0_65, %c0_66, %c0_67], %46 {strides = array<i32>} : memref<10x10x8xbf16, #tpu.memory_space<vmem>>, vector<10x10x8xbf16>,
    %c0_68 = arith.constant 0 : index
    %c0_69 = arith.constant 0 : index
    %48 = vector.load %arg8[%c0_68, %c0_69] : memref<64x8xf32, #tpu.memory_space<vmem>>, vector<64x8xf32>
    %cst_70 = arith.constant 2.500000e-01 : f32
    %49 = vector.broadcast %cst_70 : f32 to vector<64x8xf32>
    %50 = arith.mulf %48, %49 : vector<64x8xf32>
    %cst_71 = arith.constant 1.490000e+00 : f32
    %51 = vector.broadcast %cst_71 : f32 to vector<64x8xf32>
    %52 = arith.addf %51, %50 : vector<64x8xf32>
    %53 = arith.mulf %48, %52 : vector<64x8xf32>
    %cst_72 = arith.constant 3.050000e+00 : f32
    %54 = vector.broadcast %cst_72 : f32 to vector<64x8xf32>
    %55 = arith.addf %54, %53 : vector<64x8xf32>
    %56 = arith.mulf %48, %55 : vector<64x8xf32>
    %cst_73 = arith.constant 2.320000e+00 : f32
    %57 = vector.broadcast %cst_73 : f32 to vector<64x8xf32>
    %58 = arith.addf %57, %56 : vector<64x8xf32>
    %59 = arith.mulf %48, %58 : vector<64x8xf32>
    %cst_74 = arith.constant 6.200000e-01 : f32
    %60 = vector.broadcast %cst_74 : f32 to vector<64x8xf32>
    %61 = arith.addf %60, %59 : vector<64x8xf32>
    %62 = arith.mulf %48, %61 : vector<64x8xf32>
    %cst_75 = arith.constant 3.000000e-02 : f32
    %63 = vector.broadcast %cst_75 : f32 to vector<64x8xf32>
    %64 = arith.addf %63, %62 : vector<64x8xf32>
    %cst_76 = arith.constant 5.000000e-02 : f32
    %65 = vector.broadcast %cst_76 : f32 to vector<64x8xf32>
    %66 = arith.mulf %48, %65 : vector<64x8xf32>
    %cst_77 = arith.constant 1.200000e+00 : f32
    %67 = vector.broadcast %cst_77 : f32 to vector<64x8xf32>
    %68 = arith.addf %67, %66 : vector<64x8xf32>
    %69 = arith.mulf %48, %68 : vector<64x8xf32>
    %cst_78 = arith.constant 2.500000e-01 : f32
    %70 = vector.broadcast %cst_78 : f32 to vector<64x8xf32>
    %71 = arith.addf %70, %69 : vector<64x8xf32>
    %72 = arith.mulf %48, %71 : vector<64x8xf32>
    %cst_79 = arith.constant 2.400000e+00 : f32
    %73 = vector.broadcast %cst_79 : f32 to vector<64x8xf32>
    %74 = arith.addf %73, %72 : vector<64x8xf32>
    %75 = arith.mulf %48, %74 : vector<64x8xf32>
    %76 = math.absf %75 : vector<64x8xf32>
    %cst_80 = arith.constant 1.000000e+00 : f32
    %77 = vector.broadcast %cst_80 : f32 to vector<64x8xf32>
    %78 = arith.addf %77, %76 : vector<64x8xf32>
    %79 = tpu.reciprocal %78 {approx = true} : vector<64x8xf32> -> vector<64x8xf32>
    %80 = arith.mulf %64, %79 : vector<64x8xf32>
    %81 = arith.truncf %80 : vector<64x8xf32> to vector<64x8xbf16>
    %82 = vector.shape_cast %81 : vector<64x8xbf16> to vector<8x8x8xbf16>
    %c1_81 = arith.constant 1 : index
    %c1_82 = arith.constant 1 : index
    %c0_83 = arith.constant 0 : index
    %83 = vector.load %arg7[%c1_81, %c1_82, %c0_83] : memref<10x10x8xbf16, #tpu.memory_space<vmem>>, vector<8x8x8xbf16>
    tpu.vector_store %arg7[%c1_81, %c1_82, %c0_83], %82 {strides = array<i32>} : memref<10x10x8xbf16, #tpu.memory_space<vmem>>, vector<8x8x8xbf16>,
    %c0_84 = arith.constant 0 : index
    %c0_85 = arith.constant 0 : index
    %84 = vector.load %arg5[%c0_84, %c0_85] : memref<1x8xf32, #tpu.memory_space<vmem>>, vector<1x8xf32>
    %85 = vector.shape_cast %84 : vector<1x8xf32> to vector<1x8xf32>
    %86 = vector.broadcast %85 : vector<1x8xf32> to vector<64x8xf32>
    %c0_86 = arith.constant 0 : index
    %c0_87 = arith.constant 0 : index
    %87 = vector.load %arg8[%c0_86, %c0_87] : memref<64x8xf32, #tpu.memory_space<vmem>>, vector<64x8xf32>
    tpu.vector_store %arg8[%c0_86, %c0_87], %86 {strides = array<i32>} : memref<64x8xf32, #tpu.memory_space<vmem>>, vector<64x8xf32>,
    %c0_88 = arith.constant 0 : index
    %c0_89 = arith.constant 0 : index
    %c0_90 = arith.constant 0 : index
    %88 = vector.load %arg7[%c0_88, %c0_89, %c0_90] : memref<10x10x8xbf16, #tpu.memory_space<vmem>>, vector<8x8x8xbf16>
    %89 = vector.shape_cast %88 : vector<8x8x8xbf16> to vector<64x8xbf16>
    %c0_91 = arith.constant 0 : index
    %c0_92 = arith.constant 0 : index
    %90 = vector.load %arg9[%c0_91, %c0_92] : memref<64x72xbf16, #tpu.memory_space<vmem>>, vector<64x8xbf16>
    tpu.vector_store %arg9[%c0_91, %c0_92], %89 {strides = array<i32>} : memref<64x72xbf16, #tpu.memory_space<vmem>>, vector<64x8xbf16>,
    %c0_93 = arith.constant 0 : index
    %c1_94 = arith.constant 1 : index
    %c0_95 = arith.constant 0 : index
    %91 = vector.load %arg7[%c0_93, %c1_94, %c0_95] : memref<10x10x8xbf16, #tpu.memory_space<vmem>>, vector<8x8x8xbf16>
    %92 = vector.shape_cast %91 : vector<8x8x8xbf16> to vector<64x8xbf16>
    %c0_96 = arith.constant 0 : index
    %c8_97 = arith.constant 8 : index
    %93 = vector.load %arg9[%c0_96, %c8_97] : memref<64x72xbf16, #tpu.memory_space<vmem>>, vector<64x8xbf16>
    tpu.vector_store %arg9[%c0_96, %c8_97], %92 {strides = array<i32>} : memref<64x72xbf16, #tpu.memory_space<vmem>>, vector<64x8xbf16>,
    %c0_98 = arith.constant 0 : index
    %c2_99 = arith.constant 2 : index
    %c0_100 = arith.constant 0 : index
    %94 = vector.load %arg7[%c0_98, %c2_99, %c0_100] : memref<10x10x8xbf16, #tpu.memory_space<vmem>>, vector<8x8x8xbf16>
    %95 = vector.shape_cast %94 : vector<8x8x8xbf16> to vector<64x8xbf16>
    %c0_101 = arith.constant 0 : index
    %c16_102 = arith.constant 16 : index
    %96 = vector.load %arg9[%c0_101, %c16_102] : memref<64x72xbf16, #tpu.memory_space<vmem>>, vector<64x8xbf16>
    tpu.vector_store %arg9[%c0_101, %c16_102], %95 {strides = array<i32>} : memref<64x72xbf16, #tpu.memory_space<vmem>>, vector<64x8xbf16>,
    %c1_103 = arith.constant 1 : index
    %c0_104 = arith.constant 0 : index
    %c0_105 = arith.constant 0 : index
    %97 = vector.load %arg7[%c1_103, %c0_104, %c0_105] : memref<10x10x8xbf16, #tpu.memory_space<vmem>>, vector<8x8x8xbf16>
    %98 = vector.shape_cast %97 : vector<8x8x8xbf16> to vector<64x8xbf16>
    %c0_106 = arith.constant 0 : index
    %c24_107 = arith.constant 24 : index
    %99 = vector.load %arg9[%c0_106, %c24_107] : memref<64x72xbf16, #tpu.memory_space<vmem>>, vector<64x8xbf16>
    tpu.vector_store %arg9[%c0_106, %c24_107], %98 {strides = array<i32>} : memref<64x72xbf16, #tpu.memory_space<vmem>>, vector<64x8xbf16>,
    %c1_108 = arith.constant 1 : index
    %c1_109 = arith.constant 1 : index
    %c0_110 = arith.constant 0 : index
    %100 = vector.load %arg7[%c1_108, %c1_109, %c0_110] : memref<10x10x8xbf16, #tpu.memory_space<vmem>>, vector<8x8x8xbf16>
    %101 = vector.shape_cast %100 : vector<8x8x8xbf16> to vector<64x8xbf16>
    %c0_111 = arith.constant 0 : index
    %c32_112 = arith.constant 32 : index
    %102 = vector.load %arg9[%c0_111, %c32_112] : memref<64x72xbf16, #tpu.memory_space<vmem>>, vector<64x8xbf16>
    tpu.vector_store %arg9[%c0_111, %c32_112], %101 {strides = array<i32>} : memref<64x72xbf16, #tpu.memory_space<vmem>>, vector<64x8xbf16>,
    %c1_113 = arith.constant 1 : index
    %c2_114 = arith.constant 2 : index
    %c0_115 = arith.constant 0 : index
    %103 = vector.load %arg7[%c1_113, %c2_114, %c0_115] : memref<10x10x8xbf16, #tpu.memory_space<vmem>>, vector<8x8x8xbf16>
    %104 = vector.shape_cast %103 : vector<8x8x8xbf16> to vector<64x8xbf16>
    %c0_116 = arith.constant 0 : index
    %c40_117 = arith.constant 40 : index
    %105 = vector.load %arg9[%c0_116, %c40_117] : memref<64x72xbf16, #tpu.memory_space<vmem>>, vector<64x8xbf16>
    tpu.vector_store %arg9[%c0_116, %c40_117], %104 {strides = array<i32>} : memref<64x72xbf16, #tpu.memory_space<vmem>>, vector<64x8xbf16>,
    %c2_118 = arith.constant 2 : index
    %c0_119 = arith.constant 0 : index
    %c0_120 = arith.constant 0 : index
    %106 = vector.load %arg7[%c2_118, %c0_119, %c0_120] : memref<10x10x8xbf16, #tpu.memory_space<vmem>>, vector<8x8x8xbf16>
    %107 = vector.shape_cast %106 : vector<8x8x8xbf16> to vector<64x8xbf16>
    %c0_121 = arith.constant 0 : index
    %c48_122 = arith.constant 48 : index
    %108 = vector.load %arg9[%c0_121, %c48_122] : memref<64x72xbf16, #tpu.memory_space<vmem>>, vector<64x8xbf16>
    tpu.vector_store %arg9[%c0_121, %c48_122], %107 {strides = array<i32>} : memref<64x72xbf16, #tpu.memory_space<vmem>>, vector<64x8xbf16>,
    %c2_123 = arith.constant 2 : index
    %c1_124 = arith.constant 1 : index
    %c0_125 = arith.constant 0 : index
    %109 = vector.load %arg7[%c2_123, %c1_124, %c0_125] : memref<10x10x8xbf16, #tpu.memory_space<vmem>>, vector<8x8x8xbf16>
    %110 = vector.shape_cast %109 : vector<8x8x8xbf16> to vector<64x8xbf16>
    %c0_126 = arith.constant 0 : index
    %c56_127 = arith.constant 56 : index
    %111 = vector.load %arg9[%c0_126, %c56_127] : memref<64x72xbf16, #tpu.memory_space<vmem>>, vector<64x8xbf16>
    tpu.vector_store %arg9[%c0_126, %c56_127], %110 {strides = array<i32>} : memref<64x72xbf16, #tpu.memory_space<vmem>>, vector<64x8xbf16>,
    %c2_128 = arith.constant 2 : index
    %c2_129 = arith.constant 2 : index
    %c0_130 = arith.constant 0 : index
    %112 = vector.load %arg7[%c2_128, %c2_129, %c0_130] : memref<10x10x8xbf16, #tpu.memory_space<vmem>>, vector<8x8x8xbf16>
    %113 = vector.shape_cast %112 : vector<8x8x8xbf16> to vector<64x8xbf16>
    %c0_131 = arith.constant 0 : index
    %c64_132 = arith.constant 64 : index
    %114 = vector.load %arg9[%c0_131, %c64_132] : memref<64x72xbf16, #tpu.memory_space<vmem>>, vector<64x8xbf16>
    tpu.vector_store %arg9[%c0_131, %c64_132], %113 {strides = array<i32>} : memref<64x72xbf16, #tpu.memory_space<vmem>>, vector<64x8xbf16>,
    %c0_133 = arith.constant 0 : index
    %c0_134 = arith.constant 0 : index
    %115 = vector.load %arg8[%c0_133, %c0_134] : memref<64x8xf32, #tpu.memory_space<vmem>>, vector<64x8xf32>
    %c0_135 = arith.constant 0 : index
    %c0_136 = arith.constant 0 : index
    %116 = vector.load %arg9[%c0_135, %c0_136] : memref<64x72xbf16, #tpu.memory_space<vmem>>, vector<64x72xbf16>
    %c0_137 = arith.constant 0 : index
    %c0_138 = arith.constant 0 : index
    %117 = vector.load %arg4[%c0_137, %c0_138] : memref<72x8xbf16, #tpu.memory_space<vmem>>, vector<72x8xbf16>
    %cst_139 = arith.constant dense<0.000000e+00> : vector<64x8xf32>
    %118 = tpu.matmul %116, %117, %cst_139 {dimension_numbers = #tpu.dot_dimension_numbers<[1], [0], [0], [1], [0, 0, 1, 1], [], []>} : vector<64x72xbf16>, vector<72x8xbf16>, vector<64x8xf32> -> vector<64x8xf32>
    %119 = arith.addf %115, %118 : vector<64x8xf32>
    %c0_140 = arith.constant 0 : index
    %c0_141 = arith.constant 0 : index
    %120 = vector.load %arg8[%c0_140, %c0_141] : memref<64x8xf32, #tpu.memory_space<vmem>>, vector<64x8xf32>
    tpu.vector_store %arg8[%c0_140, %c0_141], %119 {strides = array<i32>} : memref<64x8xf32, #tpu.memory_space<vmem>>, vector<64x8xf32>,
    %c0_142 = arith.constant 0 : index
    %c0_143 = arith.constant 0 : index
    %c1_144 = arith.constant 1 : index
    %c1_145 = arith.constant 1 : index
    %c0_146 = arith.constant 0 : index
    %121 = vector.load %arg1[%c0_142, %c0_143, %c1_144, %c1_145, %c0_146] : memref<1x1x10x10x8xbf16, #tpu.memory_space<vmem>>, vector<1x1x8x8x8xbf16>
    %122 = vector.shape_cast %121 : vector<1x1x8x8x8xbf16> to vector<8x8x8xbf16>
    %c0_147 = arith.constant 0 : index
    %c0_148 = arith.constant 0 : index
    %123 = vector.load %arg8[%c0_147, %c0_148] : memref<64x8xf32, #tpu.memory_space<vmem>>, vector<64x8xf32>
    %124 = vector.shape_cast %122 : vector<8x8x8xbf16> to vector<64x8xbf16>
    %125 = arith.extf %124 : vector<64x8xbf16> to vector<64x8xf32>
    %126 = arith.addf %123, %125 : vector<64x8xf32>
    %c0_149 = arith.constant 0 : index
    %c0_150 = arith.constant 0 : index
    %127 = vector.load %arg8[%c0_149, %c0_150] : memref<64x8xf32, #tpu.memory_space<vmem>>, vector<64x8xf32>
    tpu.vector_store %arg8[%c0_149, %c0_150], %126 {strides = array<i32>} : memref<64x8xf32, #tpu.memory_space<vmem>>, vector<64x8xf32>,
    %c0_151 = arith.constant 0 : index
    %c0_152 = arith.constant 0 : index
    %128 = vector.load %arg8[%c0_151, %c0_152] : memref<64x8xf32, #tpu.memory_space<vmem>>, vector<64x8xf32>
    %cst_153 = arith.constant 2.500000e-01 : f32
    %129 = vector.broadcast %cst_153 : f32 to vector<64x8xf32>
    %130 = arith.mulf %128, %129 : vector<64x8xf32>
    %cst_154 = arith.constant 1.490000e+00 : f32
    %131 = vector.broadcast %cst_154 : f32 to vector<64x8xf32>
    %132 = arith.addf %131, %130 : vector<64x8xf32>
    %133 = arith.mulf %128, %132 : vector<64x8xf32>
    %cst_155 = arith.constant 3.050000e+00 : f32
    %134 = vector.broadcast %cst_155 : f32 to vector<64x8xf32>
    %135 = arith.addf %134, %133 : vector<64x8xf32>
    %136 = arith.mulf %128, %135 : vector<64x8xf32>
    %cst_156 = arith.constant 2.320000e+00 : f32
    %137 = vector.broadcast %cst_156 : f32 to vector<64x8xf32>
    %138 = arith.addf %137, %136 : vector<64x8xf32>
    %139 = arith.mulf %128, %138 : vector<64x8xf32>
    %cst_157 = arith.constant 6.200000e-01 : f32
    %140 = vector.broadcast %cst_157 : f32 to vector<64x8xf32>
    %141 = arith.addf %140, %139 : vector<64x8xf32>
    %142 = arith.mulf %128, %141 : vector<64x8xf32>
    %cst_158 = arith.constant 3.000000e-02 : f32
    %143 = vector.broadcast %cst_158 : f32 to vector<64x8xf32>
    %144 = arith.addf %143, %142 : vector<64x8xf32>
    %cst_159 = arith.constant 5.000000e-02 : f32
    %145 = vector.broadcast %cst_159 : f32 to vector<64x8xf32>
    %146 = arith.mulf %128, %145 : vector<64x8xf32>
    %cst_160 = arith.constant 1.200000e+00 : f32
    %147 = vector.broadcast %cst_160 : f32 to vector<64x8xf32>
    %148 = arith.addf %147, %146 : vector<64x8xf32>
    %149 = arith.mulf %128, %148 : vector<64x8xf32>
    %cst_161 = arith.constant 2.500000e-01 : f32
    %150 = vector.broadcast %cst_161 : f32 to vector<64x8xf32>
    %151 = arith.addf %150, %149 : vector<64x8xf32>
    %152 = arith.mulf %128, %151 : vector<64x8xf32>
    %cst_162 = arith.constant 2.400000e+00 : f32
    %153 = vector.broadcast %cst_162 : f32 to vector<64x8xf32>
    %154 = arith.addf %153, %152 : vector<64x8xf32>
    %155 = arith.mulf %128, %154 : vector<64x8xf32>
    %156 = math.absf %155 : vector<64x8xf32>
    %cst_163 = arith.constant 1.000000e+00 : f32
    %157 = vector.broadcast %cst_163 : f32 to vector<64x8xf32>
    %158 = arith.addf %157, %156 : vector<64x8xf32>
    %159 = tpu.reciprocal %158 {approx = true} : vector<64x8xf32> -> vector<64x8xf32>
    %160 = arith.mulf %144, %159 : vector<64x8xf32>
    %c0_164 = arith.constant 0 : index
    %c0_165 = arith.constant 0 : index
    %c0_166 = arith.constant 0 : index
    %161 = vector.load %arg6[%c0_164, %c0_165, %c0_166] : memref<1x64x8xf32, #tpu.memory_space<vmem>>, vector<1x64x8xf32>
    %162 = vector.shape_cast %161 : vector<1x64x8xf32> to vector<64x8xf32>
    %163 = vector.shape_cast %160 : vector<64x8xf32> to vector<1x64x8xf32>
    tpu.vector_store %arg6[%c0_164, %c0_165, %c0_166], %163 {strides = array<i32>} : memref<1x64x8xf32, #tpu.memory_space<vmem>>, vector<1x64x8xf32>,
    return
  }
  func.func @transform_0(%arg0: i32) -> (i32, i32, i32, i32, i32) {
    %c0_i32 = arith.constant 0 : i32
    %c0_i32_0 = arith.constant 0 : i32
    %c0_i32_1 = arith.constant 0 : i32
    %c0_i32_2 = arith.constant 0 : i32
    %c0_i32_3 = arith.constant 0 : i32
    return %arg0, %c0_i32, %c0_i32_0, %c0_i32_1, %c0_i32_2 : i32, i32, i32, i32, i32
  }
  func.func @transform_1(%arg0: i32) -> (i32, i32) {
    %c0_i32 = arith.constant 0 : i32
    %c0_i32_0 = arith.constant 0 : i32
    %c0_i32_1 = arith.constant 0 : i32
    return %c0_i32, %c0_i32_0 : i32, i32
  }
  func.func @transform_2(%arg0: i32) -> (i32, i32) {
    %c0_i32 = arith.constant 0 : i32
    %c0_i32_0 = arith.constant 0 : i32
    %c0_i32_1 = arith.constant 0 : i32
    return %c0_i32, %c0_i32_0 : i32, i32
  }
  func.func @transform_3(%arg0: i32) -> (i32, i32) {
    %c0_i32 = arith.constant 0 : i32
    %c0_i32_0 = arith.constant 0 : i32
    %c0_i32_1 = arith.constant 0 : i32
    return %c0_i32, %c0_i32_0 : i32, i32
  }
  func.func @transform_4(%arg0: i32) -> (i32, i32) {
    %c0_i32 = arith.constant 0 : i32
    %c0_i32_0 = arith.constant 0 : i32
    %c0_i32_1 = arith.constant 0 : i32
    return %c0_i32, %c0_i32_0 : i32, i32
  }
  func.func @transform_5(%arg0: i32) -> (i32, i32, i32) {
    %c0_i32 = arith.constant 0 : i32
    %c0_i32_0 = arith.constant 0 : i32
    %c0_i32_1 = arith.constant 0 : i32
    return %arg0, %c0_i32, %c0_i32_0 : i32, i32, i32
  }
}

</mosaic_0001>

<llo_original>
// kernel: _lambda_.3
$region0: #{_lambda_.3}
  #allocation0 [shape = 'u32[]', space=smem, size = 0x4, offset = 0x4, fixed_abs, tag = 'smem constant byte address 0x4 - core index']
  #allocation1 [shape = 'u32[144,128]{1,0:T(1,128)}', space=vmem, size = 0x12000, scoped, tag = 'internal scratch']
  #allocation2 [shape = 'bf16[10,10,8]{2,1,0:T(8,128)(2,1)}', space=vmem, size = 0xa000, scoped, tag = 'scratch operand']
  #allocation3 [shape = 'f32[64,8]{1,0:T(8,128)}', space=vmem, size = 0x8000, scoped, tag = 'scratch operand']
  #allocation4 [shape = 'bf16[64,72]{1,0:T(16,128)(2,1)}', space=vmem, size = 0x4000, scoped, tag = 'scratch operand']
  %s0 = inlined_call_operand.vmem [shape: bf16[2,1,10,10,8], index: 0, kind: input, shape index: {}]
  %s1 = inlined_call_operand.vmem [shape: bf16[72,8], index: 1, kind: input, shape index: {}]
  %s2 = inlined_call_operand.vmem [shape: f32[1,8], index: 2, kind: input, shape index: {}]
  %s3 = inlined_call_operand.vmem [shape: bf16[72,8], index: 3, kind: input, shape index: {}]
  %s4 = inlined_call_operand.vmem [shape: f32[1,8], index: 4, kind: input, shape index: {}]
  %s5 = inlined_call_operand.vmem [shape: f32[2,64,8], index: 5, kind: output, shape index: {}]
  %s6 = sld [smem:[#allocation0]]
  $region53: #{_lambda_.3} parent=0
    _
  %s8 = ssub.s32 1, %s6
  %s9 = scalar_select 0, %s8, %s6
  loop: start=0, step=1, limit=4
  $region2: #{_lambda_.3} parent=0 // loop_pre_header
    _
  $region3: #{_lambda_.3} parent=0 // loop_header
    %s11 = sphi 0, %s15
    %p12 = scmp.ge.s32.totalorder %s11, 4
    %s21 = sphi 0, %s23
    %s24 = sphi 0, %s21
    %s25 = sphi 0, %s24
    %s41 = sphi 0, %s25
    %s45 = sphi 0, %s45
    %s47 = sphi 0, %s45
    %s48 = sphi 0, %s47
    %s62 = sphi 0, %s48
    %s66 = sphi 0, %s66
    %s68 = sphi 0, %s66
    %s69 = sphi 0, %s68
    %s83 = sphi 0, %s69
    %s87 = sphi 0, %s87
    %s89 = sphi 0, %s87
    %s90 = sphi 0, %s89
    %s104 = sphi 0, %s90
    %s108 = sphi 0, %s108
    %s110 = sphi 0, %s108
    %s111 = sphi 0, %s110
    %s125 = sphi 0, %s111
    %s131 = sphi 0, %s133
    %s134 = sphi 0, %s131
    %s135 = sphi 0, %s134
    %s151 = sphi 0, %s135
  $region4: #{_lambda_.3} parent=0 // loop_header_branch
    %14 = sbr.rel (%p12) target = $region8
  $region5: #{_lambda_.3} parent=0 // loop_body
    %s16 = ssub.s32 %s11, 1
    %s17 = ssub.s32 %s11, 2
    %s18 = sadd.s32 %s11, 1
    %s19 = ssub.s32 %s11, %s18
    %p20 = scmp.eq.s32.totalorder %s19, 0
    %s22 = sadd.s32 %s21, 1
    %s23 = scalar_select %p20, %s21, %s22
    %p26 = pneg %p20
    %p27 = scmp.eq.s32.totalorder %s11, 1
    %p28 = por %p26, %p27
    %p29 = scmp.ne.s32.totalorder %s21, %s24
    %p30 = scmp.eq.s32.totalorder %s11, 0
    %p31 = por %p29, %p30
    %p32 = scmp.ne.s32.totalorder %s21, %s24
    %p33 = scmp.eq.s32.totalorder %s16, 1
    %p34 = por %p32, %p33
    %p35 = scmp.ne.s32.totalorder %s24, %s25
    %p36 = scmp.eq.s32.totalorder %s16, 0
    %p37 = por %p35, %p36
    %p38 = scmp.ne.s32.totalorder %s24, %s25
    %p39 = scmp.eq.s32.totalorder %s17, 1
    %p40 = por %p38, %p39
    %p42 = scmp.ne.s32.totalorder %s25, %s41
    %p43 = scmp.eq.s32.totalorder %s17, 0
    %p44 = por %p42, %p43
    %s46 = sadd.s32 %s45, 1
    %p49 = scmp.eq.s32.totalorder %s11, 1
    %p50 = scmp.ne.s32.totalorder %s45, %s47
    %p51 = scmp.eq.s32.totalorder %s11, 0
    %p52 = por %p50, %p51
    %p53 = scmp.ne.s32.totalorder %s45, %s47
    %p54 = scmp.eq.s32.totalorder %s16, 1
    %p55 = por %p53, %p54
    %p56 = scmp.ne.s32.totalorder %s47, %s48
    %p57 = scmp.eq.s32.totalorder %s16, 0
    %p58 = por %p56, %p57
    %p59 = scmp.ne.s32.totalorder %s47, %s48
    %p60 = scmp.eq.s32.totalorder %s17, 1
    %p61 = por %p59, %p60
    %p63 = scmp.ne.s32.totalorder %s48, %s62
    %p64 = scmp.eq.s32.totalorder %s17, 0
    %p65 = por %p63, %p64
    %s67 = sadd.s32 %s66, 1
    %p70 = scmp.eq.s32.totalorder %s11, 1
    %p71 = scmp.ne.s32.totalorder %s66, %s68
    %p72 = scmp.eq.s32.totalorder %s11, 0
    %p73 = por %p71, %p72
    %p74 = scmp.ne.s32.totalorder %s66, %s68
    %p75 = scmp.eq.s32.totalorder %s16, 1
    %p76 = por %p74, %p75
    %p77 = scmp.ne.s32.totalorder %s68, %s69
    %p78 = scmp.eq.s32.totalorder %s16, 0
    %p79 = por %p77, %p78
    %p80 = scmp.ne.s32.totalorder %s68, %s69
    %p81 = scmp.eq.s32.totalorder %s17, 1
    %p82 = por %p80, %p81
    %p84 = scmp.ne.s32.totalorder %s69, %s83
    %p85 = scmp.eq.s32.totalorder %s17, 0
    %p86 = por %p84, %p85
    %s88 = sadd.s32 %s87, 1
    %p91 = scmp.eq.s32.totalorder %s11, 1
    %p92 = scmp.ne.s32.totalorder %s87, %s89
    %p93 = scmp.eq.s32.totalorder %s11, 0
    %p94 = por %p92, %p93
    %p95 = scmp.ne.s32.totalorder %s87, %s89
    %p96 = scmp.eq.s32.totalorder %s16, 1
    %p97 = por %p95, %p96
    %p98 = scmp.ne.s32.totalorder %s89, %s90
    %p99 = scmp.eq.s32.totalorder %s16, 0
    %p100 = por %p98, %p99
    %p101 = scmp.ne.s32.totalorder %s89, %s90
    %p102 = scmp.eq.s32.totalorder %s17, 1
    %p103 = por %p101, %p102
    %p105 = scmp.ne.s32.totalorder %s90, %s104
    %p106 = scmp.eq.s32.totalorder %s17, 0
    %p107 = por %p105, %p106
    %s109 = sadd.s32 %s108, 1
    %p112 = scmp.eq.s32.totalorder %s11, 1
    %p113 = scmp.ne.s32.totalorder %s108, %s110
    %p114 = scmp.eq.s32.totalorder %s11, 0
    %p115 = por %p113, %p114
    %p116 = scmp.ne.s32.totalorder %s108, %s110
    %p117 = scmp.eq.s32.totalorder %s16, 1
    %p118 = por %p116, %p117
    %p119 = scmp.ne.s32.totalorder %s110, %s111
    %p120 = scmp.eq.s32.totalorder %s16, 0
    %p121 = por %p119, %p120
    %p122 = scmp.ne.s32.totalorder %s110, %s111
    %p123 = scmp.eq.s32.totalorder %s17, 1
    %p124 = por %p122, %p123
    %p126 = scmp.ne.s32.totalorder %s111, %s125
    %p127 = scmp.eq.s32.totalorder %s17, 0
    %p128 = por %p126, %p127
    %s129 = ssub.s32 %s11, %s18
    %p130 = scmp.eq.s32.totalorder %s129, 0
    %s132 = sadd.s32 %s131, 1
    %s133 = scalar_select %p130, %s131, %s132
    %p136 = pneg %p130
    %p137 = scmp.eq.s32.totalorder %s11, 1
    %p138 = por %p136, %p137
    %p139 = scmp.ne.s32.totalorder %s131, %s134
    %p140 = scmp.eq.s32.totalorder %s11, 0
    %p141 = por %p139, %p140
    %p142 = scmp.ne.s32.totalorder %s131, %s134
    %p143 = scmp.eq.s32.totalorder %s16, 1
    %p144 = por %p142, %p143
    %p145 = scmp.ne.s32.totalorder %s134, %s135
    %p146 = scmp.eq.s32.totalorder %s16, 0
    %p147 = por %p145, %p146
    %p148 = scmp.ne.s32.totalorder %s134, %s135
    %p149 = scmp.eq.s32.totalorder %s17, 1
    %p150 = por %p148, %p149
    %p152 = scmp.ne.s32.totalorder %s135, %s151
    %p153 = scmp.eq.s32.totalorder %s17, 0
    %p154 = por %p152, %p153
    %p155 = scmp.le.s32.totalorder 1, %s11
    %p156 = scmp.lt.s32.totalorder %s11, 3
    %p157 = pnand %p155, %p156
    %p158 = pneg %p157
    // Predicated region
    $region9: #{_lambda_.3} parent=5 // pred_check
      _
    $region10: #{_lambda_.3} parent=5 // pred_check_branch
      %160 = sbr.rel (%p157) target = $region12
    $region11: #{_lambda_.3} parent=5 // pred_region
      %s161 = ssub.s32 %s11, 1
      // Predicated region
      $region13: #{_lambda_.3} parent=11 // pred_check
        %p162 = pneg %p58
      $region14: #{_lambda_.3} parent=11 // pred_check_branch
        %164 = sbr.rel (%p162) target = $region16
      $region15: #{_lambda_.3} parent=11 // pred_region
        _
      $region16: #{_lambda_.3} parent=11 // pred_fallthru
        _
      // Predicated region
      $region17: #{_lambda_.3} parent=11 // pred_check
        %p165 = pneg %p79
      $region18: #{_lambda_.3} parent=11 // pred_check_branch
        %167 = sbr.rel (%p165) target = $region20
      $region19: #{_lambda_.3} parent=11 // pred_region
        _
      $region20: #{_lambda_.3} parent=11 // pred_fallthru
        _
      // Predicated region
      $region21: #{_lambda_.3} parent=11 // pred_check
        %p168 = pneg %p100
      $region22: #{_lambda_.3} parent=11 // pred_check_branch
        %170 = sbr.rel (%p168) target = $region24
      $region23: #{_lambda_.3} parent=11 // pred_region
        _
      $region24: #{_lambda_.3} parent=11 // pred_fallthru
        _
      // Predicated region
      $region25: #{_lambda_.3} parent=11 // pred_check
        %p171 = pneg %p121
      $region26: #{_lambda_.3} parent=11 // pred_check_branch
        %173 = sbr.rel (%p171) target = $region28
      $region27: #{_lambda_.3} parent=11 // pred_region
        _
      $region28: #{_lambda_.3} parent=11 // pred_fallthru
        _
    $region12: #{_lambda_.3} parent=5 // pred_fallthru
      _
    %p174 = scmp.lt.s32.totalorder %s11, 2
    // Predicated region
    $region29: #{_lambda_.3} parent=5 // pred_check
      %p175 = pneg %p174
    $region30: #{_lambda_.3} parent=5 // pred_check_branch
      %177 = sbr.rel (%p175) target = $region32
    $region31: #{_lambda_.3} parent=5 // pred_region
      // Predicated region
      $region33: #{_lambda_.3} parent=31 // pred_check
        %p178 = pneg %p31
      $region34: #{_lambda_.3} parent=31 // pred_check_branch
        %180 = sbr.rel (%p178) target = $region36
      $region35: #{_lambda_.3} parent=31 // pred_region
        %p181 = scmp.lt.s32.totalorder %s11, 1
        %s182 = scalar_select %p181, %s11, 1
        %s183 = smul.addr %s182, 20
        %s184 = smul.addr %s183, 4
        %s185 = scalar_lea.vmem %s0, %s184
      $region36: #{_lambda_.3} parent=31 // pred_fallthru
        _
    $region32: #{_lambda_.3} parent=5 // pred_fallthru
      _
    %p186 = scmp.le.s32.totalorder 1, %s11
    %p187 = scmp.lt.s32.totalorder %s11, 3
    %p188 = pnand %p186, %p187
    %p189 = pneg %p188
    // Predicated region
    $region37: #{_lambda_.3} parent=5 // pred_check
      _
    $region38: #{_lambda_.3} parent=5 // pred_check_branch
      %191 = sbr.rel (%p188) target = $region40
    $region39: #{_lambda_.3} parent=5 // pred_region
      %s192 = ssub.s32 %s11, 1
      %p193 = scmp.lt.s32.totalorder %s16, 1
      %s194 = scalar_select %p193, %s16, 1
      %s195 = smul.addr %s194, 20
      %s196 = smul.addr %s195, 4
      %s197 = scalar_lea.vmem %s0, %s196
      %p198 = pneg %p37
      %p199 = pneg %p34
      %p200 = pneg %p58
      %p201 = pneg %p55
      %p202 = pneg %p79
      %p203 = pneg %p76
      %p204 = pneg %p100
      %p205 = pneg %p97
      %p206 = pneg %p121
      %p207 = pneg %p118
      %p208 = pneg %p147
      %p209 = pneg %p144
      %p210 = scmp.lt.s32.totalorder %s16, 1
      %s211 = scalar_select %p210, %s16, 1
      %s212 = smul.addr %s211, 8
      %s213 = smul.addr %s212, 8
      %s214 = scalar_lea.vmem %s5, %s213
      %p215 = scmp.lt.s32.totalorder %s16, 1
      %s216 = scalar_select %p215, %s16, 1
      %s217 = smul.addr %s216, 20
      %s218 = smul.addr %s217, 4
      %s219 = scalar_lea.vmem %s0, %s218
      %p220 = scmp.lt.s32.totalorder %s16, 1
      %s221 = scalar_select %p220, %s16, 1
      %s222 = smul.addr %s221, 8
      %s223 = smul.addr %s222, 8
      %s224 = scalar_lea.vmem %s5, %s223
      %v226 = vld [vmem:[%s2] sm:$0x1]
      %v228 = vlaneseq
      %v229 = vshrl.u32 %v228, 7
      %v230 = vsub.s32 0, %v229
      %v231 = vrot.slane %v226, %v230
      %vm233 = vcmask 64512
      %234 = vst.msk [vmem:[#allocation3] sm:$0xff] %vm233, %v231
      %235 = vst.msk [vmem:[#allocation3 + $0x8] sm:$0xff] %vm233, %v231
      %236 = vst.msk [vmem:[#allocation3 + $0x10] sm:$0xff] %vm233, %v231
      %237 = vst.msk [vmem:[#allocation3 + $0x18] sm:$0xff] %vm233, %v231
      %238 = vst.msk [vmem:[#allocation3 + $0x20] sm:$0xff] %vm233, %v231
      %239 = vst.msk [vmem:[#allocation3 + $0x28] sm:$0xff] %vm233, %v231
      %240 = vst.msk [vmem:[#allocation3 + $0x30] sm:$0xff] %vm233, %v231
      %241 = vst.msk [vmem:[#allocation3 + $0x38] sm:$0xff] %vm233, %v231
      %v242 = vld [vmem:[%s219] sm:$0xf]
      %v243 = vld [vmem:[%s219 + $0x8] sm:$0xf]
      %v244 = vld [vmem:[%s219 + $0x10] sm:$0xf]
      %v245 = vld [vmem:[%s219 + $0x18] sm:$0xf]
      %v246 = vld [vmem:[%s219 + $0x20] sm:$0xf]
      %v247 = vld [vmem:[%s219 + $0x28] sm:$0xf]
      %v248 = vld [vmem:[%s219 + $0x30] sm:$0xf]
      %v249 = vld [vmem:[%s219 + $0x38] sm:$0xf]
      %v258 = vunpack.c.l.b16 %v242
      %v259 = vunpack.c.l.b16 %v243
      %v260 = vunpack.c.l.b16 %v244
      %v261 = vunpack.c.l.b16 %v245
      %v262 = vunpack.c.l.b16 %v246
      %v263 = vunpack.c.l.b16 %v247
      %v264 = vunpack.c.l.b16 %v248
      %v265 = vunpack.c.l.b16 %v249
      %v266 = vpack.c.b16 %v259, %v258
      %v267 = vpack.c.b16 %v261, %v260
      %v268 = vpack.c.b16 %v263, %v262
      %v269 = vpack.c.b16 %v265, %v264
      %274 = vst.msk [vmem:[#allocation4] sm:$0xff] %vm233, %v266
      %275 = vst.msk [vmem:[#allocation4 + $0x8] sm:$0xff] %vm233, %v267
      %276 = vst.msk [vmem:[#allocation4 + $0x10] sm:$0xff] %vm233, %v268
      %277 = vst.msk [vmem:[#allocation4 + $0x18] sm:$0xff] %vm233, %v269
      %v278 = vld [vmem:[%s219] sm:$0xf]
      %v279 = vld [vmem:[%s219 + $0x4] sm:$0x1]
      %v280 = vld [vmem:[%s219 + $0x8] sm:$0xf]
      %v281 = vld [vmem:[%s219 + $0xc] sm:$0x1]
      %v282 = vld [vmem:[%s219 + $0x10] sm:$0xf]
      %v283 = vld [vmem:[%s219 + $0x14] sm:$0x1]
      %v284 = vld [vmem:[%s219 + $0x18] sm:$0xf]
      %v285 = vld [vmem:[%s219 + $0x1c] sm:$0x1]
      %v286 = vld [vmem:[%s219 + $0x20] sm:$0xf]
      %v287 = vld [vmem:[%s219 + $0x24] sm:$0x1]
      %v288 = vld [vmem:[%s219 + $0x28] sm:$0xf]
      %v289 = vld [vmem:[%s219 + $0x2c] sm:$0x1]
      %v290 = vld [vmem:[%s219 + $0x30] sm:$0xf]
      %v291 = vld [vmem:[%s219 + $0x34] sm:$0x1]
      %v292 = vld [vmem:[%s219 + $0x38] sm:$0xf]
      %v293 = vld [vmem:[%s219 + $0x3c] sm:$0x1]
      %vm294 = vsmask.f32 3328
      %vm295 = vsmask.f32 7440
      %vm296 = vmor %vm294, %vm295
      %v298 = vshrl.u32 %v278, 16
      %v300 = vrot.slane %v298, 4
      %v301 = vshll.u32 %v278, 16
      %v303 = vrot.slane %v301, 5
      %v304 = vor.u32 %v300, %v303
      %v305 = vrot.slane %v304, 4
      %v307 = vshll.u32 %v279, 16
      %v309 = vrot.slane %v307, 5
      %v310 = vsel %vm296, %v305, %v309
      %v312 = vshrl.u32 %v280, 16
      %v314 = vrot.slane %v312, 4
      %v315 = vshll.u32 %v280, 16
      %v317 = vrot.slane %v315, 5
      %v318 = vor.u32 %v314, %v317
      %v319 = vrot.slane %v318, 4
      %v321 = vshll.u32 %v281, 16
      %v323 = vrot.slane %v321, 5
      %v324 = vsel %vm296, %v319, %v323
      %v326 = vshrl.u32 %v282, 16
      %v328 = vrot.slane %v326, 4
      %v329 = vshll.u32 %v282, 16
      %v331 = vrot.slane %v329, 5
      %v332 = vor.u32 %v328, %v331
      %v333 = vrot.slane %v332, 4
      %v335 = vshll.u32 %v283, 16
      %v337 = vrot.slane %v335, 5
      %v338 = vsel %vm296, %v333, %v337
      %v340 = vshrl.u32 %v284, 16
      %v342 = vrot.slane %v340, 4
      %v343 = vshll.u32 %v284, 16
      %v345 = vrot.slane %v343, 5
      %v346 = vor.u32 %v342, %v345
      %v347 = vrot.slane %v346, 4
      %v349 = vshll.u32 %v285, 16
      %v351 = vrot.slane %v349, 5
      %v352 = vsel %vm296, %v347, %v351
      %v354 = vshrl.u32 %v286, 16
      %v356 = vrot.slane %v354, 4
      %v357 = vshll.u32 %v286, 16
      %v359 = vrot.slane %v357, 5
      %v360 = vor.u32 %v356, %v359
      %v361 = vrot.slane %v360, 4
      %v363 = vshll.u32 %v287, 16
      %v365 = vrot.slane %v363, 5
      %v366 = vsel %vm296, %v361, %v365
      %v368 = vshrl.u32 %v288, 16
      %v370 = vrot.slane %v368, 4
      %v371 = vshll.u32 %v288, 16
      %v373 = vrot.slane %v371, 5
      %v374 = vor.u32 %v370, %v373
      %v375 = vrot.slane %v374, 4
      %v377 = vshll.u32 %v289, 16
      %v379 = vrot.slane %v377, 5
      %v380 = vsel %vm296, %v375, %v379
      %v382 = vshrl.u32 %v290, 16
      %v384 = vrot.slane %v382, 4
      %v385 = vshll.u32 %v290, 16
      %v387 = vrot.slane %v385, 5
      %v388 = vor.u32 %v384, %v387
      %v389 = vrot.slane %v388, 4
      %v391 = vshll.u32 %v291, 16
      %v393 = vrot.slane %v391, 5
      %v394 = vsel %vm296, %v389, %v393
      %v396 = vshrl.u32 %v292, 16
      %v398 = vrot.slane %v396, 4
      %v399 = vshll.u32 %v292, 16
      %v401 = vrot.slane %v399, 5
      %v402 = vor.u32 %v398, %v401
      %v403 = vrot.slane %v402, 4
      %v405 = vshll.u32 %v293, 16
      %v407 = vrot.slane %v405, 5
      %v408 = vsel %vm296, %v403, %v407
      %v409 = vunpack.c.l.b16 %v310
      %v410 = vunpack.c.l.b16 %v324
      %v411 = vunpack.c.l.b16 %v338
      %v412 = vunpack.c.l.b16 %v352
      %v413 = vunpack.c.l.b16 %v366
      %v414 = vunpack.c.l.b16 %v380
      %v415 = vunpack.c.l.b16 %v394
      %v416 = vunpack.c.l.b16 %v408
      %v417 = vpack.c.b16 %v410, %v409
      %v418 = vpack.c.b16 %v412, %v411
      %v419 = vpack.c.b16 %v414, %v413
      %v420 = vpack.c.b16 %v416, %v415
      %421 = vrot.lane.b32.xlu0 %v417, 8
      %v422 = vpop.permute.xlu0 %421
      %423 = vrot.lane.b32.xlu0 %v418, 8
      %v424 = vpop.permute.xlu0 %423
      %425 = vrot.lane.b32.xlu0 %v419, 8
      %v426 = vpop.permute.xlu0 %425
      %427 = vrot.lane.b32.xlu0 %v420, 8
      %v428 = vpop.permute.xlu0 %427
      %vm433 = vcmask 130112
      %434 = vst.msk [vmem:[#allocation4] sm:$0xff] %vm433, %v422
      %435 = vst.msk [vmem:[#allocation4 + $0x8] sm:$0xff] %vm433, %v424
      %436 = vst.msk [vmem:[#allocation4 + $0x10] sm:$0xff] %vm433, %v426
      %437 = vst.msk [vmem:[#allocation4 + $0x18] sm:$0xff] %vm433, %v428
      %v438 = vld [vmem:[%s219] sm:$0xe]
      %v439 = vld [vmem:[%s219 + $0x4] sm:$0x1]
      %v440 = vld [vmem:[%s219 + $0x8] sm:$0xe]
      %v441 = vld [vmem:[%s219 + $0xc] sm:$0x1]
      %v442 = vld [vmem:[%s219 + $0x10] sm:$0xe]
      %v443 = vld [vmem:[%s219 + $0x14] sm:$0x1]
      %v444 = vld [vmem:[%s219 + $0x18] sm:$0xe]
      %v445 = vld [vmem:[%s219 + $0x1c] sm:$0x1]
      %v446 = vld [vmem:[%s219 + $0x20] sm:$0xe]
      %v447 = vld [vmem:[%s219 + $0x24] sm:$0x1]
      %v448 = vld [vmem:[%s219 + $0x28] sm:$0xe]
      %v449 = vld [vmem:[%s219 + $0x2c] sm:$0x1]
      %v450 = vld [vmem:[%s219 + $0x30] sm:$0xe]
      %v451 = vld [vmem:[%s219 + $0x34] sm:$0x1]
      %v452 = vld [vmem:[%s219 + $0x38] sm:$0xe]
      %v453 = vld [vmem:[%s219 + $0x3c] sm:$0x1]
      %vm470 = vcmask 1042432
      %vm471 = vcmask 1046532
      %vm472 = vmor %vm470, %vm471
      %v473 = vrot.slane %v438, 5
      %v474 = vrot.slane %v473, 4
      %v475 = vrot.slane %v439, 5
      %v476 = vsel %vm472, %v474, %v475
      %v477 = vrot.slane %v440, 5
      %v478 = vrot.slane %v477, 4
      %v479 = vrot.slane %v441, 5
      %v480 = vsel %vm472, %v478, %v479
      %v481 = vrot.slane %v442, 5
      %v482 = vrot.slane %v481, 4
      %v483 = vrot.slane %v443, 5
      %v484 = vsel %vm472, %v482, %v483
      %v485 = vrot.slane %v444, 5
      %v486 = vrot.slane %v485, 4
      %v487 = vrot.slane %v445, 5
      %v488 = vsel %vm472, %v486, %v487
      %v489 = vrot.slane %v446, 5
      %v490 = vrot.slane %v489, 4
      %v491 = vrot.slane %v447, 5
      %v492 = vsel %vm472, %v490, %v491
      %v493 = vrot.slane %v448, 5
      %v494 = vrot.slane %v493, 4
      %v495 = vrot.slane %v449, 5
      %v496 = vsel %vm472, %v494, %v495
      %v497 = vrot.slane %v450, 5
      %v498 = vrot.slane %v497, 4
      %v499 = vrot.slane %v451, 5
      %v500 = vsel %vm472, %v498, %v499
      %v501 = vrot.slane %v452, 5
      %v502 = vrot.slane %v501, 4
      %v503 = vrot.slane %v453, 5
      %v504 = vsel %vm472, %v502, %v503
      %v505 = vunpack.c.l.b16 %v476
      %v506 = vunpack.c.l.b16 %v480
      %v507 = vunpack.c.l.b16 %v484
      %v508 = vunpack.c.l.b16 %v488
      %v509 = vunpack.c.l.b16 %v492
      %v510 = vunpack.c.l.b16 %v496
      %v511 = vunpack.c.l.b16 %v500
      %v512 = vunpack.c.l.b16 %v504
      %v513 = vpack.c.b16 %v506, %v505
      %v514 = vpack.c.b16 %v508, %v507
      %v515 = vpack.c.b16 %v510, %v509
      %v516 = vpack.c.b16 %v512, %v511
      %517 = vrot.lane.b32.xlu0 %v513, 16
      %v518 = vpop.permute.xlu0 %517
      %519 = vrot.lane.b32.xlu0 %v514, 16
      %v520 = vpop.permute.xlu0 %519
      %521 = vrot.lane.b32.xlu0 %v515, 16
      %v522 = vpop.permute.xlu0 %521
      %523 = vrot.lane.b32.xlu0 %v516, 16
      %v524 = vpop.permute.xlu0 %523
      %vm529 = vcmask 195712
      %530 = vst.msk [vmem:[#allocation4] sm:$0xff] %vm529, %v518
      %531 = vst.msk [vmem:[#allocation4 + $0x8] sm:$0xff] %vm529, %v520
      %532 = vst.msk [vmem:[#allocation4 + $0x10] sm:$0xff] %vm529, %v522
      %533 = vst.msk [vmem:[#allocation4 + $0x18] sm:$0xff] %vm529, %v524
      %s534 = scalar_lea.vmem %s219, 8
      %v535 = vld [vmem:[%s534] sm:$0xf]
      %v536 = vld [vmem:[%s534 + $0x8] sm:$0xf]
      %v537 = vld [vmem:[%s534 + $0x10] sm:$0xf]
      %v538 = vld [vmem:[%s534 + $0x18] sm:$0xf]
      %v539 = vld [vmem:[%s534 + $0x20] sm:$0xf]
      %v540 = vld [vmem:[%s534 + $0x28] sm:$0xf]
      %v541 = vld [vmem:[%s534 + $0x30] sm:$0xf]
      %v542 = vld [vmem:[%s534 + $0x38] sm:$0xf]
      %v551 = vunpack.c.l.b16 %v535
      %v552 = vunpack.c.l.b16 %v536
      %v553 = vunpack.c.l.b16 %v537
      %v554 = vunpack.c.l.b16 %v538
      %v555 = vunpack.c.l.b16 %v539
      %v556 = vunpack.c.l.b16 %v540
      %v557 = vunpack.c.l.b16 %v541
      %v558 = vunpack.c.l.b16 %v542
      %v559 = vpack.c.b16 %v552, %v551
      %v560 = vpack.c.b16 %v554, %v553
      %v561 = vpack.c.b16 %v556, %v555
      %v562 = vpack.c.b16 %v558, %v557
      %563 = vrot.lane.b32.xlu0 %v559, 24
      %v564 = vpop.permute.xlu0 %563
      %565 = vrot.lane.b32.xlu0 %v560, 24
      %v566 = vpop.permute.xlu0 %565
      %567 = vrot.lane.b32.xlu0 %v561, 24
      %v568 = vpop.permute.xlu0 %567
      %569 = vrot.lane.b32.xlu0 %v562, 24
      %v570 = vpop.permute.xlu0 %569
      %vm575 = vcmask 261312
      %576 = vst.msk [vmem:[#allocation4] sm:$0xff] %vm575, %v564
      %577 = vst.msk [vmem:[#allocation4 + $0x8] sm:$0xff] %vm575, %v566
      %578 = vst.msk [vmem:[#allocation4 + $0x10] sm:$0xff] %vm575, %v568
      %579 = vst.msk [vmem:[#allocation4 + $0x18] sm:$0xff] %vm575, %v570
      %v580 = vld [vmem:[%s534] sm:$0xf]
      %v581 = vld [vmem:[%s534 + $0x4] sm:$0x1]
      %v582 = vld [vmem:[%s534 + $0x8] sm:$0xf]
      %v583 = vld [vmem:[%s534 + $0xc] sm:$0x1]
      %v584 = vld [vmem:[%s534 + $0x10] sm:$0xf]
      %v585 = vld [vmem:[%s534 + $0x14] sm:$0x1]
      %v586 = vld [vmem:[%s534 + $0x18] sm:$0xf]
      %v587 = vld [vmem:[%s534 + $0x1c] sm:$0x1]
      %v588 = vld [vmem:[%s534 + $0x20] sm:$0xf]
      %v589 = vld [vmem:[%s534 + $0x24] sm:$0x1]
      %v590 = vld [vmem:[%s534 + $0x28] sm:$0xf]
      %v591 = vld [vmem:[%s534 + $0x2c] sm:$0x1]
      %v592 = vld [vmem:[%s534 + $0x30] sm:$0xf]
      %v593 = vld [vmem:[%s534 + $0x34] sm:$0x1]
      %v594 = vld [vmem:[%s534 + $0x38] sm:$0xf]
      %v595 = vld [vmem:[%s534 + $0x3c] sm:$0x1]
      %v597 = vshrl.u32 %v580, 16
      %v599 = vrot.slane %v597, 4
      %v600 = vshll.u32 %v580, 16
      %v602 = vrot.slane %v600, 5
      %v603 = vor.u32 %v599, %v602
      %v604 = vrot.slane %v603, 4
      %v606 = vshll.u32 %v581, 16
      %v608 = vrot.slane %v606, 5
      %v609 = vsel %vm296, %v604, %v608
      %v611 = vshrl.u32 %v582, 16
      %v613 = vrot.slane %v611, 4
      %v614 = vshll.u32 %v582, 16
      %v616 = vrot.slane %v614, 5
      %v617 = vor.u32 %v613, %v616
      %v618 = vrot.slane %v617, 4
      %v620 = vshll.u32 %v583, 16
      %v622 = vrot.slane %v620, 5
      %v623 = vsel %vm296, %v618, %v622
      %v625 = vshrl.u32 %v584, 16
      %v627 = vrot.slane %v625, 4
      %v628 = vshll.u32 %v584, 16
      %v630 = vrot.slane %v628, 5
      %v631 = vor.u32 %v627, %v630
      %v632 = vrot.slane %v631, 4
      %v634 = vshll.u32 %v585, 16
      %v636 = vrot.slane %v634, 5
      %v637 = vsel %vm296, %v632, %v636
      %v639 = vshrl.u32 %v586, 16
      %v641 = vrot.slane %v639, 4
      %v642 = vshll.u32 %v586, 16
      %v644 = vrot.slane %v642, 5
      %v645 = vor.u32 %v641, %v644
      %v646 = vrot.slane %v645, 4
      %v648 = vshll.u32 %v587, 16
      %v650 = vrot.slane %v648, 5
      %v651 = vsel %vm296, %v646, %v650
      %v653 = vshrl.u32 %v588, 16
      %v655 = vrot.slane %v653, 4
      %v656 = vshll.u32 %v588, 16
      %v658 = vrot.slane %v656, 5
      %v659 = vor.u32 %v655, %v658
      %v660 = vrot.slane %v659, 4
      %v662 = vshll.u32 %v589, 16
      %v664 = vrot.slane %v662, 5
      %v665 = vsel %vm296, %v660, %v664
      %v667 = vshrl.u32 %v590, 16
      %v669 = vrot.slane %v667, 4
      %v670 = vshll.u32 %v590, 16
      %v672 = vrot.slane %v670, 5
      %v673 = vor.u32 %v669, %v672
      %v674 = vrot.slane %v673, 4
      %v676 = vshll.u32 %v591, 16
      %v678 = vrot.slane %v676, 5
      %v679 = vsel %vm296, %v674, %v678
      %v681 = vshrl.u32 %v592, 16
      %v683 = vrot.slane %v681, 4
      %v684 = vshll.u32 %v592, 16
      %v686 = vrot.slane %v684, 5
      %v687 = vor.u32 %v683, %v686
      %v688 = vrot.slane %v687, 4
      %v690 = vshll.u32 %v593, 16
      %v692 = vrot.slane %v690, 5
      %v693 = vsel %vm296, %v688, %v692
      %v695 = vshrl.u32 %v594, 16
      %v697 = vrot.slane %v695, 4
      %v698 = vshll.u32 %v594, 16
      %v700 = vrot.slane %v698, 5
      %v701 = vor.u32 %v697, %v700
      %v702 = vrot.slane %v701, 4
      %v704 = vshll.u32 %v595, 16
      %v706 = vrot.slane %v704, 5
      %v707 = vsel %vm296, %v702, %v706
      %v708 = vunpack.c.l.b16 %v609
      %v709 = vunpack.c.l.b16 %v623
      %v710 = vunpack.c.l.b16 %v637
      %v711 = vunpack.c.l.b16 %v651
      %v712 = vunpack.c.l.b16 %v665
      %v713 = vunpack.c.l.b16 %v679
      %v714 = vunpack.c.l.b16 %v693
      %v715 = vunpack.c.l.b16 %v707
      %v716 = vpack.c.b16 %v709, %v708
      %v717 = vpack.c.b16 %v711, %v710
      %v718 = vpack.c.b16 %v713, %v712
      %v719 = vpack.c.b16 %v715, %v714
      %720 = vrot.lane.b32.xlu0 %v716, 32
      %v721 = vpop.permute.xlu0 %720
      %722 = vrot.lane.b32.xlu0 %v717, 32
      %v723 = vpop.permute.xlu0 %722
      %724 = vrot.lane.b32.xlu0 %v718, 32
      %v725 = vpop.permute.xlu0 %724
      %726 = vrot.lane.b32.xlu0 %v719, 32
      %v727 = vpop.permute.xlu0 %726
      %vm732 = vcmask 326912
      %733 = vst.msk [vmem:[#allocation4] sm:$0xff] %vm732, %v721
      %734 = vst.msk [vmem:[#allocation4 + $0x8] sm:$0xff] %vm732, %v723
      %735 = vst.msk [vmem:[#allocation4 + $0x10] sm:$0xff] %vm732, %v725
      %736 = vst.msk [vmem:[#allocation4 + $0x18] sm:$0xff] %vm732, %v727
      %v737 = vld [vmem:[%s534] sm:$0xe]
      %v738 = vld [vmem:[%s534 + $0x4] sm:$0x1]
      %v739 = vld [vmem:[%s534 + $0x8] sm:$0xe]
      %v740 = vld [vmem:[%s534 + $0xc] sm:$0x1]
      %v741 = vld [vmem:[%s534 + $0x10] sm:$0xe]
      %v742 = vld [vmem:[%s534 + $0x14] sm:$0x1]
      %v743 = vld [vmem:[%s534 + $0x18] sm:$0xe]
      %v744 = vld [vmem:[%s534 + $0x1c] sm:$0x1]
      %v745 = vld [vmem:[%s534 + $0x20] sm:$0xe]
      %v746 = vld [vmem:[%s534 + $0x24] sm:$0x1]
      %v747 = vld [vmem:[%s534 + $0x28] sm:$0xe]
      %v748 = vld [vmem:[%s534 + $0x2c] sm:$0x1]
      %v749 = vld [vmem:[%s534 + $0x30] sm:$0xe]
      %v750 = vld [vmem:[%s534 + $0x34] sm:$0x1]
      %v751 = vld [vmem:[%s534 + $0x38] sm:$0xe]
      %v752 = vld [vmem:[%s534 + $0x3c] sm:$0x1]
      %v769 = vrot.slane %v737, 5
      %v770 = vrot.slane %v769, 4
      %v771 = vrot.slane %v738, 5
      %v772 = vsel %vm472, %v770, %v771
      %v773 = vrot.slane %v739, 5
      %v774 = vrot.slane %v773, 4
      %v775 = vrot.slane %v740, 5
      %v776 = vsel %vm472, %v774, %v775
      %v777 = vrot.slane %v741, 5
      %v778 = vrot.slane %v777, 4
      %v779 = vrot.slane %v742, 5
      %v780 = vsel %vm472, %v778, %v779
      %v781 = vrot.slane %v743, 5
      %v782 = vrot.slane %v781, 4
      %v783 = vrot.slane %v744, 5
      %v784 = vsel %vm472, %v782, %v783
      %v785 = vrot.slane %v745, 5
      %v786 = vrot.slane %v785, 4
      %v787 = vrot.slane %v746, 5
      %v788 = vsel %vm472, %v786, %v787
      %v789 = vrot.slane %v747, 5
      %v790 = vrot.slane %v789, 4
      %v791 = vrot.slane %v748, 5
      %v792 = vsel %vm472, %v790, %v791
      %v793 = vrot.slane %v749, 5
      %v794 = vrot.slane %v793, 4
      %v795 = vrot.slane %v750, 5
      %v796 = vsel %vm472, %v794, %v795
      %v797 = vrot.slane %v751, 5
      %v798 = vrot.slane %v797, 4
      %v799 = vrot.slane %v752, 5
      %v800 = vsel %vm472, %v798, %v799
      %v801 = vunpack.c.l.b16 %v772
      %v802 = vunpack.c.l.b16 %v776
      %v803 = vunpack.c.l.b16 %v780
      %v804 = vunpack.c.l.b16 %v784
      %v805 = vunpack.c.l.b16 %v788
      %v806 = vunpack.c.l.b16 %v792
      %v807 = vunpack.c.l.b16 %v796
      %v808 = vunpack.c.l.b16 %v800
      %v809 = vpack.c.b16 %v802, %v801
      %v810 = vpack.c.b16 %v804, %v803
      %v811 = vpack.c.b16 %v806, %v805
      %v812 = vpack.c.b16 %v808, %v807
      %813 = vrot.lane.b32.xlu0 %v809, 40
      %v814 = vpop.permute.xlu0 %813
      %815 = vrot.lane.b32.xlu0 %v810, 40
      %v816 = vpop.permute.xlu0 %815
      %817 = vrot.lane.b32.xlu0 %v811, 40
      %v818 = vpop.permute.xlu0 %817
      %819 = vrot.lane.b32.xlu0 %v812, 40
      %v820 = vpop.permute.xlu0 %819
      %vm825 = vcmask 392512
      %826 = vst.msk [vmem:[#allocation4] sm:$0xff] %vm825, %v814
      %827 = vst.msk [vmem:[#allocation4 + $0x8] sm:$0xff] %vm825, %v816
      %828 = vst.msk [vmem:[#allocation4 + $0x10] sm:$0xff] %vm825, %v818
      %829 = vst.msk [vmem:[#allocation4 + $0x18] sm:$0xff] %vm825, %v820
      %s830 = scalar_lea.vmem %s219, 16
      %v831 = vld [vmem:[%s830] sm:$0xf]
      %v832 = vld [vmem:[%s830 + $0x8] sm:$0xf]
      %v833 = vld [vmem:[%s830 + $0x10] sm:$0xf]
      %v834 = vld [vmem:[%s830 + $0x18] sm:$0xf]
      %v835 = vld [vmem:[%s830 + $0x20] sm:$0xf]
      %v836 = vld [vmem:[%s830 + $0x28] sm:$0xf]
      %v837 = vld [vmem:[%s830 + $0x30] sm:$0xf]
      %v838 = vld [vmem:[%s830 + $0x38] sm:$0xf]
      %v847 = vunpack.c.l.b16 %v831
      %v848 = vunpack.c.l.b16 %v832
      %v849 = vunpack.c.l.b16 %v833
      %v850 = vunpack.c.l.b16 %v834
      %v851 = vunpack.c.l.b16 %v835
      %v852 = vunpack.c.l.b16 %v836
      %v853 = vunpack.c.l.b16 %v837
      %v854 = vunpack.c.l.b16 %v838
      %v855 = vpack.c.b16 %v848, %v847
      %v856 = vpack.c.b16 %v850, %v849
      %v857 = vpack.c.b16 %v852, %v851
      %v858 = vpack.c.b16 %v854, %v853
      %859 = vrot.lane.b32.xlu0 %v855, 48
      %v860 = vpop.permute.xlu0 %859
      %861 = vrot.lane.b32.xlu0 %v856, 48
      %v862 = vpop.permute.xlu0 %861
      %863 = vrot.lane.b32.xlu0 %v857, 48
      %v864 = vpop.permute.xlu0 %863
      %865 = vrot.lane.b32.xlu0 %v858, 48
      %v866 = vpop.permute.xlu0 %865
      %vm871 = vcmask 458112
      %872 = vst.msk [vmem:[#allocation4] sm:$0xff] %vm871, %v860
      %873 = vst.msk [vmem:[#allocation4 + $0x8] sm:$0xff] %vm871, %v862
      %874 = vst.msk [vmem:[#allocation4 + $0x10] sm:$0xff] %vm871, %v864
      %875 = vst.msk [vmem:[#allocation4 + $0x18] sm:$0xff] %vm871, %v866
      %v876 = vld [vmem:[%s830] sm:$0xf]
      %v877 = vld [vmem:[%s830 + $0x4] sm:$0x1]
      %v878 = vld [vmem:[%s830 + $0x8] sm:$0xf]
      %v879 = vld [vmem:[%s830 + $0xc] sm:$0x1]
      %v880 = vld [vmem:[%s830 + $0x10] sm:$0xf]
      %v881 = vld [vmem:[%s830 + $0x14] sm:$0x1]
      %v882 = vld [vmem:[%s830 + $0x18] sm:$0xf]
      %v883 = vld [vmem:[%s830 + $0x1c] sm:$0x1]
      %v884 = vld [vmem:[%s830 + $0x20] sm:$0xf]
      %v885 = vld [vmem:[%s830 + $0x24] sm:$0x1]
      %v886 = vld [vmem:[%s830 + $0x28] sm:$0xf]
      %v887 = vld [vmem:[%s830 + $0x2c] sm:$0x1]
      %v888 = vld [vmem:[%s830 + $0x30] sm:$0xf]
      %v889 = vld [vmem:[%s830 + $0x34] sm:$0x1]
      %v890 = vld [vmem:[%s830 + $0x38] sm:$0xf]
      %v891 = vld [vmem:[%s830 + $0x3c] sm:$0x1]
      %v893 = vshrl.u32 %v876, 16
      %v895 = vrot.slane %v893, 4
      %v896 = vshll.u32 %v876, 16
      %v898 = vrot.slane %v896, 5
      %v899 = vor.u32 %v895, %v898
      %v900 = vrot.slane %v899, 4
      %v902 = vshll.u32 %v877, 16
      %v904 = vrot.slane %v902, 5
      %v905 = vsel %vm296, %v900, %v904
      %v907 = vshrl.u32 %v878, 16
      %v909 = vrot.slane %v907, 4
      %v910 = vshll.u32 %v878, 16
      %v912 = vrot.slane %v910, 5
      %v913 = vor.u32 %v909, %v912
      %v914 = vrot.slane %v913, 4
      %v916 = vshll.u32 %v879, 16
      %v918 = vrot.slane %v916, 5
      %v919 = vsel %vm296, %v914, %v918
      %v921 = vshrl.u32 %v880, 16
      %v923 = vrot.slane %v921, 4
      %v924 = vshll.u32 %v880, 16
      %v926 = vrot.slane %v924, 5
      %v927 = vor.u32 %v923, %v926
      %v928 = vrot.slane %v927, 4
      %v930 = vshll.u32 %v881, 16
      %v932 = vrot.slane %v930, 5
      %v933 = vsel %vm296, %v928, %v932
      %v935 = vshrl.u32 %v882, 16
      %v937 = vrot.slane %v935, 4
      %v938 = vshll.u32 %v882, 16
      %v940 = vrot.slane %v938, 5
      %v941 = vor.u32 %v937, %v940
      %v942 = vrot.slane %v941, 4
      %v944 = vshll.u32 %v883, 16
      %v946 = vrot.slane %v944, 5
      %v947 = vsel %vm296, %v942, %v946
      %v949 = vshrl.u32 %v884, 16
      %v951 = vrot.slane %v949, 4
      %v952 = vshll.u32 %v884, 16
      %v954 = vrot.slane %v952, 5
      %v955 = vor.u32 %v951, %v954
      %v956 = vrot.slane %v955, 4
      %v958 = vshll.u32 %v885, 16
      %v960 = vrot.slane %v958, 5
      %v961 = vsel %vm296, %v956, %v960
      %v963 = vshrl.u32 %v886, 16
      %v965 = vrot.slane %v963, 4
      %v966 = vshll.u32 %v886, 16
      %v968 = vrot.slane %v966, 5
      %v969 = vor.u32 %v965, %v968
      %v970 = vrot.slane %v969, 4
      %v972 = vshll.u32 %v887, 16
      %v974 = vrot.slane %v972, 5
      %v975 = vsel %vm296, %v970, %v974
      %v977 = vshrl.u32 %v888, 16
      %v979 = vrot.slane %v977, 4
      %v980 = vshll.u32 %v888, 16
      %v982 = vrot.slane %v980, 5
      %v983 = vor.u32 %v979, %v982
      %v984 = vrot.slane %v983, 4
      %v986 = vshll.u32 %v889, 16
      %v988 = vrot.slane %v986, 5
      %v989 = vsel %vm296, %v984, %v988
      %v991 = vshrl.u32 %v890, 16
      %v993 = vrot.slane %v991, 4
      %v994 = vshll.u32 %v890, 16
      %v996 = vrot.slane %v994, 5
      %v997 = vor.u32 %v993, %v996
      %v998 = vrot.slane %v997, 4
      %v1000 = vshll.u32 %v891, 16
      %v1002 = vrot.slane %v1000, 5
      %v1003 = vsel %vm296, %v998, %v1002
      %v1004 = vunpack.c.l.b16 %v905
      %v1005 = vunpack.c.l.b16 %v919
      %v1006 = vunpack.c.l.b16 %v933
      %v1007 = vunpack.c.l.b16 %v947
      %v1008 = vunpack.c.l.b16 %v961
      %v1009 = vunpack.c.l.b16 %v975
      %v1010 = vunpack.c.l.b16 %v989
      %v1011 = vunpack.c.l.b16 %v1003
      %v1012 = vpack.c.b16 %v1005, %v1004
      %v1013 = vpack.c.b16 %v1007, %v1006
      %v1014 = vpack.c.b16 %v1009, %v1008
      %v1015 = vpack.c.b16 %v1011, %v1010
      %1016 = vrot.lane.b32.xlu0 %v1012, 56
      %v1017 = vpop.permute.xlu0 %1016
      %1018 = vrot.lane.b32.xlu0 %v1013, 56
      %v1019 = vpop.permute.xlu0 %1018
      %1020 = vrot.lane.b32.xlu0 %v1014, 56
      %v1021 = vpop.permute.xlu0 %1020
      %1022 = vrot.lane.b32.xlu0 %v1015, 56
      %v1023 = vpop.permute.xlu0 %1022
      %vm1028 = vcmask 523712
      %1029 = vst.msk [vmem:[#allocation4] sm:$0xff] %vm1028, %v1017
      %1030 = vst.msk [vmem:[#allocation4 + $0x8] sm:$0xff] %vm1028, %v1019
      %1031 = vst.msk [vmem:[#allocation4 + $0x10] sm:$0xff] %vm1028, %v1021
      %1032 = vst.msk [vmem:[#allocation4 + $0x18] sm:$0xff] %vm1028, %v1023
      %v1033 = vld [vmem:[%s830] sm:$0xe]
      %v1034 = vld [vmem:[%s830 + $0x4] sm:$0x1]
      %v1035 = vld [vmem:[%s830 + $0x8] sm:$0xe]
      %v1036 = vld [vmem:[%s830 + $0xc] sm:$0x1]
      %v1037 = vld [vmem:[%s830 + $0x10] sm:$0xe]
      %v1038 = vld [vmem:[%s830 + $0x14] sm:$0x1]
      %v1039 = vld [vmem:[%s830 + $0x18] sm:$0xe]
      %v1040 = vld [vmem:[%s830 + $0x1c] sm:$0x1]
      %v1041 = vld [vmem:[%s830 + $0x20] sm:$0xe]
      %v1042 = vld [vmem:[%s830 + $0x24] sm:$0x1]
      %v1043 = vld [vmem:[%s830 + $0x28] sm:$0xe]
      %v1044 = vld [vmem:[%s830 + $0x2c] sm:$0x1]
      %v1045 = vld [vmem:[%s830 + $0x30] sm:$0xe]
      %v1046 = vld [vmem:[%s830 + $0x34] sm:$0x1]
      %v1047 = vld [vmem:[%s830 + $0x38] sm:$0xe]
      %v1048 = vld [vmem:[%s830 + $0x3c] sm:$0x1]
      %v1065 = vrot.slane %v1033, 5
      %v1066 = vrot.slane %v1065, 4
      %v1067 = vrot.slane %v1034, 5
      %v1068 = vsel %vm472, %v1066, %v1067
      %v1069 = vrot.slane %v1035, 5
      %v1070 = vrot.slane %v1069, 4
      %v1071 = vrot.slane %v1036, 5
      %v1072 = vsel %vm472, %v1070, %v1071
      %v1073 = vrot.slane %v1037, 5
      %v1074 = vrot.slane %v1073, 4
      %v1075 = vrot.slane %v1038, 5
      %v1076 = vsel %vm472, %v1074, %v1075
      %v1077 = vrot.slane %v1039, 5
      %v1078 = vrot.slane %v1077, 4
      %v1079 = vrot.slane %v1040, 5
      %v1080 = vsel %vm472, %v1078, %v1079
      %v1081 = vrot.slane %v1041, 5
      %v1082 = vrot.slane %v1081, 4
      %v1083 = vrot.slane %v1042, 5
      %v1084 = vsel %vm472, %v1082, %v1083
      %v1085 = vrot.slane %v1043, 5
      %v1086 = vrot.slane %v1085, 4
      %v1087 = vrot.slane %v1044, 5
      %v1088 = vsel %vm472, %v1086, %v1087
      %v1089 = vrot.slane %v1045, 5
      %v1090 = vrot.slane %v1089, 4
      %v1091 = vrot.slane %v1046, 5
      %v1092 = vsel %vm472, %v1090, %v1091
      %v1093 = vrot.slane %v1047, 5
      %v1094 = vrot.slane %v1093, 4
      %v1095 = vrot.slane %v1048, 5
      %v1096 = vsel %vm472, %v1094, %v1095
      %v1097 = vunpack.c.l.b16 %v1068
      %v1098 = vunpack.c.l.b16 %v1072
      %v1099 = vunpack.c.l.b16 %v1076
      %v1100 = vunpack.c.l.b16 %v1080
      %v1101 = vunpack.c.l.b16 %v1084
      %v1102 = vunpack.c.l.b16 %v1088
      %v1103 = vunpack.c.l.b16 %v1092
      %v1104 = vunpack.c.l.b16 %v1096
      %v1105 = vpack.c.b16 %v1098, %v1097
      %v1106 = vpack.c.b16 %v1100, %v1099
      %v1107 = vpack.c.b16 %v1102, %v1101
      %v1108 = vpack.c.b16 %v1104, %v1103
      %1109 = vrot.lane.b32.xlu0 %v1105, 64
      %v1110 = vpop.permute.xlu0 %1109
      %1111 = vrot.lane.b32.xlu0 %v1106, 64
      %v1112 = vpop.permute.xlu0 %1111
      %1113 = vrot.lane.b32.xlu0 %v1107, 64
      %v1114 = vpop.permute.xlu0 %1113
      %1115 = vrot.lane.b32.xlu0 %v1108, 64
      %v1116 = vpop.permute.xlu0 %1115
      %vm1121 = vcmask 589312
      %1122 = vst.msk [vmem:[#allocation4] sm:$0xff] %vm1121, %v1110
      %1123 = vst.msk [vmem:[#allocation4 + $0x8] sm:$0xff] %vm1121, %v1112
      %1124 = vst.msk [vmem:[#allocation4 + $0x10] sm:$0xff] %vm1121, %v1114
      %1125 = vst.msk [vmem:[#allocation4 + $0x18] sm:$0xff] %vm1121, %v1116
      %v1126 = vld [vmem:[#allocation3] sm:$0xff]
      %v1127 = vld [vmem:[#allocation3 + $0x8] sm:$0xff]
      %v1128 = vld [vmem:[#allocation3 + $0x10] sm:$0xff]
      %v1129 = vld [vmem:[#allocation3 + $0x18] sm:$0xff]
      %v1130 = vld [vmem:[#allocation3 + $0x20] sm:$0xff]
      %v1131 = vld [vmem:[#allocation3 + $0x28] sm:$0xff]
      %v1132 = vld [vmem:[#allocation3 + $0x30] sm:$0xff]
      %v1133 = vld [vmem:[#allocation3 + $0x38] sm:$0xff]
      %v1134 = vld [vmem:[#allocation4] sm:$0xff]
      %v1135 = vld [vmem:[#allocation4 + $0x8] sm:$0xff]
      %v1136 = vld [vmem:[#allocation4 + $0x10] sm:$0xff]
      %v1137 = vld [vmem:[#allocation4 + $0x18] sm:$0xff]
      %v1138 = vld [vmem:[%s1] sm:$0xf]
      %v1139 = vld [vmem:[%s1 + $0x4] sm:$0xf]
      %v1140 = vld [vmem:[%s1 + $0x8] sm:$0xf]
      %v1141 = vld [vmem:[%s1 + $0xc] sm:$0xf]
      %v1142 = vld [vmem:[%s1 + $0x10] sm:$0xf]
      %v1143 = vld [vmem:[%s1 + $0x14] sm:$0xf]
      %v1144 = vld [vmem:[%s1 + $0x18] sm:$0xf]
      %v1145 = vld [vmem:[%s1 + $0x1c] sm:$0xf]
      %v1146 = vld [vmem:[%s1 + $0x20] sm:$0xf]
      %v1156 = vunpack.c.l.b16 %v1138
      %v1157 = vunpack.c.l.b16 %v1139
      %v1158 = vunpack.c.l.b16 %v1140
      %v1159 = vunpack.c.l.b16 %v1141
      %v1160 = vunpack.c.l.b16 %v1142
      %v1161 = vunpack.c.l.b16 %v1143
      %v1162 = vunpack.c.l.b16 %v1144
      %v1163 = vunpack.c.l.b16 %v1145
      %v1164 = vunpack.c.l.b16 %v1146
      %v1165 = vpack.c.b16 %v1157, %v1156
      %v1166 = vpack.c.b16 %v1159, %v1158
      %v1167 = vpack.c.b16 %v1161, %v1160
      %v1168 = vpack.c.b16 %v1163, %v1162
      %v1169 = vpack.c.b16 %v1164, %v1164
      %vm1174 = vcmask 588800
      %v1176 = vsel %vm1174, %v1134, 0
      %v1179 = vsel %vm1174, %v1135, 0
      %v1182 = vsel %vm1174, %v1136, 0
      %v1185 = vsel %vm1174, %v1137, 0
      %vm1187 = vcmask 1043456
      %v1189 = vsel %vm1187, %v1169, 0
      %1191 = vmatprep.subr.bf16.mxu0 0
      %1192 = vmatpush1.bf16.msra.mxu0 %v1165
      %1193 = vmatprep.subr.bf16.mxu0 0
      %1194 = vmatpush1.bf16.msra.mxu0 %v1166
      %1195 = vmatprep.subr.bf16.mxu0 0
      %1196 = vmatpush1.bf16.msra.mxu0 %v1167
      %1197 = vmatprep.subr.bf16.mxu0 0
      %1198 = vmatpush1.bf16.msra.mxu0 %v1168
      %1199 = vmatprep.subr.bf16.mxu0 0
      %1200 = vmatpush1.bf16.msra.mxu0 %v1189
      %1201 = vmatprep.subr.bf16.mxu0 0
      %1202 = vmatpush1.bf16.msra.mxu0 0
      %1203 = vmatprep.subr.bf16.mxu0 0
      %1204 = vmatpush1.bf16.msra.mxu0 0
      %1205 = vmatprep.subr.bf16.mxu0 0
      %1206 = vmatpush1.bf16.msra.mxu0 0
      %1207 = vmatprep.subr.bf16.mxu0 0
      %1208 = vmatpush1.bf16.msra.mxu0 0
      %1209 = vmatprep.subr.bf16.mxu0 0
      %1210 = vmatpush1.bf16.msra.mxu0 0
      %1211 = vmatprep.subr.bf16.mxu0 0
      %1212 = vmatpush1.bf16.msra.mxu0 0
      %1213 = vmatprep.subr.bf16.mxu0 0
      %1214 = vmatpush1.bf16.msra.mxu0 0
      %1215 = vmatprep.subr.bf16.mxu0 0
      %1216 = vmatpush1.bf16.msra.mxu0 0
      %1217 = vmatprep.subr.bf16.mxu0 0
      %1218 = vmatpush1.bf16.msra.mxu0 0
      %1219 = vmatprep.subr.bf16.mxu0 0
      %1220 = vmatpush1.bf16.msra.mxu0 0
      %1221 = vmatprep.subr.bf16.mxu0 0
      %1222 = vmatpush1.bf16.msra.mxu0 0
      %1223 = vmatprep.mubr.bf16.mxu0 0
      %1224 = vmatmul.mubr.bf16.gmra.mrb[0].mxu0 %v1176
      %v1225 = vpop.f32.mrb[0].mxu0
      %v1226 = vadd.f32 0.0, %v1225
      %v1227 = vpop.f32.mrb[0].mxu0
      %v1228 = vpop.f32.mrb[0].mxu0
      %v1229 = vadd.f32 0.0, %v1228
      %v1230 = vpop.f32.mrb[0].mxu0
      %1231 = vmatprep.mubr.bf16.mxu0 0
      %1232 = vmatmul.mubr.bf16.gmra.mrb[0].mxu0 %v1179
      %v1233 = vpop.f32.mrb[0].mxu0
      %v1234 = vadd.f32 0.0, %v1233
      %v1235 = vpop.f32.mrb[0].mxu0
      %v1236 = vpop.f32.mrb[0].mxu0
      %v1237 = vadd.f32 0.0, %v1236
      %v1238 = vpop.f32.mrb[0].mxu0
      %1239 = vmatprep.mubr.bf16.mxu0 0
      %1240 = vmatmul.mubr.bf16.gmra.mrb[0].mxu0 %v1182
      %v1241 = vpop.f32.mrb[0].mxu0
      %v1242 = vadd.f32 0.0, %v1241
      %v1243 = vpop.f32.mrb[0].mxu0
      %v1244 = vpop.f32.mrb[0].mxu0
      %v1245 = vadd.f32 0.0, %v1244
      %v1246 = vpop.f32.mrb[0].mxu0
      %1247 = vmatprep.mubr.bf16.mxu0 0
      %1248 = vmatmul.mubr.bf16.gmra.mrb[0].mxu0 %v1185
      %v1249 = vpop.f32.mrb[0].mxu0
      %v1250 = vadd.f32 0.0, %v1249
      %v1251 = vpop.f32.mrb[0].mxu0
      %v1252 = vpop.f32.mrb[0].mxu0
      %v1253 = vadd.f32 0.0, %v1252
      %v1254 = vpop.f32.mrb[0].mxu0
      %1255 = vdwg.mxu0
      %v1256 = vadd.f32 %v1126, %v1226
      %v1257 = vadd.f32 %v1127, %v1229
      %v1258 = vadd.f32 %v1128, %v1234
      %v1259 = vadd.f32 %v1129, %v1237
      %v1260 = vadd.f32 %v1130, %v1242
      %v1261 = vadd.f32 %v1131, %v1245
      %v1262 = vadd.f32 %v1132, %v1250
      %v1263 = vadd.f32 %v1133, %v1253
      %1264 = vst.msk [vmem:[#allocation3] sm:$0xff] %vm233, %v1256
      %1265 = vst.msk [vmem:[#allocation3 + $0x8] sm:$0xff] %vm233, %v1257
      %1266 = vst.msk [vmem:[#allocation3 + $0x10] sm:$0xff] %vm233, %v1258
      %1267 = vst.msk [vmem:[#allocation3 + $0x18] sm:$0xff] %vm233, %v1259
      %1268 = vst.msk [vmem:[#allocation3 + $0x20] sm:$0xff] %vm233, %v1260
      %1269 = vst.msk [vmem:[#allocation3 + $0x28] sm:$0xff] %vm233, %v1261
      %1270 = vst.msk [vmem:[#allocation3 + $0x30] sm:$0xff] %vm233, %v1262
      %1271 = vst.msk [vmem:[#allocation3 + $0x38] sm:$0xff] %vm233, %v1263
      %vm1272 = vcmask 60416
      %1273 = vst.msk [vmem:[#allocation2] sm:$0xf] %vm1272, 0
      %vm1274 = vcmask 57344
      %1275 = vst.msk [vmem:[#allocation2 + $0x4] sm:$0x1] %vm1274, 0
      %1276 = vst.msk [vmem:[#allocation2 + $0x8] sm:$0xf] %vm1272, 0
      %1277 = vst.msk [vmem:[#allocation2 + $0xc] sm:$0x1] %vm1274, 0
      %1278 = vst.msk [vmem:[#allocation2 + $0x10] sm:$0xf] %vm1272, 0
      %1279 = vst.msk [vmem:[#allocation2 + $0x14] sm:$0x1] %vm1274, 0
      %1280 = vst.msk [vmem:[#allocation2 + $0x18] sm:$0xf] %vm1272, 0
      %1281 = vst.msk [vmem:[#allocation2 + $0x1c] sm:$0x1] %vm1274, 0
      %1282 = vst.msk [vmem:[#allocation2 + $0x20] sm:$0xf] %vm1272, 0
      %1283 = vst.msk [vmem:[#allocation2 + $0x24] sm:$0x1] %vm1274, 0
      %1284 = vst.msk [vmem:[#allocation2 + $0x28] sm:$0xf] %vm1272, 0
      %1285 = vst.msk [vmem:[#allocation2 + $0x2c] sm:$0x1] %vm1274, 0
      %1286 = vst.msk [vmem:[#allocation2 + $0x30] sm:$0xf] %vm1272, 0
      %1287 = vst.msk [vmem:[#allocation2 + $0x34] sm:$0x1] %vm1274, 0
      %1288 = vst.msk [vmem:[#allocation2 + $0x38] sm:$0xf] %vm1272, 0
      %1289 = vst.msk [vmem:[#allocation2 + $0x3c] sm:$0x1] %vm1274, 0
      %1290 = vst.msk [vmem:[#allocation2 + $0x40] sm:$0xf] %vm1272, 0
      %1291 = vst.msk [vmem:[#allocation2 + $0x44] sm:$0x1] %vm1274, 0
      %1292 = vst.msk [vmem:[#allocation2 + $0x48] sm:$0xf] %vm1272, 0
      %1293 = vst.msk [vmem:[#allocation2 + $0x4c] sm:$0x1] %vm1274, 0
      %v1294 = vld [vmem:[#allocation3] sm:$0xff]
      %v1295 = vld [vmem:[#allocation3 + $0x8] sm:$0xff]
      %v1296 = vld [vmem:[#allocation3 + $0x10] sm:$0xff]
      %v1297 = vld [vmem:[#allocation3 + $0x18] sm:$0xff]
      %v1298 = vld [vmem:[#allocation3 + $0x20] sm:$0xff]
      %v1299 = vld [vmem:[#allocation3 + $0x28] sm:$0xff]
      %v1300 = vld [vmem:[#allocation3 + $0x30] sm:$0xff]
      %v1301 = vld [vmem:[#allocation3 + $0x38] sm:$0xff]
      %v1302 = vmul.f32 %v1294, 0.25
      %v1303 = vmul.f32 %v1295, 0.25
      %v1304 = vmul.f32 %v1296, 0.25
      %v1305 = vmul.f32 %v1297, 0.25
      %v1306 = vmul.f32 %v1298, 0.25
      %v1307 = vmul.f32 %v1299, 0.25
      %v1308 = vmul.f32 %v1300, 0.25
      %v1309 = vmul.f32 %v1301, 0.25
      %v1310 = vadd.f32 %v1302, 1.49
      %v1311 = vadd.f32 %v1303, 1.49
      %v1312 = vadd.f32 %v1304, 1.49
      %v1313 = vadd.f32 %v1305, 1.49
      %v1314 = vadd.f32 %v1306, 1.49
      %v1315 = vadd.f32 %v1307, 1.49
      %v1316 = vadd.f32 %v1308, 1.49
      %v1317 = vadd.f32 %v1309, 1.49
      %v1318 = vmul.f32 %v1294, %v1310
      %v1319 = vmul.f32 %v1295, %v1311
      %v1320 = vmul.f32 %v1296, %v1312
      %v1321 = vmul.f32 %v1297, %v1313
      %v1322 = vmul.f32 %v1298, %v1314
      %v1323 = vmul.f32 %v1299, %v1315
      %v1324 = vmul.f32 %v1300, %v1316
      %v1325 = vmul.f32 %v1301, %v1317
      %v1326 = vadd.f32 %v1318, 3.05
      %v1327 = vadd.f32 %v1319, 3.05
      %v1328 = vadd.f32 %v1320, 3.05
      %v1329 = vadd.f32 %v1321, 3.05
      %v1330 = vadd.f32 %v1322, 3.05
      %v1331 = vadd.f32 %v1323, 3.05
      %v1332 = vadd.f32 %v1324, 3.05
      %v1333 = vadd.f32 %v1325, 3.05
      %v1334 = vmul.f32 %v1294, %v1326
      %v1335 = vmul.f32 %v1295, %v1327
      %v1336 = vmul.f32 %v1296, %v1328
      %v1337 = vmul.f32 %v1297, %v1329
      %v1338 = vmul.f32 %v1298, %v1330
      %v1339 = vmul.f32 %v1299, %v1331
      %v1340 = vmul.f32 %v1300, %v1332
      %v1341 = vmul.f32 %v1301, %v1333
      %v1342 = vadd.f32 %v1334, 2.32
      %v1343 = vadd.f32 %v1335, 2.32
      %v1344 = vadd.f32 %v1336, 2.32
      %v1345 = vadd.f32 %v1337, 2.32
      %v1346 = vadd.f32 %v1338, 2.32
      %v1347 = vadd.f32 %v1339, 2.32
      %v1348 = vadd.f32 %v1340, 2.32
      %v1349 = vadd.f32 %v1341, 2.32
      %v1350 = vmul.f32 %v1294, %v1342
      %v1351 = vmul.f32 %v1295, %v1343
      %v1352 = vmul.f32 %v1296, %v1344
      %v1353 = vmul.f32 %v1297, %v1345
      %v1354 = vmul.f32 %v1298, %v1346
      %v1355 = vmul.f32 %v1299, %v1347
      %v1356 = vmul.f32 %v1300, %v1348
      %v1357 = vmul.f32 %v1301, %v1349
      %v1358 = vadd.f32 %v1350, 0.62
      %v1359 = vadd.f32 %v1351, 0.62
      %v1360 = vadd.f32 %v1352, 0.62
      %v1361 = vadd.f32 %v1353, 0.62
      %v1362 = vadd.f32 %v1354, 0.62
      %v1363 = vadd.f32 %v1355, 0.62
      %v1364 = vadd.f32 %v1356, 0.62
      %v1365 = vadd.f32 %v1357, 0.62
      %v1366 = vmul.f32 %v1294, %v1358
      %v1367 = vmul.f32 %v1295, %v1359
      %v1368 = vmul.f32 %v1296, %v1360
      %v1369 = vmul.f32 %v1297, %v1361
      %v1370 = vmul.f32 %v1298, %v1362
      %v1371 = vmul.f32 %v1299, %v1363
      %v1372 = vmul.f32 %v1300, %v1364
      %v1373 = vmul.f32 %v1301, %v1365
      %v1374 = vadd.f32 %v1366, 0.03
      %v1375 = vadd.f32 %v1367, 0.03
      %v1376 = vadd.f32 %v1368, 0.03
      %v1377 = vadd.f32 %v1369, 0.03
      %v1378 = vadd.f32 %v1370, 0.03
      %v1379 = vadd.f32 %v1371, 0.03
      %v1380 = vadd.f32 %v1372, 0.03
      %v1381 = vadd.f32 %v1373, 0.03
      %v1382 = vmul.f32 %v1294, 0.05
      %v1383 = vmul.f32 %v1295, 0.05
      %v1384 = vmul.f32 %v1296, 0.05
      %v1385 = vmul.f32 %v1297, 0.05
      %v1386 = vmul.f32 %v1298, 0.05
      %v1387 = vmul.f32 %v1299, 0.05
      %v1388 = vmul.f32 %v1300, 0.05
      %v1389 = vmul.f32 %v1301, 0.05
      %v1390 = vadd.f32 %v1382, 1.2
      %v1391 = vadd.f32 %v1383, 1.2
      %v1392 = vadd.f32 %v1384, 1.2
      %v1393 = vadd.f32 %v1385, 1.2
      %v1394 = vadd.f32 %v1386, 1.2
      %v1395 = vadd.f32 %v1387, 1.2
      %v1396 = vadd.f32 %v1388, 1.2
      %v1397 = vadd.f32 %v1389, 1.2
      %v1398 = vmul.f32 %v1294, %v1390
      %v1399 = vmul.f32 %v1295, %v1391
      %v1400 = vmul.f32 %v1296, %v1392
      %v1401 = vmul.f32 %v1297, %v1393
      %v1402 = vmul.f32 %v1298, %v1394
      %v1403 = vmul.f32 %v1299, %v1395
      %v1404 = vmul.f32 %v1300, %v1396
      %v1405 = vmul.f32 %v1301, %v1397
      %v1406 = vadd.f32 %v1398, 0.25
      %v1407 = vadd.f32 %v1399, 0.25
      %v1408 = vadd.f32 %v1400, 0.25
      %v1409 = vadd.f32 %v1401, 0.25
      %v1410 = vadd.f32 %v1402, 0.25
      %v1411 = vadd.f32 %v1403, 0.25
      %v1412 = vadd.f32 %v1404, 0.25
      %v1413 = vadd.f32 %v1405, 0.25
      %v1414 = vmul.f32 %v1294, %v1406
      %v1415 = vmul.f32 %v1295, %v1407
      %v1416 = vmul.f32 %v1296, %v1408
      %v1417 = vmul.f32 %v1297, %v1409
      %v1418 = vmul.f32 %v1298, %v1410
      %v1419 = vmul.f32 %v1299, %v1411
      %v1420 = vmul.f32 %v1300, %v1412
      %v1421 = vmul.f32 %v1301, %v1413
      %v1422 = vadd.f32 %v1414, 2.4
      %v1423 = vadd.f32 %v1415, 2.4
      %v1424 = vadd.f32 %v1416, 2.4
      %v1425 = vadd.f32 %v1417, 2.4
      %v1426 = vadd.f32 %v1418, 2.4
      %v1427 = vadd.f32 %v1419, 2.4
      %v1428 = vadd.f32 %v1420, 2.4
      %v1429 = vadd.f32 %v1421, 2.4
      %v1430 = vmul.f32 %v1294, %v1422
      %v1431 = vmul.f32 %v1295, %v1423
      %v1432 = vmul.f32 %v1296, %v1424
      %v1433 = vmul.f32 %v1297, %v1425
      %v1434 = vmul.f32 %v1298, %v1426
      %v1435 = vmul.f32 %v1299, %v1427
      %v1436 = vmul.f32 %v1300, %v1428
      %v1437 = vmul.f32 %v1301, %v1429
      %v1438 = vand.u32 2147483647, %v1430
      %v1439 = vand.u32 2147483647, %v1431
      %v1440 = vand.u32 2147483647, %v1432
      %v1441 = vand.u32 2147483647, %v1433
      %v1442 = vand.u32 2147483647, %v1434
      %v1443 = vand.u32 2147483647, %v1435
      %v1444 = vand.u32 2147483647, %v1436
      %v1445 = vand.u32 2147483647, %v1437
      %v1446 = vadd.f32 %v1438, 1.0
      %v1447 = vadd.f32 %v1439, 1.0
      %v1448 = vadd.f32 %v1440, 1.0
      %v1449 = vadd.f32 %v1441, 1.0
      %v1450 = vadd.f32 %v1442, 1.0
      %v1451 = vadd.f32 %v1443, 1.0
      %v1452 = vadd.f32 %v1444, 1.0
      %v1453 = vadd.f32 %v1445, 1.0
      %v1454 = vrcp.pop %v1446
      %v1455 = vrcp.pop %v1447
      %v1456 = vrcp.pop %v1448
      %v1457 = vrcp.pop %v1449
      %v1458 = vrcp.pop %v1450
      %v1459 = vrcp.pop %v1451
      %v1460 = vrcp.pop %v1452
      %v1461 = vrcp.pop %v1453
      %v1462 = vmul.f32 %v1374, %v1454
      %v1463 = vmul.f32 %v1375, %v1455
      %v1464 = vmul.f32 %v1376, %v1456
      %v1465 = vmul.f32 %v1377, %v1457
      %v1466 = vmul.f32 %v1378, %v1458
      %v1467 = vmul.f32 %v1379, %v1459
      %v1468 = vmul.f32 %v1380, %v1460
      %v1469 = vmul.f32 %v1381, %v1461
      %v1470 = vpack.c.bf16 %v1463, %v1462
      %v1471 = vpack.c.bf16 %v1465, %v1464
      %v1472 = vpack.c.bf16 %v1467, %v1466
      %v1473 = vpack.c.bf16 %v1469, %v1468
      %v1478 = vunpack.c.l.b16 %v1470
      %v1479 = vunpack.c.h.b16 %v1470
      %v1480 = vunpack.c.l.b16 %v1471
      %v1481 = vunpack.c.h.b16 %v1471
      %v1482 = vunpack.c.l.b16 %v1472
      %v1483 = vunpack.c.h.b16 %v1472
      %v1484 = vunpack.c.l.b16 %v1473
      %v1485 = vunpack.c.h.b16 %v1473
      %v1486 = vpack.c.b16 %v1478, %v1478
      %v1487 = vpack.c.b16 %v1479, %v1479
      %v1488 = vpack.c.b16 %v1480, %v1480
      %v1489 = vpack.c.b16 %v1481, %v1481
      %v1490 = vpack.c.b16 %v1482, %v1482
      %v1491 = vpack.c.b16 %v1483, %v1483
      %v1492 = vpack.c.b16 %v1484, %v1484
      %v1493 = vpack.c.b16 %v1485, %v1485
      %v1495 = vshrl.u32 %v1486, 16
      %v1497 = vrot.slane %v1495, 7
      %v1498 = vshll.u32 %v1486, 16
      %v1500 = vor.u32 %v1497, %v1498
      %v1501 = vrot.slane %v1497, 4
      %v1503 = vshrl.u32 %v1487, 16
      %v1505 = vrot.slane %v1503, 7
      %v1506 = vshll.u32 %v1487, 16
      %v1508 = vor.u32 %v1505, %v1506
      %v1509 = vrot.slane %v1505, 4
      %v1511 = vshrl.u32 %v1488, 16
      %v1513 = vrot.slane %v1511, 7
      %v1514 = vshll.u32 %v1488, 16
      %v1516 = vor.u32 %v1513, %v1514
      %v1517 = vrot.slane %v1513, 4
      %v1519 = vshrl.u32 %v1489, 16
      %v1521 = vrot.slane %v1519, 7
      %v1522 = vshll.u32 %v1489, 16
      %v1524 = vor.u32 %v1521, %v1522
      %v1525 = vrot.slane %v1521, 4
      %v1527 = vshrl.u32 %v1490, 16
      %v1529 = vrot.slane %v1527, 7
      %v1530 = vshll.u32 %v1490, 16
      %v1532 = vor.u32 %v1529, %v1530
      %v1533 = vrot.slane %v1529, 4
      %v1535 = vshrl.u32 %v1491, 16
      %v1537 = vrot.slane %v1535, 7
      %v1538 = vshll.u32 %v1491, 16
      %v1540 = vor.u32 %v1537, %v1538
      %v1541 = vrot.slane %v1537, 4
      %v1543 = vshrl.u32 %v1492, 16
      %v1545 = vrot.slane %v1543, 7
      %v1546 = vshll.u32 %v1492, 16
      %v1548 = vor.u32 %v1545, %v1546
      %v1549 = vrot.slane %v1545, 4
      %v1551 = vshrl.u32 %v1493, 16
      %v1553 = vrot.slane %v1551, 7
      %v1554 = vshll.u32 %v1493, 16
      %v1556 = vor.u32 %v1553, %v1554
      %v1557 = vrot.slane %v1553, 4
      %s1574 = scalar_lea.vmem [#allocation2], 8
      %vm1575 = vcmask 60416
      %vm1576 = vsmask.f32 7938
      %vm1577 = vmand %vm1575, %vm1576
      %v1578 = vld [vmem:[%s1574] sm:$0xf]
      %v1579 = vsel %vm1577, %v1500, %v1578
      %1580 = vst [vmem:[%s1574] sm:$0xf] %v1579
      %vm1581 = vcmask 57344
      %vm1582 = vsmask.f32 256
      %vm1583 = vmand %vm1581, %vm1582
      %v1584 = vld [vmem:[%s1574 + $0x4] sm:$0x1]
      %v1585 = vsel %vm1583, %v1501, %v1584
      %1586 = vst [vmem:[%s1574 + $0x4] sm:$0x1] %v1585
      %v1587 = vld [vmem:[%s1574 + $0x8] sm:$0xf]
      %v1588 = vsel %vm1577, %v1508, %v1587
      %1589 = vst [vmem:[%s1574 + $0x8] sm:$0xf] %v1588
      %v1590 = vld [vmem:[%s1574 + $0xc] sm:$0x1]
      %v1591 = vsel %vm1583, %v1509, %v1590
      %1592 = vst [vmem:[%s1574 + $0xc] sm:$0x1] %v1591
      %v1593 = vld [vmem:[%s1574 + $0x10] sm:$0xf]
      %v1594 = vsel %vm1577, %v1516, %v1593
      %1595 = vst [vmem:[%s1574 + $0x10] sm:$0xf] %v1594
      %v1596 = vld [vmem:[%s1574 + $0x14] sm:$0x1]
      %v1597 = vsel %vm1583, %v1517, %v1596
      %1598 = vst [vmem:[%s1574 + $0x14] sm:$0x1] %v1597
      %v1599 = vld [vmem:[%s1574 + $0x18] sm:$0xf]
      %v1600 = vsel %vm1577, %v1524, %v1599
      %1601 = vst [vmem:[%s1574 + $0x18] sm:$0xf] %v1600
      %v1602 = vld [vmem:[%s1574 + $0x1c] sm:$0x1]
      %v1603 = vsel %vm1583, %v1525, %v1602
      %1604 = vst [vmem:[%s1574 + $0x1c] sm:$0x1] %v1603
      %v1605 = vld [vmem:[%s1574 + $0x20] sm:$0xf]
      %v1606 = vsel %vm1577, %v1532, %v1605
      %1607 = vst [vmem:[%s1574 + $0x20] sm:$0xf] %v1606
      %v1608 = vld [vmem:[%s1574 + $0x24] sm:$0x1]
      %v1609 = vsel %vm1583, %v1533, %v1608
      %1610 = vst [vmem:[%s1574 + $0x24] sm:$0x1] %v1609
      %v1611 = vld [vmem:[%s1574 + $0x28] sm:$0xf]
      %v1612 = vsel %vm1577, %v1540, %v1611
      %1613 = vst [vmem:[%s1574 + $0x28] sm:$0xf] %v1612
      %v1614 = vld [vmem:[%s1574 + $0x2c] sm:$0x1]
      %v1615 = vsel %vm1583, %v1541, %v1614
      %1616 = vst [vmem:[%s1574 + $0x2c] sm:$0x1] %v1615
      %v1617 = vld [vmem:[%s1574 + $0x30] sm:$0xf]
      %v1618 = vsel %vm1577, %v1548, %v1617
      %1619 = vst [vmem:[%s1574 + $0x30] sm:$0xf] %v1618
      %v1620 = vld [vmem:[%s1574 + $0x34] sm:$0x1]
      %v1621 = vsel %vm1583, %v1549, %v1620
      %1622 = vst [vmem:[%s1574 + $0x34] sm:$0x1] %v1621
      %v1623 = vld [vmem:[%s1574 + $0x38] sm:$0xf]
      %v1624 = vsel %vm1577, %v1556, %v1623
      %1625 = vst [vmem:[%s1574 + $0x38] sm:$0xf] %v1624
      %v1626 = vld [vmem:[%s1574 + $0x3c] sm:$0x1]
      %v1627 = vsel %vm1583, %v1557, %v1626
      %1628 = vst [vmem:[%s1574 + $0x3c] sm:$0x1] %v1627
      %v1629 = vld [vmem:[%s4] sm:$0x1]
      %v1631 = vlaneseq
      %v1632 = vshrl.u32 %v1631, 7
      %v1633 = vsub.s32 0, %v1632
      %v1634 = vrot.slane %v1629, %v1633
      %1636 = vst.msk [vmem:[#allocation3] sm:$0xff] %vm233, %v1634
      %1637 = vst.msk [vmem:[#allocation3 + $0x8] sm:$0xff] %vm233, %v1634
      %1638 = vst.msk [vmem:[#allocation3 + $0x10] sm:$0xff] %vm233, %v1634
      %1639 = vst.msk [vmem:[#allocation3 + $0x18] sm:$0xff] %vm233, %v1634
      %1640 = vst.msk [vmem:[#allocation3 + $0x20] sm:$0xff] %vm233, %v1634
      %1641 = vst.msk [vmem:[#allocation3 + $0x28] sm:$0xff] %vm233, %v1634
      %1642 = vst.msk [vmem:[#allocation3 + $0x30] sm:$0xff] %vm233, %v1634
      %1643 = vst.msk [vmem:[#allocation3 + $0x38] sm:$0xff] %vm233, %v1634
      %v1644 = vld [vmem:[#allocation2] sm:$0xf]
      %v1645 = vld [vmem:[#allocation2 + $0x8] sm:$0xf]
      %v1646 = vld [vmem:[#allocation2 + $0x10] sm:$0xf]
      %v1647 = vld [vmem:[#allocation2 + $0x18] sm:$0xf]
      %v1648 = vld [vmem:[#allocation2 + $0x20] sm:$0xf]
      %v1649 = vld [vmem:[#allocation2 + $0x28] sm:$0xf]
      %v1650 = vld [vmem:[#allocation2 + $0x30] sm:$0xf]
      %v1651 = vld [vmem:[#allocation2 + $0x38] sm:$0xf]
      %v1660 = vunpack.c.l.b16 %v1644
      %v1661 = vunpack.c.l.b16 %v1645
      %v1662 = vunpack.c.l.b16 %v1646
      %v1663 = vunpack.c.l.b16 %v1647
      %v1664 = vunpack.c.l.b16 %v1648
      %v1665 = vunpack.c.l.b16 %v1649
      %v1666 = vunpack.c.l.b16 %v1650
      %v1667 = vunpack.c.l.b16 %v1651
      %v1668 = vpack.c.b16 %v1661, %v1660
      %v1669 = vpack.c.b16 %v1663, %v1662
      %v1670 = vpack.c.b16 %v1665, %v1664
      %v1671 = vpack.c.b16 %v1667, %v1666
      %1676 = vst.msk [vmem:[#allocation4] sm:$0xff] %vm233, %v1668
      %1677 = vst.msk [vmem:[#allocation4 + $0x8] sm:$0xff] %vm233, %v1669
      %1678 = vst.msk [vmem:[#allocation4 + $0x10] sm:$0xff] %vm233, %v1670
      %1679 = vst.msk [vmem:[#allocation4 + $0x18] sm:$0xff] %vm233, %v1671
      %v1680 = vld [vmem:[#allocation2] sm:$0xf]
      %v1681 = vld [vmem:[#allocation2 + $0x4] sm:$0x1]
      %v1682 = vld [vmem:[#allocation2 + $0x8] sm:$0xf]
      %v1683 = vld [vmem:[#allocation2 + $0xc] sm:$0x1]
      %v1684 = vld [vmem:[#allocation2 + $0x10] sm:$0xf]
      %v1685 = vld [vmem:[#allocation2 + $0x14] sm:$0x1]
      %v1686 = vld [vmem:[#allocation2 + $0x18] sm:$0xf]
      %v1687 = vld [vmem:[#allocation2 + $0x1c] sm:$0x1]
      %v1688 = vld [vmem:[#allocation2 + $0x20] sm:$0xf]
      %v1689 = vld [vmem:[#allocation2 + $0x24] sm:$0x1]
      %v1690 = vld [vmem:[#allocation2 + $0x28] sm:$0xf]
      %v1691 = vld [vmem:[#allocation2 + $0x2c] sm:$0x1]
      %v1692 = vld [vmem:[#allocation2 + $0x30] sm:$0xf]
      %v1693 = vld [vmem:[#allocation2 + $0x34] sm:$0x1]
      %v1694 = vld [vmem:[#allocation2 + $0x38] sm:$0xf]
      %v1695 = vld [vmem:[#allocation2 + $0x3c] sm:$0x1]
      %v1697 = vshrl.u32 %v1680, 16
      %v1699 = vrot.slane %v1697, 4
      %v1700 = vshll.u32 %v1680, 16
      %v1702 = vrot.slane %v1700, 5
      %v1703 = vor.u32 %v1699, %v1702
      %v1704 = vrot.slane %v1703, 4
      %v1706 = vshll.u32 %v1681, 16
      %v1708 = vrot.slane %v1706, 5
      %v1709 = vsel %vm296, %v1704, %v1708
      %v1711 = vshrl.u32 %v1682, 16
      %v1713 = vrot.slane %v1711, 4
      %v1714 = vshll.u32 %v1682, 16
      %v1716 = vrot.slane %v1714, 5
      %v1717 = vor.u32 %v1713, %v1716
      %v1718 = vrot.slane %v1717, 4
      %v1720 = vshll.u32 %v1683, 16
      %v1722 = vrot.slane %v1720, 5
      %v1723 = vsel %vm296, %v1718, %v1722
      %v1725 = vshrl.u32 %v1684, 16
      %v1727 = vrot.slane %v1725, 4
      %v1728 = vshll.u32 %v1684, 16
      %v1730 = vrot.slane %v1728, 5
      %v1731 = vor.u32 %v1727, %v1730
      %v1732 = vrot.slane %v1731, 4
      %v1734 = vshll.u32 %v1685, 16
      %v1736 = vrot.slane %v1734, 5
      %v1737 = vsel %vm296, %v1732, %v1736
      %v1739 = vshrl.u32 %v1686, 16
      %v1741 = vrot.slane %v1739, 4
      %v1742 = vshll.u32 %v1686, 16
      %v1744 = vrot.slane %v1742, 5
      %v1745 = vor.u32 %v1741, %v1744
      %v1746 = vrot.slane %v1745, 4
      %v1748 = vshll.u32 %v1687, 16
      %v1750 = vrot.slane %v1748, 5
      %v1751 = vsel %vm296, %v1746, %v1750
      %v1753 = vshrl.u32 %v1688, 16
      %v1755 = vrot.slane %v1753, 4
      %v1756 = vshll.u32 %v1688, 16
      %v1758 = vrot.slane %v1756, 5
      %v1759 = vor.u32 %v1755, %v1758
      %v1760 = vrot.slane %v1759, 4
      %v1762 = vshll.u32 %v1689, 16
      %v1764 = vrot.slane %v1762, 5
      %v1765 = vsel %vm296, %v1760, %v1764
      %v1767 = vshrl.u32 %v1690, 16
      %v1769 = vrot.slane %v1767, 4
      %v1770 = vshll.u32 %v1690, 16
      %v1772 = vrot.slane %v1770, 5
      %v1773 = vor.u32 %v1769, %v1772
      %v1774 = vrot.slane %v1773, 4
      %v1776 = vshll.u32 %v1691, 16
      %v1778 = vrot.slane %v1776, 5
      %v1779 = vsel %vm296, %v1774, %v1778
      %v1781 = vshrl.u32 %v1692, 16
      %v1783 = vrot.slane %v1781, 4
      %v1784 = vshll.u32 %v1692, 16
      %v1786 = vrot.slane %v1784, 5
      %v1787 = vor.u32 %v1783, %v1786
      %v1788 = vrot.slane %v1787, 4
      %v1790 = vshll.u32 %v1693, 16
      %v1792 = vrot.slane %v1790, 5
      %v1793 = vsel %vm296, %v1788, %v1792
      %v1795 = vshrl.u32 %v1694, 16
      %v1797 = vrot.slane %v1795, 4
      %v1798 = vshll.u32 %v1694, 16
      %v1800 = vrot.slane %v1798, 5
      %v1801 = vor.u32 %v1797, %v1800
      %v1802 = vrot.slane %v1801, 4
      %v1804 = vshll.u32 %v1695, 16
      %v1806 = vrot.slane %v1804, 5
      %v1807 = vsel %vm296, %v1802, %v1806
      %v1808 = vunpack.c.l.b16 %v1709
      %v1809 = vunpack.c.l.b16 %v1723
      %v1810 = vunpack.c.l.b16 %v1737
      %v1811 = vunpack.c.l.b16 %v1751
      %v1812 = vunpack.c.l.b16 %v1765
      %v1813 = vunpack.c.l.b16 %v1779
      %v1814 = vunpack.c.l.b16 %v1793
      %v1815 = vunpack.c.l.b16 %v1807
      %v1816 = vpack.c.b16 %v1809, %v1808
      %v1817 = vpack.c.b16 %v1811, %v1810
      %v1818 = vpack.c.b16 %v1813, %v1812
      %v1819 = vpack.c.b16 %v1815, %v1814
      %1820 = vrot.lane.b32.xlu0 %v1816, 8
      %v1821 = vpop.permute.xlu0 %1820
      %1822 = vrot.lane.b32.xlu0 %v1817, 8
      %v1823 = vpop.permute.xlu0 %1822
      %1824 = vrot.lane.b32.xlu0 %v1818, 8
      %v1825 = vpop.permute.xlu0 %1824
      %1826 = vrot.lane.b32.xlu0 %v1819, 8
      %v1827 = vpop.permute.xlu0 %1826
      %1832 = vst.msk [vmem:[#allocation4] sm:$0xff] %vm433, %v1821
      %1833 = vst.msk [vmem:[#allocation4 + $0x8] sm:$0xff] %vm433, %v1823
      %1834 = vst.msk [vmem:[#allocation4 + $0x10] sm:$0xff] %vm433, %v1825
      %1835 = vst.msk [vmem:[#allocation4 + $0x18] sm:$0xff] %vm433, %v1827
      %v1836 = vld [vmem:[#allocation2] sm:$0xe]
      %v1837 = vld [vmem:[#allocation2 + $0x4] sm:$0x1]
      %v1838 = vld [vmem:[#allocation2 + $0x8] sm:$0xe]
      %v1839 = vld [vmem:[#allocation2 + $0xc] sm:$0x1]
      %v1840 = vld [vmem:[#allocation2 + $0x10] sm:$0xe]
      %v1841 = vld [vmem:[#allocation2 + $0x14] sm:$0x1]
      %v1842 = vld [vmem:[#allocation2 + $0x18] sm:$0xe]
      %v1843 = vld [vmem:[#allocation2 + $0x1c] sm:$0x1]
      %v1844 = vld [vmem:[#allocation2 + $0x20] sm:$0xe]
      %v1845 = vld [vmem:[#allocation2 + $0x24] sm:$0x1]
      %v1846 = vld [vmem:[#allocation2 + $0x28] sm:$0xe]
      %v1847 = vld [vmem:[#allocation2 + $0x2c] sm:$0x1]
      %v1848 = vld [vmem:[#allocation2 + $0x30] sm:$0xe]
      %v1849 = vld [vmem:[#allocation2 + $0x34] sm:$0x1]
      %v1850 = vld [vmem:[#allocation2 + $0x38] sm:$0xe]
      %v1851 = vld [vmem:[#allocation2 + $0x3c] sm:$0x1]
      %v1868 = vrot.slane %v1836, 5
      %v1869 = vrot.slane %v1868, 4
      %v1870 = vrot.slane %v1837, 5
      %v1871 = vsel %vm472, %v1869, %v1870
      %v1872 = vrot.slane %v1838, 5
      %v1873 = vrot.slane %v1872, 4
      %v1874 = vrot.slane %v1839, 5
      %v1875 = vsel %vm472, %v1873, %v1874
      %v1876 = vrot.slane %v1840, 5
      %v1877 = vrot.slane %v1876, 4
      %v1878 = vrot.slane %v1841, 5
      %v1879 = vsel %vm472, %v1877, %v1878
      %v1880 = vrot.slane %v1842, 5
      %v1881 = vrot.slane %v1880, 4
      %v1882 = vrot.slane %v1843, 5
      %v1883 = vsel %vm472, %v1881, %v1882
      %v1884 = vrot.slane %v1844, 5
      %v1885 = vrot.slane %v1884, 4
      %v1886 = vrot.slane %v1845, 5
      %v1887 = vsel %vm472, %v1885, %v1886
      %v1888 = vrot.slane %v1846, 5
      %v1889 = vrot.slane %v1888, 4
      %v1890 = vrot.slane %v1847, 5
      %v1891 = vsel %vm472, %v1889, %v1890
      %v1892 = vrot.slane %v1848, 5
      %v1893 = vrot.slane %v1892, 4
      %v1894 = vrot.slane %v1849, 5
      %v1895 = vsel %vm472, %v1893, %v1894
      %v1896 = vrot.slane %v1850, 5
      %v1897 = vrot.slane %v1896, 4
      %v1898 = vrot.slane %v1851, 5
      %v1899 = vsel %vm472, %v1897, %v1898
      %v1900 = vunpack.c.l.b16 %v1871
      %v1901 = vunpack.c.l.b16 %v1875
      %v1902 = vunpack.c.l.b16 %v1879
      %v1903 = vunpack.c.l.b16 %v1883
      %v1904 = vunpack.c.l.b16 %v1887
      %v1905 = vunpack.c.l.b16 %v1891
      %v1906 = vunpack.c.l.b16 %v1895
      %v1907 = vunpack.c.l.b16 %v1899
      %v1908 = vpack.c.b16 %v1901, %v1900
      %v1909 = vpack.c.b16 %v1903, %v1902
      %v1910 = vpack.c.b16 %v1905, %v1904
      %v1911 = vpack.c.b16 %v1907, %v1906
      %1912 = vrot.lane.b32.xlu0 %v1908, 16
      %v1913 = vpop.permute.xlu0 %1912
      %1914 = vrot.lane.b32.xlu0 %v1909, 16
      %v1915 = vpop.permute.xlu0 %1914
      %1916 = vrot.lane.b32.xlu0 %v1910, 16
      %v1917 = vpop.permute.xlu0 %1916
      %1918 = vrot.lane.b32.xlu0 %v1911, 16
      %v1919 = vpop.permute.xlu0 %1918
      %1924 = vst.msk [vmem:[#allocation4] sm:$0xff] %vm529, %v1913
      %1925 = vst.msk [vmem:[#allocation4 + $0x8] sm:$0xff] %vm529, %v1915
      %1926 = vst.msk [vmem:[#allocation4 + $0x10] sm:$0xff] %vm529, %v1917
      %1927 = vst.msk [vmem:[#allocation4 + $0x18] sm:$0xff] %vm529, %v1919
      %v1928 = vld [vmem:[%s1574] sm:$0xf]
      %v1929 = vld [vmem:[%s1574 + $0x8] sm:$0xf]
      %v1930 = vld [vmem:[%s1574 + $0x10] sm:$0xf]
      %v1931 = vld [vmem:[%s1574 + $0x18] sm:$0xf]
      %v1932 = vld [vmem:[%s1574 + $0x20] sm:$0xf]
      %v1933 = vld [vmem:[%s1574 + $0x28] sm:$0xf]
      %v1934 = vld [vmem:[%s1574 + $0x30] sm:$0xf]
      %v1935 = vld [vmem:[%s1574 + $0x38] sm:$0xf]
      %v1944 = vunpack.c.l.b16 %v1928
      %v1945 = vunpack.c.l.b16 %v1929
      %v1946 = vunpack.c.l.b16 %v1930
      %v1947 = vunpack.c.l.b16 %v1931
      %v1948 = vunpack.c.l.b16 %v1932
      %v1949 = vunpack.c.l.b16 %v1933
      %v1950 = vunpack.c.l.b16 %v1934
      %v1951 = vunpack.c.l.b16 %v1935
      %v1952 = vpack.c.b16 %v1945, %v1944
      %v1953 = vpack.c.b16 %v1947, %v1946
      %v1954 = vpack.c.b16 %v1949, %v1948
      %v1955 = vpack.c.b16 %v1951, %v1950
      %1956 = vrot.lane.b32.xlu0 %v1952, 24
      %v1957 = vpop.permute.xlu0 %1956
      %1958 = vrot.lane.b32.xlu0 %v1953, 24
      %v1959 = vpop.permute.xlu0 %1958
      %1960 = vrot.lane.b32.xlu0 %v1954, 24
      %v1961 = vpop.permute.xlu0 %1960
      %1962 = vrot.lane.b32.xlu0 %v1955, 24
      %v1963 = vpop.permute.xlu0 %1962
      %1968 = vst.msk [vmem:[#allocation4] sm:$0xff] %vm575, %v1957
      %1969 = vst.msk [vmem:[#allocation4 + $0x8] sm:$0xff] %vm575, %v1959
      %1970 = vst.msk [vmem:[#allocation4 + $0x10] sm:$0xff] %vm575, %v1961
      %1971 = vst.msk [vmem:[#allocation4 + $0x18] sm:$0xff] %vm575, %v1963
      %v1972 = vld [vmem:[%s1574] sm:$0xf]
      %v1973 = vld [vmem:[%s1574 + $0x4] sm:$0x1]
      %v1974 = vld [vmem:[%s1574 + $0x8] sm:$0xf]
      %v1975 = vld [vmem:[%s1574 + $0xc] sm:$0x1]
      %v1976 = vld [vmem:[%s1574 + $0x10] sm:$0xf]
      %v1977 = vld [vmem:[%s1574 + $0x14] sm:$0x1]
      %v1978 = vld [vmem:[%s1574 + $0x18] sm:$0xf]
      %v1979 = vld [vmem:[%s1574 + $0x1c] sm:$0x1]
      %v1980 = vld [vmem:[%s1574 + $0x20] sm:$0xf]
      %v1981 = vld [vmem:[%s1574 + $0x24] sm:$0x1]
      %v1982 = vld [vmem:[%s1574 + $0x28] sm:$0xf]
      %v1983 = vld [vmem:[%s1574 + $0x2c] sm:$0x1]
      %v1984 = vld [vmem:[%s1574 + $0x30] sm:$0xf]
      %v1985 = vld [vmem:[%s1574 + $0x34] sm:$0x1]
      %v1986 = vld [vmem:[%s1574 + $0x38] sm:$0xf]
      %v1987 = vld [vmem:[%s1574 + $0x3c] sm:$0x1]
      %v1989 = vshrl.u32 %v1972, 16
      %v1991 = vrot.slane %v1989, 4
      %v1992 = vshll.u32 %v1972, 16
      %v1994 = vrot.slane %v1992, 5
      %v1995 = vor.u32 %v1991, %v1994
      %v1996 = vrot.slane %v1995, 4
      %v1998 = vshll.u32 %v1973, 16
      %v2000 = vrot.slane %v1998, 5
      %v2001 = vsel %vm296, %v1996, %v2000
      %v2003 = vshrl.u32 %v1974, 16
      %v2005 = vrot.slane %v2003, 4
      %v2006 = vshll.u32 %v1974, 16
      %v2008 = vrot.slane %v2006, 5
      %v2009 = vor.u32 %v2005, %v2008
      %v2010 = vrot.slane %v2009, 4
      %v2012 = vshll.u32 %v1975, 16
      %v2014 = vrot.slane %v2012, 5
      %v2015 = vsel %vm296, %v2010, %v2014
      %v2017 = vshrl.u32 %v1976, 16
      %v2019 = vrot.slane %v2017, 4
      %v2020 = vshll.u32 %v1976, 16
      %v2022 = vrot.slane %v2020, 5
      %v2023 = vor.u32 %v2019, %v2022
      %v2024 = vrot.slane %v2023, 4
      %v2026 = vshll.u32 %v1977, 16
      %v2028 = vrot.slane %v2026, 5
      %v2029 = vsel %vm296, %v2024, %v2028
      %v2031 = vshrl.u32 %v1978, 16
      %v2033 = vrot.slane %v2031, 4
      %v2034 = vshll.u32 %v1978, 16
      %v2036 = vrot.slane %v2034, 5
      %v2037 = vor.u32 %v2033, %v2036
      %v2038 = vrot.slane %v2037, 4
      %v2040 = vshll.u32 %v1979, 16
      %v2042 = vrot.slane %v2040, 5
      %v2043 = vsel %vm296, %v2038, %v2042
      %v2045 = vshrl.u32 %v1980, 16
      %v2047 = vrot.slane %v2045, 4
      %v2048 = vshll.u32 %v1980, 16
      %v2050 = vrot.slane %v2048, 5
      %v2051 = vor.u32 %v2047, %v2050
      %v2052 = vrot.slane %v2051, 4
      %v2054 = vshll.u32 %v1981, 16
      %v2056 = vrot.slane %v2054, 5
      %v2057 = vsel %vm296, %v2052, %v2056
      %v2059 = vshrl.u32 %v1982, 16
      %v2061 = vrot.slane %v2059, 4
      %v2062 = vshll.u32 %v1982, 16
      %v2064 = vrot.slane %v2062, 5
      %v2065 = vor.u32 %v2061, %v2064
      %v2066 = vrot.slane %v2065, 4
      %v2068 = vshll.u32 %v1983, 16
      %v2070 = vrot.slane %v2068, 5
      %v2071 = vsel %vm296, %v2066, %v2070
      %v2073 = vshrl.u32 %v1984, 16
      %v2075 = vrot.slane %v2073, 4
      %v2076 = vshll.u32 %v1984, 16
      %v2078 = vrot.slane %v2076, 5
      %v2079 = vor.u32 %v2075, %v2078
      %v2080 = vrot.slane %v2079, 4
      %v2082 = vshll.u32 %v1985, 16
      %v2084 = vrot.slane %v2082, 5
      %v2085 = vsel %vm296, %v2080, %v2084
      %v2087 = vshrl.u32 %v1986, 16
      %v2089 = vrot.slane %v2087, 4
      %v2090 = vshll.u32 %v1986, 16
      %v2092 = vrot.slane %v2090, 5
      %v2093 = vor.u32 %v2089, %v2092
      %v2094 = vrot.slane %v2093, 4
      %v2096 = vshll.u32 %v1987, 16
      %v2098 = vrot.slane %v2096, 5
      %v2099 = vsel %vm296, %v2094, %v2098
      %v2100 = vunpack.c.l.b16 %v2001
      %v2101 = vunpack.c.l.b16 %v2015
      %v2102 = vunpack.c.l.b16 %v2029
      %v2103 = vunpack.c.l.b16 %v2043
      %v2104 = vunpack.c.l.b16 %v2057
      %v2105 = vunpack.c.l.b16 %v2071
      %v2106 = vunpack.c.l.b16 %v2085
      %v2107 = vunpack.c.l.b16 %v2099
      %v2108 = vpack.c.b16 %v2101, %v2100
      %v2109 = vpack.c.b16 %v2103, %v2102
      %v2110 = vpack.c.b16 %v2105, %v2104
      %v2111 = vpack.c.b16 %v2107, %v2106
      %2112 = vrot.lane.b32.xlu0 %v2108, 32
      %v2113 = vpop.permute.xlu0 %2112
      %2114 = vrot.lane.b32.xlu0 %v2109, 32
      %v2115 = vpop.permute.xlu0 %2114
      %2116 = vrot.lane.b32.xlu0 %v2110, 32
      %v2117 = vpop.permute.xlu0 %2116
      %2118 = vrot.lane.b32.xlu0 %v2111, 32
      %v2119 = vpop.permute.xlu0 %2118
      %2124 = vst.msk [vmem:[#allocation4] sm:$0xff] %vm732, %v2113
      %2125 = vst.msk [vmem:[#allocation4 + $0x8] sm:$0xff] %vm732, %v2115
      %2126 = vst.msk [vmem:[#allocation4 + $0x10] sm:$0xff] %vm732, %v2117
      %2127 = vst.msk [vmem:[#allocation4 + $0x18] sm:$0xff] %vm732, %v2119
      %v2128 = vld [vmem:[%s1574] sm:$0xe]
      %v2129 = vld [vmem:[%s1574 + $0x4] sm:$0x1]
      %v2130 = vld [vmem:[%s1574 + $0x8] sm:$0xe]
      %v2131 = vld [vmem:[%s1574 + $0xc] sm:$0x1]
      %v2132 = vld [vmem:[%s1574 + $0x10] sm:$0xe]
      %v2133 = vld [vmem:[%s1574 + $0x14] sm:$0x1]
      %v2134 = vld [vmem:[%s1574 + $0x18] sm:$0xe]
      %v2135 = vld [vmem:[%s1574 + $0x1c] sm:$0x1]
      %v2136 = vld [vmem:[%s1574 + $0x20] sm:$0xe]
      %v2137 = vld [vmem:[%s1574 + $0x24] sm:$0x1]
      %v2138 = vld [vmem:[%s1574 + $0x28] sm:$0xe]
      %v2139 = vld [vmem:[%s1574 + $0x2c] sm:$0x1]
      %v2140 = vld [vmem:[%s1574 + $0x30] sm:$0xe]
      %v2141 = vld [vmem:[%s1574 + $0x34] sm:$0x1]
      %v2142 = vld [vmem:[%s1574 + $0x38] sm:$0xe]
      %v2143 = vld [vmem:[%s1574 + $0x3c] sm:$0x1]
      %v2160 = vrot.slane %v2128, 5
      %v2161 = vrot.slane %v2160, 4
      %v2162 = vrot.slane %v2129, 5
      %v2163 = vsel %vm472, %v2161, %v2162
      %v2164 = vrot.slane %v2130, 5
      %v2165 = vrot.slane %v2164, 4
      %v2166 = vrot.slane %v2131, 5
      %v2167 = vsel %vm472, %v2165, %v2166
      %v2168 = vrot.slane %v2132, 5
      %v2169 = vrot.slane %v2168, 4
      %v2170 = vrot.slane %v2133, 5
      %v2171 = vsel %vm472, %v2169, %v2170
      %v2172 = vrot.slane %v2134, 5
      %v2173 = vrot.slane %v2172, 4
      %v2174 = vrot.slane %v2135, 5
      %v2175 = vsel %vm472, %v2173, %v2174
      %v2176 = vrot.slane %v2136, 5
      %v2177 = vrot.slane %v2176, 4
      %v2178 = vrot.slane %v2137, 5
      %v2179 = vsel %vm472, %v2177, %v2178
      %v2180 = vrot.slane %v2138, 5
      %v2181 = vrot.slane %v2180, 4
      %v2182 = vrot.slane %v2139, 5
      %v2183 = vsel %vm472, %v2181, %v2182
      %v2184 = vrot.slane %v2140, 5
      %v2185 = vrot.slane %v2184, 4
      %v2186 = vrot.slane %v2141, 5
      %v2187 = vsel %vm472, %v2185, %v2186
      %v2188 = vrot.slane %v2142, 5
      %v2189 = vrot.slane %v2188, 4
      %v2190 = vrot.slane %v2143, 5
      %v2191 = vsel %vm472, %v2189, %v2190
      %v2192 = vunpack.c.l.b16 %v2163
      %v2193 = vunpack.c.l.b16 %v2167
      %v2194 = vunpack.c.l.b16 %v2171
      %v2195 = vunpack.c.l.b16 %v2175
      %v2196 = vunpack.c.l.b16 %v2179
      %v2197 = vunpack.c.l.b16 %v2183
      %v2198 = vunpack.c.l.b16 %v2187
      %v2199 = vunpack.c.l.b16 %v2191
      %v2200 = vpack.c.b16 %v2193, %v2192
      %v2201 = vpack.c.b16 %v2195, %v2194
      %v2202 = vpack.c.b16 %v2197, %v2196
      %v2203 = vpack.c.b16 %v2199, %v2198
      %2204 = vrot.lane.b32.xlu0 %v2200, 40
      %v2205 = vpop.permute.xlu0 %2204
      %2206 = vrot.lane.b32.xlu0 %v2201, 40
      %v2207 = vpop.permute.xlu0 %2206
      %2208 = vrot.lane.b32.xlu0 %v2202, 40
      %v2209 = vpop.permute.xlu0 %2208
      %2210 = vrot.lane.b32.xlu0 %v2203, 40
      %v2211 = vpop.permute.xlu0 %2210
      %2216 = vst.msk [vmem:[#allocation4] sm:$0xff] %vm825, %v2205
      %2217 = vst.msk [vmem:[#allocation4 + $0x8] sm:$0xff] %vm825, %v2207
      %2218 = vst.msk [vmem:[#allocation4 + $0x10] sm:$0xff] %vm825, %v2209
      %2219 = vst.msk [vmem:[#allocation4 + $0x18] sm:$0xff] %vm825, %v2211
      %s2220 = scalar_lea.vmem [#allocation2], 16
      %v2221 = vld [vmem:[%s2220] sm:$0xf]
      %v2222 = vld [vmem:[%s2220 + $0x8] sm:$0xf]
      %v2223 = vld [vmem:[%s2220 + $0x10] sm:$0xf]
      %v2224 = vld [vmem:[%s2220 + $0x18] sm:$0xf]
      %v2225 = vld [vmem:[%s2220 + $0x20] sm:$0xf]
      %v2226 = vld [vmem:[%s2220 + $0x28] sm:$0xf]
      %v2227 = vld [vmem:[%s2220 + $0x30] sm:$0xf]
      %v2228 = vld [vmem:[%s2220 + $0x38] sm:$0xf]
      %v2237 = vunpack.c.l.b16 %v2221
      %v2238 = vunpack.c.l.b16 %v2222
      %v2239 = vunpack.c.l.b16 %v2223
      %v2240 = vunpack.c.l.b16 %v2224
      %v2241 = vunpack.c.l.b16 %v2225
      %v2242 = vunpack.c.l.b16 %v2226
      %v2243 = vunpack.c.l.b16 %v2227
      %v2244 = vunpack.c.l.b16 %v2228
      %v2245 = vpack.c.b16 %v2238, %v2237
      %v2246 = vpack.c.b16 %v2240, %v2239
      %v2247 = vpack.c.b16 %v2242, %v2241
      %v2248 = vpack.c.b16 %v2244, %v2243
      %2249 = vrot.lane.b32.xlu0 %v2245, 48
      %v2250 = vpop.permute.xlu0 %2249
      %2251 = vrot.lane.b32.xlu0 %v2246, 48
      %v2252 = vpop.permute.xlu0 %2251
      %2253 = vrot.lane.b32.xlu0 %v2247, 48
      %v2254 = vpop.permute.xlu0 %2253
      %2255 = vrot.lane.b32.xlu0 %v2248, 48
      %v2256 = vpop.permute.xlu0 %2255
      %2261 = vst.msk [vmem:[#allocation4] sm:$0xff] %vm871, %v2250
      %2262 = vst.msk [vmem:[#allocation4 + $0x8] sm:$0xff] %vm871, %v2252
      %2263 = vst.msk [vmem:[#allocation4 + $0x10] sm:$0xff] %vm871, %v2254
      %2264 = vst.msk [vmem:[#allocation4 + $0x18] sm:$0xff] %vm871, %v2256
      %v2265 = vld [vmem:[%s2220] sm:$0xf]
      %v2266 = vld [vmem:[%s2220 + $0x4] sm:$0x1]
      %v2267 = vld [vmem:[%s2220 + $0x8] sm:$0xf]
      %v2268 = vld [vmem:[%s2220 + $0xc] sm:$0x1]
      %v2269 = vld [vmem:[%s2220 + $0x10] sm:$0xf]
      %v2270 = vld [vmem:[%s2220 + $0x14] sm:$0x1]
      %v2271 = vld [vmem:[%s2220 + $0x18] sm:$0xf]
      %v2272 = vld [vmem:[%s2220 + $0x1c] sm:$0x1]
      %v2273 = vld [vmem:[%s2220 + $0x20] sm:$0xf]
      %v2274 = vld [vmem:[%s2220 + $0x24] sm:$0x1]
      %v2275 = vld [vmem:[%s2220 + $0x28] sm:$0xf]
      %v2276 = vld [vmem:[%s2220 + $0x2c] sm:$0x1]
      %v2277 = vld [vmem:[%s2220 + $0x30] sm:$0xf]
      %v2278 = vld [vmem:[%s2220 + $0x34] sm:$0x1]
      %v2279 = vld [vmem:[%s2220 + $0x38] sm:$0xf]
      %v2280 = vld [vmem:[%s2220 + $0x3c] sm:$0x1]
      %v2282 = vshrl.u32 %v2265, 16
      %v2284 = vrot.slane %v2282, 4
      %v2285 = vshll.u32 %v2265, 16
      %v2287 = vrot.slane %v2285, 5
      %v2288 = vor.u32 %v2284, %v2287
      %v2289 = vrot.slane %v2288, 4
      %v2291 = vshll.u32 %v2266, 16
      %v2293 = vrot.slane %v2291, 5
      %v2294 = vsel %vm296, %v2289, %v2293
      %v2296 = vshrl.u32 %v2267, 16
      %v2298 = vrot.slane %v2296, 4
      %v2299 = vshll.u32 %v2267, 16
      %v2301 = vrot.slane %v2299, 5
      %v2302 = vor.u32 %v2298, %v2301
      %v2303 = vrot.slane %v2302, 4
      %v2305 = vshll.u32 %v2268, 16
      %v2307 = vrot.slane %v2305, 5
      %v2308 = vsel %vm296, %v2303, %v2307
      %v2310 = vshrl.u32 %v2269, 16
      %v2312 = vrot.slane %v2310, 4
      %v2313 = vshll.u32 %v2269, 16
      %v2315 = vrot.slane %v2313, 5
      %v2316 = vor.u32 %v2312, %v2315
      %v2317 = vrot.slane %v2316, 4
      %v2319 = vshll.u32 %v2270, 16
      %v2321 = vrot.slane %v2319, 5
      %v2322 = vsel %vm296, %v2317, %v2321
      %v2324 = vshrl.u32 %v2271, 16
      %v2326 = vrot.slane %v2324, 4
      %v2327 = vshll.u32 %v2271, 16
      %v2329 = vrot.slane %v2327, 5
      %v2330 = vor.u32 %v2326, %v2329
      %v2331 = vrot.slane %v2330, 4
      %v2333 = vshll.u32 %v2272, 16
      %v2335 = vrot.slane %v2333, 5
      %v2336 = vsel %vm296, %v2331, %v2335
      %v2338 = vshrl.u32 %v2273, 16
      %v2340 = vrot.slane %v2338, 4
      %v2341 = vshll.u32 %v2273, 16
      %v2343 = vrot.slane %v2341, 5
      %v2344 = vor.u32 %v2340, %v2343
      %v2345 = vrot.slane %v2344, 4
      %v2347 = vshll.u32 %v2274, 16
      %v2349 = vrot.slane %v2347, 5
      %v2350 = vsel %vm296, %v2345, %v2349
      %v2352 = vshrl.u32 %v2275, 16
      %v2354 = vrot.slane %v2352, 4
      %v2355 = vshll.u32 %v2275, 16
      %v2357 = vrot.slane %v2355, 5
      %v2358 = vor.u32 %v2354, %v2357
      %v2359 = vrot.slane %v2358, 4
      %v2361 = vshll.u32 %v2276, 16
      %v2363 = vrot.slane %v2361, 5
      %v2364 = vsel %vm296, %v2359, %v2363
      %v2366 = vshrl.u32 %v2277, 16
      %v2368 = vrot.slane %v2366, 4
      %v2369 = vshll.u32 %v2277, 16
      %v2371 = vrot.slane %v2369, 5
      %v2372 = vor.u32 %v2368, %v2371
      %v2373 = vrot.slane %v2372, 4
      %v2375 = vshll.u32 %v2278, 16
      %v2377 = vrot.slane %v2375, 5
      %v2378 = vsel %vm296, %v2373, %v2377
      %v2380 = vshrl.u32 %v2279, 16
      %v2382 = vrot.slane %v2380, 4
      %v2383 = vshll.u32 %v2279, 16
      %v2385 = vrot.slane %v2383, 5
      %v2386 = vor.u32 %v2382, %v2385
      %v2387 = vrot.slane %v2386, 4
      %v2389 = vshll.u32 %v2280, 16
      %v2391 = vrot.slane %v2389, 5
      %v2392 = vsel %vm296, %v2387, %v2391
      %v2393 = vunpack.c.l.b16 %v2294
      %v2394 = vunpack.c.l.b16 %v2308
      %v2395 = vunpack.c.l.b16 %v2322
      %v2396 = vunpack.c.l.b16 %v2336
      %v2397 = vunpack.c.l.b16 %v2350
      %v2398 = vunpack.c.l.b16 %v2364
      %v2399 = vunpack.c.l.b16 %v2378
      %v2400 = vunpack.c.l.b16 %v2392
      %v2401 = vpack.c.b16 %v2394, %v2393
      %v2402 = vpack.c.b16 %v2396, %v2395
      %v2403 = vpack.c.b16 %v2398, %v2397
      %v2404 = vpack.c.b16 %v2400, %v2399
      %2405 = vrot.lane.b32.xlu0 %v2401, 56
      %v2406 = vpop.permute.xlu0 %2405
      %2407 = vrot.lane.b32.xlu0 %v2402, 56
      %v2408 = vpop.permute.xlu0 %2407
      %2409 = vrot.lane.b32.xlu0 %v2403, 56
      %v2410 = vpop.permute.xlu0 %2409
      %2411 = vrot.lane.b32.xlu0 %v2404, 56
      %v2412 = vpop.permute.xlu0 %2411
      %2417 = vst.msk [vmem:[#allocation4] sm:$0xff] %vm1028, %v2406
      %2418 = vst.msk [vmem:[#allocation4 + $0x8] sm:$0xff] %vm1028, %v2408
      %2419 = vst.msk [vmem:[#allocation4 + $0x10] sm:$0xff] %vm1028, %v2410
      %2420 = vst.msk [vmem:[#allocation4 + $0x18] sm:$0xff] %vm1028, %v2412
      %v2421 = vld [vmem:[%s2220] sm:$0xe]
      %v2422 = vld [vmem:[%s2220 + $0x4] sm:$0x1]
      %v2423 = vld [vmem:[%s2220 + $0x8] sm:$0xe]
      %v2424 = vld [vmem:[%s2220 + $0xc] sm:$0x1]
      %v2425 = vld [vmem:[%s2220 + $0x10] sm:$0xe]
      %v2426 = vld [vmem:[%s2220 + $0x14] sm:$0x1]
      %v2427 = vld [vmem:[%s2220 + $0x18] sm:$0xe]
      %v2428 = vld [vmem:[%s2220 + $0x1c] sm:$0x1]
      %v2429 = vld [vmem:[%s2220 + $0x20] sm:$0xe]
      %v2430 = vld [vmem:[%s2220 + $0x24] sm:$0x1]
      %v2431 = vld [vmem:[%s2220 + $0x28] sm:$0xe]
      %v2432 = vld [vmem:[%s2220 + $0x2c] sm:$0x1]
      %v2433 = vld [vmem:[%s2220 + $0x30] sm:$0xe]
      %v2434 = vld [vmem:[%s2220 + $0x34] sm:$0x1]
      %v2435 = vld [vmem:[%s2220 + $0x38] sm:$0xe]
      %v2436 = vld [vmem:[%s2220 + $0x3c] sm:$0x1]
      %v2453 = vrot.slane %v2421, 5
      %v2454 = vrot.slane %v2453, 4
      %v2455 = vrot.slane %v2422, 5
      %v2456 = vsel %vm472, %v2454, %v2455
      %v2457 = vrot.slane %v2423, 5
      %v2458 = vrot.slane %v2457, 4
      %v2459 = vrot.slane %v2424, 5
      %v2460 = vsel %vm472, %v2458, %v2459
      %v2461 = vrot.slane %v2425, 5
      %v2462 = vrot.slane %v2461, 4
      %v2463 = vrot.slane %v2426, 5
      %v2464 = vsel %vm472, %v2462, %v2463
      %v2465 = vrot.slane %v2427, 5
      %v2466 = vrot.slane %v2465, 4
      %v2467 = vrot.slane %v2428, 5
      %v2468 = vsel %vm472, %v2466, %v2467
      %v2469 = vrot.slane %v2429, 5
      %v2470 = vrot.slane %v2469, 4
      %v2471 = vrot.slane %v2430, 5
      %v2472 = vsel %vm472, %v2470, %v2471
      %v2473 = vrot.slane %v2431, 5
      %v2474 = vrot.slane %v2473, 4
      %v2475 = vrot.slane %v2432, 5
      %v2476 = vsel %vm472, %v2474, %v2475
      %v2477 = vrot.slane %v2433, 5
      %v2478 = vrot.slane %v2477, 4
      %v2479 = vrot.slane %v2434, 5
      %v2480 = vsel %vm472, %v2478, %v2479
      %v2481 = vrot.slane %v2435, 5
      %v2482 = vrot.slane %v2481, 4
      %v2483 = vrot.slane %v2436, 5
      %v2484 = vsel %vm472, %v2482, %v2483
      %v2485 = vunpack.c.l.b16 %v2456
      %v2486 = vunpack.c.l.b16 %v2460
      %v2487 = vunpack.c.l.b16 %v2464
      %v2488 = vunpack.c.l.b16 %v2468
      %v2489 = vunpack.c.l.b16 %v2472
      %v2490 = vunpack.c.l.b16 %v2476
      %v2491 = vunpack.c.l.b16 %v2480
      %v2492 = vunpack.c.l.b16 %v2484
      %v2493 = vpack.c.b16 %v2486, %v2485
      %v2494 = vpack.c.b16 %v2488, %v2487
      %v2495 = vpack.c.b16 %v2490, %v2489
      %v2496 = vpack.c.b16 %v2492, %v2491
      %2497 = vrot.lane.b32.xlu0 %v2493, 64
      %v2498 = vpop.permute.xlu0 %2497
      %2499 = vrot.lane.b32.xlu0 %v2494, 64
      %v2500 = vpop.permute.xlu0 %2499
      %2501 = vrot.lane.b32.xlu0 %v2495, 64
      %v2502 = vpop.permute.xlu0 %2501
      %2503 = vrot.lane.b32.xlu0 %v2496, 64
      %v2504 = vpop.permute.xlu0 %2503
      %2509 = vst.msk [vmem:[#allocation4] sm:$0xff] %vm1121, %v2498
      %2510 = vst.msk [vmem:[#allocation4 + $0x8] sm:$0xff] %vm1121, %v2500
      %2511 = vst.msk [vmem:[#allocation4 + $0x10] sm:$0xff] %vm1121, %v2502
      %2512 = vst.msk [vmem:[#allocation4 + $0x18] sm:$0xff] %vm1121, %v2504
      %v2513 = vld [vmem:[#allocation3] sm:$0xff]
      %v2514 = vld [vmem:[#allocation3 + $0x8] sm:$0xff]
      %v2515 = vld [vmem:[#allocation3 + $0x10] sm:$0xff]
      %v2516 = vld [vmem:[#allocation3 + $0x18] sm:$0xff]
      %v2517 = vld [vmem:[#allocation3 + $0x20] sm:$0xff]
      %v2518 = vld [vmem:[#allocation3 + $0x28] sm:$0xff]
      %v2519 = vld [vmem:[#allocation3 + $0x30] sm:$0xff]
      %v2520 = vld [vmem:[#allocation3 + $0x38] sm:$0xff]
      %v2521 = vld [vmem:[#allocation4] sm:$0xff]
      %v2522 = vld [vmem:[#allocation4 + $0x8] sm:$0xff]
      %v2523 = vld [vmem:[#allocation4 + $0x10] sm:$0xff]
      %v2524 = vld [vmem:[#allocation4 + $0x18] sm:$0xff]
      %v2525 = vld [vmem:[%s3] sm:$0xf]
      %v2526 = vld [vmem:[%s3 + $0x4] sm:$0xf]
      %v2527 = vld [vmem:[%s3 + $0x8] sm:$0xf]
      %v2528 = vld [vmem:[%s3 + $0xc] sm:$0xf]
      %v2529 = vld [vmem:[%s3 + $0x10] sm:$0xf]
      %v2530 = vld [vmem:[%s3 + $0x14] sm:$0xf]
      %v2531 = vld [vmem:[%s3 + $0x18] sm:$0xf]
      %v2532 = vld [vmem:[%s3 + $0x1c] sm:$0xf]
      %v2533 = vld [vmem:[%s3 + $0x20] sm:$0xf]
      %v2543 = vunpack.c.l.b16 %v2525
      %v2544 = vunpack.c.l.b16 %v2526
      %v2545 = vunpack.c.l.b16 %v2527
      %v2546 = vunpack.c.l.b16 %v2528
      %v2547 = vunpack.c.l.b16 %v2529
      %v2548 = vunpack.c.l.b16 %v2530
      %v2549 = vunpack.c.l.b16 %v2531
      %v2550 = vunpack.c.l.b16 %v2532
      %v2551 = vunpack.c.l.b16 %v2533
      %v2552 = vpack.c.b16 %v2544, %v2543
      %v2553 = vpack.c.b16 %v2546, %v2545
      %v2554 = vpack.c.b16 %v2548, %v2547
      %v2555 = vpack.c.b16 %v2550, %v2549
      %v2556 = vpack.c.b16 %v2551, %v2551
      %v2562 = vsel %vm1174, %v2521, 0
      %v2565 = vsel %vm1174, %v2522, 0
      %v2568 = vsel %vm1174, %v2523, 0
      %v2571 = vsel %vm1174, %v2524, 0
      %v2574 = vsel %vm1187, %v2556, 0
      %2576 = vmatprep.subr.bf16.mxu0 0
      %2577 = vmatpush1.bf16.msra.mxu0 %v2552
      %2578 = vmatprep.subr.bf16.mxu0 0
      %2579 = vmatpush1.bf16.msra.mxu0 %v2553
      %2580 = vmatprep.subr.bf16.mxu0 0
      %2581 = vmatpush1.bf16.msra.mxu0 %v2554
      %2582 = vmatprep.subr.bf16.mxu0 0
      %2583 = vmatpush1.bf16.msra.mxu0 %v2555
      %2584 = vmatprep.subr.bf16.mxu0 0
      %2585 = vmatpush1.bf16.msra.mxu0 %v2574
      %2586 = vmatprep.subr.bf16.mxu0 0
      %2587 = vmatpush1.bf16.msra.mxu0 0
      %2588 = vmatprep.subr.bf16.mxu0 0
      %2589 = vmatpush1.bf16.msra.mxu0 0
      %2590 = vmatprep.subr.bf16.mxu0 0
      %2591 = vmatpush1.bf16.msra.mxu0 0
      %2592 = vmatprep.subr.bf16.mxu0 0
      %2593 = vmatpush1.bf16.msra.mxu0 0
      %2594 = vmatprep.subr.bf16.mxu0 0
      %2595 = vmatpush1.bf16.msra.mxu0 0
      %2596 = vmatprep.subr.bf16.mxu0 0
      %2597 = vmatpush1.bf16.msra.mxu0 0
      %2598 = vmatprep.subr.bf16.mxu0 0
      %2599 = vmatpush1.bf16.msra.mxu0 0
      %2600 = vmatprep.subr.bf16.mxu0 0
      %2601 = vmatpush1.bf16.msra.mxu0 0
      %2602 = vmatprep.subr.bf16.mxu0 0
      %2603 = vmatpush1.bf16.msra.mxu0 0
      %2604 = vmatprep.subr.bf16.mxu0 0
      %2605 = vmatpush1.bf16.msra.mxu0 0
      %2606 = vmatprep.subr.bf16.mxu0 0
      %2607 = vmatpush1.bf16.msra.mxu0 0
      %2608 = vmatprep.mubr.bf16.mxu0 0
      %2609 = vmatmul.mubr.bf16.gmra.mrb[0].mxu0 %v2562
      %v2610 = vpop.f32.mrb[0].mxu0
      %v2611 = vadd.f32 0.0, %v2610
      %v2612 = vpop.f32.mrb[0].mxu0
      %v2613 = vpop.f32.mrb[0].mxu0
      %v2614 = vadd.f32 0.0, %v2613
      %v2615 = vpop.f32.mrb[0].mxu0
      %2616 = vmatprep.mubr.bf16.mxu0 0
      %2617 = vmatmul.mubr.bf16.gmra.mrb[0].mxu0 %v2565
      %v2618 = vpop.f32.mrb[0].mxu0
      %v2619 = vadd.f32 0.0, %v2618
      %v2620 = vpop.f32.mrb[0].mxu0
      %v2621 = vpop.f32.mrb[0].mxu0
      %v2622 = vadd.f32 0.0, %v2621
      %v2623 = vpop.f32.mrb[0].mxu0
      %2624 = vmatprep.mubr.bf16.mxu0 0
      %2625 = vmatmul.mubr.bf16.gmra.mrb[0].mxu0 %v2568
      %v2626 = vpop.f32.mrb[0].mxu0
      %v2627 = vadd.f32 0.0, %v2626
      %v2628 = vpop.f32.mrb[0].mxu0
      %v2629 = vpop.f32.mrb[0].mxu0
      %v2630 = vadd.f32 0.0, %v2629
      %v2631 = vpop.f32.mrb[0].mxu0
      %2632 = vmatprep.mubr.bf16.mxu0 0
      %2633 = vmatmul.mubr.bf16.gmra.mrb[0].mxu0 %v2571
      %v2634 = vpop.f32.mrb[0].mxu0
      %v2635 = vadd.f32 0.0, %v2634
      %v2636 = vpop.f32.mrb[0].mxu0
      %v2637 = vpop.f32.mrb[0].mxu0
      %v2638 = vadd.f32 0.0, %v2637
      %v2639 = vpop.f32.mrb[0].mxu0
      %2640 = vdwg.mxu0
      %v2641 = vadd.f32 %v2513, %v2611
      %v2642 = vadd.f32 %v2514, %v2614
      %v2643 = vadd.f32 %v2515, %v2619
      %v2644 = vadd.f32 %v2516, %v2622
      %v2645 = vadd.f32 %v2517, %v2627
      %v2646 = vadd.f32 %v2518, %v2630
      %v2647 = vadd.f32 %v2519, %v2635
      %v2648 = vadd.f32 %v2520, %v2638
      %2649 = vst.msk [vmem:[#allocation3] sm:$0xff] %vm233, %v2641
      %2650 = vst.msk [vmem:[#allocation3 + $0x8] sm:$0xff] %vm233, %v2642
      %2651 = vst.msk [vmem:[#allocation3 + $0x10] sm:$0xff] %vm233, %v2643
      %2652 = vst.msk [vmem:[#allocation3 + $0x18] sm:$0xff] %vm233, %v2644
      %2653 = vst.msk [vmem:[#allocation3 + $0x20] sm:$0xff] %vm233, %v2645
      %2654 = vst.msk [vmem:[#allocation3 + $0x28] sm:$0xff] %vm233, %v2646
      %2655 = vst.msk [vmem:[#allocation3 + $0x30] sm:$0xff] %vm233, %v2647
      %2656 = vst.msk [vmem:[#allocation3 + $0x38] sm:$0xff] %vm233, %v2648
      %v2657 = vld [vmem:[%s534] sm:$0xf]
      %v2658 = vld [vmem:[%s534 + $0x4] sm:$0x1]
      %v2659 = vld [vmem:[%s534 + $0x8] sm:$0xf]
      %v2660 = vld [vmem:[%s534 + $0xc] sm:$0x1]
      %v2661 = vld [vmem:[%s534 + $0x10] sm:$0xf]
      %v2662 = vld [vmem:[%s534 + $0x14] sm:$0x1]
      %v2663 = vld [vmem:[%s534 + $0x18] sm:$0xf]
      %v2664 = vld [vmem:[%s534 + $0x1c] sm:$0x1]
      %v2665 = vld [vmem:[%s534 + $0x20] sm:$0xf]
      %v2666 = vld [vmem:[%s534 + $0x24] sm:$0x1]
      %v2667 = vld [vmem:[%s534 + $0x28] sm:$0xf]
      %v2668 = vld [vmem:[%s534 + $0x2c] sm:$0x1]
      %v2669 = vld [vmem:[%s534 + $0x30] sm:$0xf]
      %v2670 = vld [vmem:[%s534 + $0x34] sm:$0x1]
      %v2671 = vld [vmem:[%s534 + $0x38] sm:$0xf]
      %v2672 = vld [vmem:[%s534 + $0x3c] sm:$0x1]
      %v2673 = vld [vmem:[#allocation3] sm:$0xff]
      %v2674 = vld [vmem:[#allocation3 + $0x8] sm:$0xff]
      %v2675 = vld [vmem:[#allocation3 + $0x10] sm:$0xff]
      %v2676 = vld [vmem:[#allocation3 + $0x18] sm:$0xff]
      %v2677 = vld [vmem:[#allocation3 + $0x20] sm:$0xff]
      %v2678 = vld [vmem:[#allocation3 + $0x28] sm:$0xff]
      %v2679 = vld [vmem:[#allocation3 + $0x30] sm:$0xff]
      %v2680 = vld [vmem:[#allocation3 + $0x38] sm:$0xff]
      %v2682 = vshrl.u32 %v2657, 16
      %v2684 = vrot.slane %v2682, 4
      %v2685 = vshll.u32 %v2657, 16
      %v2687 = vrot.slane %v2685, 5
      %v2688 = vor.u32 %v2684, %v2687
      %v2689 = vrot.slane %v2688, 4
      %v2691 = vshll.u32 %v2658, 16
      %v2693 = vrot.slane %v2691, 5
      %v2694 = vsel %vm296, %v2689, %v2693
      %v2696 = vshrl.u32 %v2659, 16
      %v2698 = vrot.slane %v2696, 4
      %v2699 = vshll.u32 %v2659, 16
      %v2701 = vrot.slane %v2699, 5
      %v2702 = vor.u32 %v2698, %v2701
      %v2703 = vrot.slane %v2702, 4
      %v2705 = vshll.u32 %v2660, 16
      %v2707 = vrot.slane %v2705, 5
      %v2708 = vsel %vm296, %v2703, %v2707
      %v2710 = vshrl.u32 %v2661, 16
      %v2712 = vrot.slane %v2710, 4
      %v2713 = vshll.u32 %v2661, 16
      %v2715 = vrot.slane %v2713, 5
      %v2716 = vor.u32 %v2712, %v2715
      %v2717 = vrot.slane %v2716, 4
      %v2719 = vshll.u32 %v2662, 16
      %v2721 = vrot.slane %v2719, 5
      %v2722 = vsel %vm296, %v2717, %v2721
      %v2724 = vshrl.u32 %v2663, 16
      %v2726 = vrot.slane %v2724, 4
      %v2727 = vshll.u32 %v2663, 16
      %v2729 = vrot.slane %v2727, 5
      %v2730 = vor.u32 %v2726, %v2729
      %v2731 = vrot.slane %v2730, 4
      %v2733 = vshll.u32 %v2664, 16
      %v2735 = vrot.slane %v2733, 5
      %v2736 = vsel %vm296, %v2731, %v2735
      %v2738 = vshrl.u32 %v2665, 16
      %v2740 = vrot.slane %v2738, 4
      %v2741 = vshll.u32 %v2665, 16
      %v2743 = vrot.slane %v2741, 5
      %v2744 = vor.u32 %v2740, %v2743
      %v2745 = vrot.slane %v2744, 4
      %v2747 = vshll.u32 %v2666, 16
      %v2749 = vrot.slane %v2747, 5
      %v2750 = vsel %vm296, %v2745, %v2749
      %v2752 = vshrl.u32 %v2667, 16
      %v2754 = vrot.slane %v2752, 4
      %v2755 = vshll.u32 %v2667, 16
      %v2757 = vrot.slane %v2755, 5
      %v2758 = vor.u32 %v2754, %v2757
      %v2759 = vrot.slane %v2758, 4
      %v2761 = vshll.u32 %v2668, 16
      %v2763 = vrot.slane %v2761, 5
      %v2764 = vsel %vm296, %v2759, %v2763
      %v2766 = vshrl.u32 %v2669, 16
      %v2768 = vrot.slane %v2766, 4
      %v2769 = vshll.u32 %v2669, 16
      %v2771 = vrot.slane %v2769, 5
      %v2772 = vor.u32 %v2768, %v2771
      %v2773 = vrot.slane %v2772, 4
      %v2775 = vshll.u32 %v2670, 16
      %v2777 = vrot.slane %v2775, 5
      %v2778 = vsel %vm296, %v2773, %v2777
      %v2780 = vshrl.u32 %v2671, 16
      %v2782 = vrot.slane %v2780, 4
      %v2783 = vshll.u32 %v2671, 16
      %v2785 = vrot.slane %v2783, 5
      %v2786 = vor.u32 %v2782, %v2785
      %v2787 = vrot.slane %v2786, 4
      %v2789 = vshll.u32 %v2672, 16
      %v2791 = vrot.slane %v2789, 5
      %v2792 = vsel %vm296, %v2787, %v2791
      %v2801 = vunpack.c.l.bf16 %v2694
      %v2802 = vunpack.c.l.bf16 %v2708
      %v2803 = vunpack.c.l.bf16 %v2722
      %v2804 = vunpack.c.l.bf16 %v2736
      %v2805 = vunpack.c.l.bf16 %v2750
      %v2806 = vunpack.c.l.bf16 %v2764
      %v2807 = vunpack.c.l.bf16 %v2778
      %v2808 = vunpack.c.l.bf16 %v2792
      %v2809 = vadd.f32 %v2673, %v2801
      %v2810 = vadd.f32 %v2674, %v2802
      %v2811 = vadd.f32 %v2675, %v2803
      %v2812 = vadd.f32 %v2676, %v2804
      %v2813 = vadd.f32 %v2677, %v2805
      %v2814 = vadd.f32 %v2678, %v2806
      %v2815 = vadd.f32 %v2679, %v2807
      %v2816 = vadd.f32 %v2680, %v2808
      %2817 = vst.msk [vmem:[#allocation3] sm:$0xff] %vm233, %v2809
      %2818 = vst.msk [vmem:[#allocation3 + $0x8] sm:$0xff] %vm233, %v2810
      %2819 = vst.msk [vmem:[#allocation3 + $0x10] sm:$0xff] %vm233, %v2811
      %2820 = vst.msk [vmem:[#allocation3 + $0x18] sm:$0xff] %vm233, %v2812
      %2821 = vst.msk [vmem:[#allocation3 + $0x20] sm:$0xff] %vm233, %v2813
      %2822 = vst.msk [vmem:[#allocation3 + $0x28] sm:$0xff] %vm233, %v2814
      %2823 = vst.msk [vmem:[#allocation3 + $0x30] sm:$0xff] %vm233, %v2815
      %2824 = vst.msk [vmem:[#allocation3 + $0x38] sm:$0xff] %vm233, %v2816
      %v2825 = vld [vmem:[#allocation3] sm:$0xff]
      %v2826 = vld [vmem:[#allocation3 + $0x8] sm:$0xff]
      %v2827 = vld [vmem:[#allocation3 + $0x10] sm:$0xff]
      %v2828 = vld [vmem:[#allocation3 + $0x18] sm:$0xff]
      %v2829 = vld [vmem:[#allocation3 + $0x20] sm:$0xff]
      %v2830 = vld [vmem:[#allocation3 + $0x28] sm:$0xff]
      %v2831 = vld [vmem:[#allocation3 + $0x30] sm:$0xff]
      %v2832 = vld [vmem:[#allocation3 + $0x38] sm:$0xff]
      %v2833 = vmul.f32 %v2825, 0.25
      %v2834 = vmul.f32 %v2826, 0.25
      %v2835 = vmul.f32 %v2827, 0.25
      %v2836 = vmul.f32 %v2828, 0.25
      %v2837 = vmul.f32 %v2829, 0.25
      %v2838 = vmul.f32 %v2830, 0.25
      %v2839 = vmul.f32 %v2831, 0.25
      %v2840 = vmul.f32 %v2832, 0.25
      %v2841 = vadd.f32 %v2833, 1.49
      %v2842 = vadd.f32 %v2834, 1.49
      %v2843 = vadd.f32 %v2835, 1.49
      %v2844 = vadd.f32 %v2836, 1.49
      %v2845 = vadd.f32 %v2837, 1.49
      %v2846 = vadd.f32 %v2838, 1.49
      %v2847 = vadd.f32 %v2839, 1.49
      %v2848 = vadd.f32 %v2840, 1.49
      %v2849 = vmul.f32 %v2825, %v2841
      %v2850 = vmul.f32 %v2826, %v2842
      %v2851 = vmul.f32 %v2827, %v2843
      %v2852 = vmul.f32 %v2828, %v2844
      %v2853 = vmul.f32 %v2829, %v2845
      %v2854 = vmul.f32 %v2830, %v2846
      %v2855 = vmul.f32 %v2831, %v2847
      %v2856 = vmul.f32 %v2832, %v2848
      %v2857 = vadd.f32 %v2849, 3.05
      %v2858 = vadd.f32 %v2850, 3.05
      %v2859 = vadd.f32 %v2851, 3.05
      %v2860 = vadd.f32 %v2852, 3.05
      %v2861 = vadd.f32 %v2853, 3.05
      %v2862 = vadd.f32 %v2854, 3.05
      %v2863 = vadd.f32 %v2855, 3.05
      %v2864 = vadd.f32 %v2856, 3.05
      %v2865 = vmul.f32 %v2825, %v2857
      %v2866 = vmul.f32 %v2826, %v2858
      %v2867 = vmul.f32 %v2827, %v2859
      %v2868 = vmul.f32 %v2828, %v2860
      %v2869 = vmul.f32 %v2829, %v2861
      %v2870 = vmul.f32 %v2830, %v2862
      %v2871 = vmul.f32 %v2831, %v2863
      %v2872 = vmul.f32 %v2832, %v2864
      %v2873 = vadd.f32 %v2865, 2.32
      %v2874 = vadd.f32 %v2866, 2.32
      %v2875 = vadd.f32 %v2867, 2.32
      %v2876 = vadd.f32 %v2868, 2.32
      %v2877 = vadd.f32 %v2869, 2.32
      %v2878 = vadd.f32 %v2870, 2.32
      %v2879 = vadd.f32 %v2871, 2.32
      %v2880 = vadd.f32 %v2872, 2.32
      %v2881 = vmul.f32 %v2825, %v2873
      %v2882 = vmul.f32 %v2826, %v2874
      %v2883 = vmul.f32 %v2827, %v2875
      %v2884 = vmul.f32 %v2828, %v2876
      %v2885 = vmul.f32 %v2829, %v2877
      %v2886 = vmul.f32 %v2830, %v2878
      %v2887 = vmul.f32 %v2831, %v2879
      %v2888 = vmul.f32 %v2832, %v2880
      %v2889 = vadd.f32 %v2881, 0.62
      %v2890 = vadd.f32 %v2882, 0.62
      %v2891 = vadd.f32 %v2883, 0.62
      %v2892 = vadd.f32 %v2884, 0.62
      %v2893 = vadd.f32 %v2885, 0.62
      %v2894 = vadd.f32 %v2886, 0.62
      %v2895 = vadd.f32 %v2887, 0.62
      %v2896 = vadd.f32 %v2888, 0.62
      %v2897 = vmul.f32 %v2825, %v2889
      %v2898 = vmul.f32 %v2826, %v2890
      %v2899 = vmul.f32 %v2827, %v2891
      %v2900 = vmul.f32 %v2828, %v2892
      %v2901 = vmul.f32 %v2829, %v2893
      %v2902 = vmul.f32 %v2830, %v2894
      %v2903 = vmul.f32 %v2831, %v2895
      %v2904 = vmul.f32 %v2832, %v2896
      %v2905 = vadd.f32 %v2897, 0.03
      %v2906 = vadd.f32 %v2898, 0.03
      %v2907 = vadd.f32 %v2899, 0.03
      %v2908 = vadd.f32 %v2900, 0.03
      %v2909 = vadd.f32 %v2901, 0.03
      %v2910 = vadd.f32 %v2902, 0.03
      %v2911 = vadd.f32 %v2903, 0.03
      %v2912 = vadd.f32 %v2904, 0.03
      %v2913 = vmul.f32 %v2825, 0.05
      %v2914 = vmul.f32 %v2826, 0.05
      %v2915 = vmul.f32 %v2827, 0.05
      %v2916 = vmul.f32 %v2828, 0.05
      %v2917 = vmul.f32 %v2829, 0.05
      %v2918 = vmul.f32 %v2830, 0.05
      %v2919 = vmul.f32 %v2831, 0.05
      %v2920 = vmul.f32 %v2832, 0.05
      %v2921 = vadd.f32 %v2913, 1.2
      %v2922 = vadd.f32 %v2914, 1.2
      %v2923 = vadd.f32 %v2915, 1.2
      %v2924 = vadd.f32 %v2916, 1.2
      %v2925 = vadd.f32 %v2917, 1.2
      %v2926 = vadd.f32 %v2918, 1.2
      %v2927 = vadd.f32 %v2919, 1.2
      %v2928 = vadd.f32 %v2920, 1.2
      %v2929 = vmul.f32 %v2825, %v2921
      %v2930 = vmul.f32 %v2826, %v2922
      %v2931 = vmul.f32 %v2827, %v2923
      %v2932 = vmul.f32 %v2828, %v2924
      %v2933 = vmul.f32 %v2829, %v2925
      %v2934 = vmul.f32 %v2830, %v2926
      %v2935 = vmul.f32 %v2831, %v2927
      %v2936 = vmul.f32 %v2832, %v2928
      %v2937 = vadd.f32 %v2929, 0.25
      %v2938 = vadd.f32 %v2930, 0.25
      %v2939 = vadd.f32 %v2931, 0.25
      %v2940 = vadd.f32 %v2932, 0.25
      %v2941 = vadd.f32 %v2933, 0.25
      %v2942 = vadd.f32 %v2934, 0.25
      %v2943 = vadd.f32 %v2935, 0.25
      %v2944 = vadd.f32 %v2936, 0.25
      %v2945 = vmul.f32 %v2825, %v2937
      %v2946 = vmul.f32 %v2826, %v2938
      %v2947 = vmul.f32 %v2827, %v2939
      %v2948 = vmul.f32 %v2828, %v2940
      %v2949 = vmul.f32 %v2829, %v2941
      %v2950 = vmul.f32 %v2830, %v2942
      %v2951 = vmul.f32 %v2831, %v2943
      %v2952 = vmul.f32 %v2832, %v2944
      %v2953 = vadd.f32 %v2945, 2.4
      %v2954 = vadd.f32 %v2946, 2.4
      %v2955 = vadd.f32 %v2947, 2.4
      %v2956 = vadd.f32 %v2948, 2.4
      %v2957 = vadd.f32 %v2949, 2.4
      %v2958 = vadd.f32 %v2950, 2.4
      %v2959 = vadd.f32 %v2951, 2.4
      %v2960 = vadd.f32 %v2952, 2.4
      %v2961 = vmul.f32 %v2825, %v2953
      %v2962 = vmul.f32 %v2826, %v2954
      %v2963 = vmul.f32 %v2827, %v2955
      %v2964 = vmul.f32 %v2828, %v2956
      %v2965 = vmul.f32 %v2829, %v2957
      %v2966 = vmul.f32 %v2830, %v2958
      %v2967 = vmul.f32 %v2831, %v2959
      %v2968 = vmul.f32 %v2832, %v2960
      %v2969 = vand.u32 2147483647, %v2961
      %v2970 = vand.u32 2147483647, %v2962
      %v2971 = vand.u32 2147483647, %v2963
      %v2972 = vand.u32 2147483647, %v2964
      %v2973 = vand.u32 2147483647, %v2965
      %v2974 = vand.u32 2147483647, %v2966
      %v2975 = vand.u32 2147483647, %v2967
      %v2976 = vand.u32 2147483647, %v2968
      %v2977 = vadd.f32 %v2969, 1.0
      %v2978 = vadd.f32 %v2970, 1.0
      %v2979 = vadd.f32 %v2971, 1.0
      %v2980 = vadd.f32 %v2972, 1.0
      %v2981 = vadd.f32 %v2973, 1.0
      %v2982 = vadd.f32 %v2974, 1.0
      %v2983 = vadd.f32 %v2975, 1.0
      %v2984 = vadd.f32 %v2976, 1.0
      %v2985 = vrcp.pop %v2977
      %v2986 = vrcp.pop %v2978
      %v2987 = vrcp.pop %v2979
      %v2988 = vrcp.pop %v2980
      %v2989 = vrcp.pop %v2981
      %v2990 = vrcp.pop %v2982
      %v2991 = vrcp.pop %v2983
      %v2992 = vrcp.pop %v2984
      %v2993 = vmul.f32 %v2905, %v2985
      %v2994 = vmul.f32 %v2906, %v2986
      %v2995 = vmul.f32 %v2907, %v2987
      %v2996 = vmul.f32 %v2908, %v2988
      %v2997 = vmul.f32 %v2909, %v2989
      %v2998 = vmul.f32 %v2910, %v2990
      %v2999 = vmul.f32 %v2911, %v2991
      %v3000 = vmul.f32 %v2912, %v2992
      %3001 = vst.msk [vmem:[%s224] sm:$0xff] %vm233, %v2993
      %3002 = vst.msk [vmem:[%s224 + $0x8] sm:$0xff] %vm233, %v2994
      %3003 = vst.msk [vmem:[%s224 + $0x10] sm:$0xff] %vm233, %v2995
      %3004 = vst.msk [vmem:[%s224 + $0x18] sm:$0xff] %vm233, %v2996
      %3005 = vst.msk [vmem:[%s224 + $0x20] sm:$0xff] %vm233, %v2997
      %3006 = vst.msk [vmem:[%s224 + $0x28] sm:$0xff] %vm233, %v2998
      %3007 = vst.msk [vmem:[%s224 + $0x30] sm:$0xff] %vm233, %v2999
      %3008 = vst.msk [vmem:[%s224 + $0x38] sm:$0xff] %vm233, %v3000
      %p3009 = scmp.lt.s32.totalorder %s16, 1
      %s3010 = scalar_select %p3009, %s16, 1
      %s3011 = smul.addr %s3010, 8
      %s3012 = smul.addr %s3011, 8
      %s3013 = scalar_lea.vmem %s5, %s3012
      // Predicated region
      $region41: #{_lambda_.3} parent=39 // pred_check
        %p3014 = pneg %p144
      $region42: #{_lambda_.3} parent=39 // pred_check_branch
        %3016 = sbr.rel (%p3014) target = $region44
      $region43: #{_lambda_.3} parent=39 // pred_region
        _
      $region44: #{_lambda_.3} parent=39 // pred_fallthru
        _
    $region40: #{_lambda_.3} parent=5 // pred_fallthru
      _
    %p3017 = scmp.le.s32.totalorder 2, %s11
    // Predicated region
    $region45: #{_lambda_.3} parent=5 // pred_check
      %p3018 = pneg %p3017
    $region46: #{_lambda_.3} parent=5 // pred_check_branch
      %3020 = sbr.rel (%p3018) target = $region48
    $region47: #{_lambda_.3} parent=5 // pred_region
      %s3021 = ssub.s32 %s11, 2
      // Predicated region
      $region49: #{_lambda_.3} parent=47 // pred_check
        %p3022 = pneg %p150
      $region50: #{_lambda_.3} parent=47 // pred_check_branch
        %3024 = sbr.rel (%p3022) target = $region52
      $region51: #{_lambda_.3} parent=47 // pred_region
        %p3025 = scmp.lt.s32.totalorder %s17, 1
        %s3026 = scalar_select %p3025, %s17, 1
        %s3027 = smul.addr %s3026, 8
        %s3028 = smul.addr %s3027, 8
        %s3029 = scalar_lea.vmem %s5, %s3028
      $region52: #{_lambda_.3} parent=47 // pred_fallthru
        _
    $region48: #{_lambda_.3} parent=5 // pred_fallthru
      _
  $region6: #{_lambda_.3} parent=0 // loop_footer
    %s15 = sadd.s32 1, %s11
  $region7: #{_lambda_.3} parent=0 // loop_footer_branch
    %10 = sbr.rel target = $region3
  $region8: #{_lambda_.3} parent=0 // loop_exit
    _

// kernel: _lambda_.2
$region0: #{_lambda_.2}
  #allocation0 [shape = 'u32[]', space=smem, size = 0x4, offset = 0x4, fixed_abs, tag = 'smem constant byte address 0x4 - core index']
  #allocation1 [shape = 'u32[144,128]{1,0:T(1,128)}', space=vmem, size = 0x12000, scoped, tag = 'internal scratch']
  #allocation2 [shape = 'bf16[10,10,8]{2,1,0:T(8,128)(2,1)}', space=vmem, size = 0xa000, scoped, tag = 'scratch operand']
  #allocation3 [shape = 'f32[64,8]{1,0:T(8,128)}', space=vmem, size = 0x8000, scoped, tag = 'scratch operand']
  #allocation4 [shape = 'bf16[64,72]{1,0:T(16,128)(2,1)}', space=vmem, size = 0x4000, scoped, tag = 'scratch operand']
  %s0 = inlined_call_operand.vmem [shape: bf16[2,4,9,9,4], index: 0, kind: input, shape index: {}]
  %s1 = inlined_call_operand.vmem [shape: bf16[36,8], index: 1, kind: input, shape index: {}]
  %s2 = inlined_call_operand.vmem [shape: f32[1,8], index: 2, kind: input, shape index: {}]
  %s3 = inlined_call_operand.vmem [shape: bf16[72,8], index: 3, kind: input, shape index: {}]
  %s4 = inlined_call_operand.vmem [shape: f32[1,8], index: 4, kind: input, shape index: {}]
  %s5 = inlined_call_operand.vmem [shape: bf16[4,8], index: 5, kind: input, shape index: {}]
  %s6 = inlined_call_operand.vmem [shape: f32[1,8], index: 6, kind: input, shape index: {}]
  %s7 = inlined_call_operand.vmem [shape: bf16[2,64,8], index: 7, kind: output, shape index: {}]
  %s8 = sld [smem:[#allocation0]]
  $region61: #{_lambda_.2} parent=0
    _
  %s10 = ssub.s32 1, %s8
  %s11 = scalar_select 0, %s10, %s8
  loop: start=0, step=1, limit=4
  $region2: #{_lambda_.2} parent=0 // loop_pre_header
    _
  $region3: #{_lambda_.2} parent=0 // loop_header
    %s13 = sphi 0, %s17
    %p14 = scmp.ge.s32.totalorder %s13, 4
    %s23 = sphi 0, %s25
    %s26 = sphi 0, %s23
    %s27 = sphi 0, %s26
    %s43 = sphi 0, %s27
    %s47 = sphi 0, %s47
    %s49 = sphi 0, %s47
    %s50 = sphi 0, %s49
    %s64 = sphi 0, %s50
    %s68 = sphi 0, %s68
    %s70 = sphi 0, %s68
    %s71 = sphi 0, %s70
    %s85 = sphi 0, %s71
    %s89 = sphi 0, %s89
    %s91 = sphi 0, %s89
    %s92 = sphi 0, %s91
    %s106 = sphi 0, %s92
    %s110 = sphi 0, %s110
    %s112 = sphi 0, %s110
    %s113 = sphi 0, %s112
    %s127 = sphi 0, %s113
    %s131 = sphi 0, %s131
    %s133 = sphi 0, %s131
    %s134 = sphi 0, %s133
    %s148 = sphi 0, %s134
    %s152 = sphi 0, %s152
    %s154 = sphi 0, %s152
    %s155 = sphi 0, %s154
    %s169 = sphi 0, %s155
    %s175 = sphi 0, %s177
    %s178 = sphi 0, %s175
    %s179 = sphi 0, %s178
    %s195 = sphi 0, %s179
  $region4: #{_lambda_.2} parent=0 // loop_header_branch
    %16 = sbr.rel (%p14) target = $region8
  $region5: #{_lambda_.2} parent=0 // loop_body
    %s18 = ssub.s32 %s13, 1
    %s19 = ssub.s32 %s13, 2
    %s20 = sadd.s32 %s13, 1
    %s21 = ssub.s32 %s13, %s20
    %p22 = scmp.eq.s32.totalorder %s21, 0
    %s24 = sadd.s32 %s23, 1
    %s25 = scalar_select %p22, %s23, %s24
    %p28 = pneg %p22
    %p29 = scmp.eq.s32.totalorder %s13, 1
    %p30 = por %p28, %p29
    %p31 = scmp.ne.s32.totalorder %s23, %s26
    %p32 = scmp.eq.s32.totalorder %s13, 0
    %p33 = por %p31, %p32
    %p34 = scmp.ne.s32.totalorder %s23, %s26
    %p35 = scmp.eq.s32.totalorder %s18, 1
    %p36 = por %p34, %p35
    %p37 = scmp.ne.s32.totalorder %s26, %s27
    %p38 = scmp.eq.s32.totalorder %s18, 0
    %p39 = por %p37, %p38
    %p40 = scmp.ne.s32.totalorder %s26, %s27
    %p41 = scmp.eq.s32.totalorder %s19, 1
    %p42 = por %p40, %p41
    %p44 = scmp.ne.s32.totalorder %s27, %s43
    %p45 = scmp.eq.s32.totalorder %s19, 0
    %p46 = por %p44, %p45
    %s48 = sadd.s32 %s47, 1
    %p51 = scmp.eq.s32.totalorder %s13, 1
    %p52 = scmp.ne.s32.totalorder %s47, %s49
    %p53 = scmp.eq.s32.totalorder %s13, 0
    %p54 = por %p52, %p53
    %p55 = scmp.ne.s32.totalorder %s47, %s49
    %p56 = scmp.eq.s32.totalorder %s18, 1
    %p57 = por %p55, %p56
    %p58 = scmp.ne.s32.totalorder %s49, %s50
    %p59 = scmp.eq.s32.totalorder %s18, 0
    %p60 = por %p58, %p59
    %p61 = scmp.ne.s32.totalorder %s49, %s50
    %p62 = scmp.eq.s32.totalorder %s19, 1
    %p63 = por %p61, %p62
    %p65 = scmp.ne.s32.totalorder %s50, %s64
    %p66 = scmp.eq.s32.totalorder %s19, 0
    %p67 = por %p65, %p66
    %s69 = sadd.s32 %s68, 1
    %p72 = scmp.eq.s32.totalorder %s13, 1
    %p73 = scmp.ne.s32.totalorder %s68, %s70
    %p74 = scmp.eq.s32.totalorder %s13, 0
    %p75 = por %p73, %p74
    %p76 = scmp.ne.s32.totalorder %s68, %s70
    %p77 = scmp.eq.s32.totalorder %s18, 1
    %p78 = por %p76, %p77
    %p79 = scmp.ne.s32.totalorder %s70, %s71
    %p80 = scmp.eq.s32.totalorder %s18, 0
    %p81 = por %p79, %p80
    %p82 = scmp.ne.s32.totalorder %s70, %s71
    %p83 = scmp.eq.s32.totalorder %s19, 1
    %p84 = por %p82, %p83
    %p86 = scmp.ne.s32.totalorder %s71, %s85
    %p87 = scmp.eq.s32.totalorder %s19, 0
    %p88 = por %p86, %p87
    %s90 = sadd.s32 %s89, 1
    %p93 = scmp.eq.s32.totalorder %s13, 1
    %p94 = scmp.ne.s32.totalorder %s89, %s91
    %p95 = scmp.eq.s32.totalorder %s13, 0
    %p96 = por %p94, %p95
    %p97 = scmp.ne.s32.totalorder %s89, %s91
    %p98 = scmp.eq.s32.totalorder %s18, 1
    %p99 = por %p97, %p98
    %p100 = scmp.ne.s32.totalorder %s91, %s92
    %p101 = scmp.eq.s32.totalorder %s18, 0
    %p102 = por %p100, %p101
    %p103 = scmp.ne.s32.totalorder %s91, %s92
    %p104 = scmp.eq.s32.totalorder %s19, 1
    %p105 = por %p103, %p104
    %p107 = scmp.ne.s32.totalorder %s92, %s106
    %p108 = scmp.eq.s32.totalorder %s19, 0
    %p109 = por %p107, %p108
    %s111 = sadd.s32 %s110, 1
    %p114 = scmp.eq.s32.totalorder %s13, 1
    %p115 = scmp.ne.s32.totalorder %s110, %s112
    %p116 = scmp.eq.s32.totalorder %s13, 0
    %p117 = por %p115, %p116
    %p118 = scmp.ne.s32.totalorder %s110, %s112
    %p119 = scmp.eq.s32.totalorder %s18, 1
    %p120 = por %p118, %p119
    %p121 = scmp.ne.s32.totalorder %s112, %s113
    %p122 = scmp.eq.s32.totalorder %s18, 0
    %p123 = por %p121, %p122
    %p124 = scmp.ne.s32.totalorder %s112, %s113
    %p125 = scmp.eq.s32.totalorder %s19, 1
    %p126 = por %p124, %p125
    %p128 = scmp.ne.s32.totalorder %s113, %s127
    %p129 = scmp.eq.s32.totalorder %s19, 0
    %p130 = por %p128, %p129
    %s132 = sadd.s32 %s131, 1
    %p135 = scmp.eq.s32.totalorder %s13, 1
    %p136 = scmp.ne.s32.totalorder %s131, %s133
    %p137 = scmp.eq.s32.totalorder %s13, 0
    %p138 = por %p136, %p137
    %p139 = scmp.ne.s32.totalorder %s131, %s133
    %p140 = scmp.eq.s32.totalorder %s18, 1
    %p141 = por %p139, %p140
    %p142 = scmp.ne.s32.totalorder %s133, %s134
    %p143 = scmp.eq.s32.totalorder %s18, 0
    %p144 = por %p142, %p143
    %p145 = scmp.ne.s32.totalorder %s133, %s134
    %p146 = scmp.eq.s32.totalorder %s19, 1
    %p147 = por %p145, %p146
    %p149 = scmp.ne.s32.totalorder %s134, %s148
    %p150 = scmp.eq.s32.totalorder %s19, 0
    %p151 = por %p149, %p150
    %s153 = sadd.s32 %s152, 1
    %p156 = scmp.eq.s32.totalorder %s13, 1
    %p157 = scmp.ne.s32.totalorder %s152, %s154
    %p158 = scmp.eq.s32.totalorder %s13, 0
    %p159 = por %p157, %p158
    %p160 = scmp.ne.s32.totalorder %s152, %s154
    %p161 = scmp.eq.s32.totalorder %s18, 1
    %p162 = por %p160, %p161
    %p163 = scmp.ne.s32.totalorder %s154, %s155
    %p164 = scmp.eq.s32.totalorder %s18, 0
    %p165 = por %p163, %p164
    %p166 = scmp.ne.s32.totalorder %s154, %s155
    %p167 = scmp.eq.s32.totalorder %s19, 1
    %p168 = por %p166, %p167
    %p170 = scmp.ne.s32.totalorder %s155, %s169
    %p171 = scmp.eq.s32.totalorder %s19, 0
    %p172 = por %p170, %p171
    %s173 = ssub.s32 %s13, %s20
    %p174 = scmp.eq.s32.totalorder %s173, 0
    %s176 = sadd.s32 %s175, 1
    %s177 = scalar_select %p174, %s175, %s176
    %p180 = pneg %p174
    %p181 = scmp.eq.s32.totalorder %s13, 1
    %p182 = por %p180, %p181
    %p183 = scmp.ne.s32.totalorder %s175, %s178
    %p184 = scmp.eq.s32.totalorder %s13, 0
    %p185 = por %p183, %p184
    %p186 = scmp.ne.s32.totalorder %s175, %s178
    %p187 = scmp.eq.s32.totalorder %s18, 1
    %p188 = por %p186, %p187
    %p189 = scmp.ne.s32.totalorder %s178, %s179
    %p190 = scmp.eq.s32.totalorder %s18, 0
    %p191 = por %p189, %p190
    %p192 = scmp.ne.s32.totalorder %s178, %s179
    %p193 = scmp.eq.s32.totalorder %s19, 1
    %p194 = por %p192, %p193
    %p196 = scmp.ne.s32.totalorder %s179, %s195
    %p197 = scmp.eq.s32.totalorder %s19, 0
    %p198 = por %p196, %p197
    %p199 = scmp.le.s32.totalorder 1, %s13
    %p200 = scmp.lt.s32.totalorder %s13, 3
    %p201 = pnand %p199, %p200
    %p202 = pneg %p201
    // Predicated region
    $region9: #{_lambda_.2} parent=5 // pred_check
      _
    $region10: #{_lambda_.2} parent=5 // pred_check_branch
      %204 = sbr.rel (%p201) target = $region12
    $region11: #{_lambda_.2} parent=5 // pred_region
      %s205 = ssub.s32 %s13, 1
      // Predicated region
      $region13: #{_lambda_.2} parent=11 // pred_check
        %p206 = pneg %p60
      $region14: #{_lambda_.2} parent=11 // pred_check_branch
        %208 = sbr.rel (%p206) target = $region16
      $region15: #{_lambda_.2} parent=11 // pred_region
        _
      $region16: #{_lambda_.2} parent=11 // pred_fallthru
        _
      // Predicated region
      $region17: #{_lambda_.2} parent=11 // pred_check
        %p209 = pneg %p81
      $region18: #{_lambda_.2} parent=11 // pred_check_branch
        %211 = sbr.rel (%p209) target = $region20
      $region19: #{_lambda_.2} parent=11 // pred_region
        _
      $region20: #{_lambda_.2} parent=11 // pred_fallthru
        _
      // Predicated region
      $region21: #{_lambda_.2} parent=11 // pred_check
        %p212 = pneg %p102
      $region22: #{_lambda_.2} parent=11 // pred_check_branch
        %214 = sbr.rel (%p212) target = $region24
      $region23: #{_lambda_.2} parent=11 // pred_region
        _
      $region24: #{_lambda_.2} parent=11 // pred_fallthru
        _
      // Predicated region
      $region25: #{_lambda_.2} parent=11 // pred_check
        %p215 = pneg %p123
      $region26: #{_lambda_.2} parent=11 // pred_check_branch
        %217 = sbr.rel (%p215) target = $region28
      $region27: #{_lambda_.2} parent=11 // pred_region
        _
      $region28: #{_lambda_.2} parent=11 // pred_fallthru
        _
      // Predicated region
      $region29: #{_lambda_.2} parent=11 // pred_check
        %p218 = pneg %p144
      $region30: #{_lambda_.2} parent=11 // pred_check_branch
        %220 = sbr.rel (%p218) target = $region32
      $region31: #{_lambda_.2} parent=11 // pred_region
        _
      $region32: #{_lambda_.2} parent=11 // pred_fallthru
        _
      // Predicated region
      $region33: #{_lambda_.2} parent=11 // pred_check
        %p221 = pneg %p165
      $region34: #{_lambda_.2} parent=11 // pred_check_branch
        %223 = sbr.rel (%p221) target = $region36
      $region35: #{_lambda_.2} parent=11 // pred_region
        _
      $region36: #{_lambda_.2} parent=11 // pred_fallthru
        _
    $region12: #{_lambda_.2} parent=5 // pred_fallthru
      _
    %p224 = scmp.lt.s32.totalorder %s13, 2
    // Predicated region
    $region37: #{_lambda_.2} parent=5 // pred_check
      %p225 = pneg %p224
    $region38: #{_lambda_.2} parent=5 // pred_check_branch
      %227 = sbr.rel (%p225) target = $region40
    $region39: #{_lambda_.2} parent=5 // pred_region
      // Predicated region
      $region41: #{_lambda_.2} parent=39 // pred_check
        %p228 = pneg %p33
      $region42: #{_lambda_.2} parent=39 // pred_check_branch
        %230 = sbr.rel (%p228) target = $region44
      $region43: #{_lambda_.2} parent=39 // pred_region
        %p231 = scmp.lt.s32.totalorder %s13, 1
        %s232 = scalar_select %p231, %s13, 1
        %s233 = smul.addr %s232, 72
        %s234 = smul.addr %s233, 4
        %s235 = scalar_lea.vmem %s0, %s234
      $region44: #{_lambda_.2} parent=39 // pred_fallthru
        _
    $region40: #{_lambda_.2} parent=5 // pred_fallthru
      _
    %p236 = scmp.le.s32.totalorder 1, %s13
    %p237 = scmp.lt.s32.totalorder %s13, 3
    %p238 = pnand %p236, %p237
    %p239 = pneg %p238
    // Predicated region
    $region45: #{_lambda_.2} parent=5 // pred_check
      _
    $region46: #{_lambda_.2} parent=5 // pred_check_branch
      %241 = sbr.rel (%p238) target = $region48
    $region47: #{_lambda_.2} parent=5 // pred_region
      %s242 = ssub.s32 %s13, 1
      %p243 = scmp.lt.s32.totalorder %s18, 1
      %s244 = scalar_select %p243, %s18, 1
      %s245 = smul.addr %s244, 72
      %s246 = smul.addr %s245, 4
      %s247 = scalar_lea.vmem %s0, %s246
      %p248 = pneg %p39
      %p249 = pneg %p36
      %p250 = pneg %p60
      %p251 = pneg %p57
      %p252 = pneg %p81
      %p253 = pneg %p78
      %p254 = pneg %p102
      %p255 = pneg %p99
      %p256 = pneg %p123
      %p257 = pneg %p120
      %p258 = pneg %p144
      %p259 = pneg %p141
      %p260 = pneg %p165
      %p261 = pneg %p162
      %p262 = pneg %p191
      %p263 = pneg %p188
      %p264 = scmp.lt.s32.totalorder %s18, 1
      %s265 = scalar_select %p264, %s18, 1
      %s266 = smul.addr %s265, 8
      %s267 = smul.addr %s266, 4
      %s268 = scalar_lea.vmem %s7, %s267
      %p269 = scmp.lt.s32.totalorder %s18, 1
      %s270 = scalar_select %p269, %s18, 1
      %s271 = smul.addr %s270, 72
      %s272 = smul.addr %s271, 4
      %s273 = scalar_lea.vmem %s0, %s272
      %p274 = scmp.lt.s32.totalorder %s18, 1
      %s275 = scalar_select %p274, %s18, 1
      %s276 = smul.addr %s275, 8
      %s277 = smul.addr %s276, 4
      %s278 = scalar_lea.vmem %s7, %s277
      %v280 = vld [vmem:[%s2] sm:$0x1]
      %v282 = vlaneseq
      %v283 = vshrl.u32 %v282, 7
      %v284 = vsub.s32 0, %v283
      %v285 = vrot.slane %v280, %v284
      %vm287 = vcmask 64512
      %288 = vst.msk [vmem:[#allocation3] sm:$0xff] %vm287, %v285
      %289 = vst.msk [vmem:[#allocation3 + $0x8] sm:$0xff] %vm287, %v285
      %290 = vst.msk [vmem:[#allocation3 + $0x10] sm:$0xff] %vm287, %v285
      %291 = vst.msk [vmem:[#allocation3 + $0x18] sm:$0xff] %vm287, %v285
      %292 = vst.msk [vmem:[#allocation3 + $0x20] sm:$0xff] %vm287, %v285
      %293 = vst.msk [vmem:[#allocation3 + $0x28] sm:$0xff] %vm287, %v285
      %294 = vst.msk [vmem:[#allocation3 + $0x30] sm:$0xff] %vm287, %v285
      %295 = vst.msk [vmem:[#allocation3 + $0x38] sm:$0xff] %vm287, %v285
      %v296 = vld [vmem:[%s273] sm:$0xf]
      %v297 = vld [vmem:[%s273 + $0x8] sm:$0xf]
      %v298 = vld [vmem:[%s273 + $0x10] sm:$0xf]
      %v299 = vld [vmem:[%s273 + $0x18] sm:$0xf]
      %v300 = vld [vmem:[%s273 + $0x20] sm:$0xf]
      %v301 = vld [vmem:[%s273 + $0x28] sm:$0xf]
      %v302 = vld [vmem:[%s273 + $0x30] sm:$0xf]
      %v303 = vld [vmem:[%s273 + $0x38] sm:$0xf]
      %v312 = vunpack.c.l.b16 %v296
      %v313 = vunpack.c.l.b16 %v297
      %v314 = vunpack.c.l.b16 %v298
      %v315 = vunpack.c.l.b16 %v299
      %v316 = vunpack.c.l.b16 %v300
      %v317 = vunpack.c.l.b16 %v301
      %v318 = vunpack.c.l.b16 %v302
      %v319 = vunpack.c.l.b16 %v303
      %v320 = vpack.c.b16 %v313, %v312
      %v321 = vpack.c.b16 %v315, %v314
      %v322 = vpack.c.b16 %v317, %v316
      %v323 = vpack.c.b16 %v319, %v318
      %vm328 = vcmask 31744
      %329 = vst.msk [vmem:[#allocation4] sm:$0xff] %vm328, %v320
      %330 = vst.msk [vmem:[#allocation4 + $0x8] sm:$0xff] %vm328, %v321
      %331 = vst.msk [vmem:[#allocation4 + $0x10] sm:$0xff] %vm328, %v322
      %332 = vst.msk [vmem:[#allocation4 + $0x18] sm:$0xff] %vm328, %v323
      %s333 = scalar_lea.vmem %s273, 72
      %v334 = vld [vmem:[%s333] sm:$0xf]
      %v335 = vld [vmem:[%s333 + $0x8] sm:$0xf]
      %v336 = vld [vmem:[%s333 + $0x10] sm:$0xf]
      %v337 = vld [vmem:[%s333 + $0x18] sm:$0xf]
      %v338 = vld [vmem:[%s333 + $0x20] sm:$0xf]
      %v339 = vld [vmem:[%s333 + $0x28] sm:$0xf]
      %v340 = vld [vmem:[%s333 + $0x30] sm:$0xf]
      %v341 = vld [vmem:[%s333 + $0x38] sm:$0xf]
      %v350 = vunpack.c.l.b16 %v334
      %v351 = vunpack.c.l.b16 %v335
      %v352 = vunpack.c.l.b16 %v336
      %v353 = vunpack.c.l.b16 %v337
      %v354 = vunpack.c.l.b16 %v338
      %v355 = vunpack.c.l.b16 %v339
      %v356 = vunpack.c.l.b16 %v340
      %v357 = vunpack.c.l.b16 %v341
      %v358 = vpack.c.b16 %v351, %v350
      %v359 = vpack.c.b16 %v353, %v352
      %v360 = vpack.c.b16 %v355, %v354
      %v361 = vpack.c.b16 %v357, %v356
      %362 = vrot.lane.b32.xlu0 %v358, 4
      %v363 = vpop.permute.xlu0 %362
      %364 = vrot.lane.b32.xlu0 %v359, 4
      %v365 = vpop.permute.xlu0 %364
      %366 = vrot.lane.b32.xlu0 %v360, 4
      %v367 = vpop.permute.xlu0 %366
      %368 = vrot.lane.b32.xlu0 %v361, 4
      %v369 = vpop.permute.xlu0 %368
      %vm374 = vcmask 64544
      %375 = vst.msk [vmem:[#allocation4] sm:$0xff] %vm374, %v363
      %376 = vst.msk [vmem:[#allocation4 + $0x8] sm:$0xff] %vm374, %v365
      %377 = vst.msk [vmem:[#allocation4 + $0x10] sm:$0xff] %vm374, %v367
      %378 = vst.msk [vmem:[#allocation4 + $0x18] sm:$0xff] %vm374, %v369
      %v379 = vld [vmem:[%s273] sm:$0xf]
      %v380 = vld [vmem:[%s273 + $0x4] sm:$0x1]
      %v381 = vld [vmem:[%s273 + $0x8] sm:$0xf]
      %v382 = vld [vmem:[%s273 + $0xc] sm:$0x1]
      %v383 = vld [vmem:[%s273 + $0x10] sm:$0xf]
      %v384 = vld [vmem:[%s273 + $0x14] sm:$0x1]
      %v385 = vld [vmem:[%s273 + $0x18] sm:$0xf]
      %v386 = vld [vmem:[%s273 + $0x1c] sm:$0x1]
      %v387 = vld [vmem:[%s273 + $0x20] sm:$0xf]
      %v388 = vld [vmem:[%s273 + $0x24] sm:$0x1]
      %v389 = vld [vmem:[%s273 + $0x28] sm:$0xf]
      %v390 = vld [vmem:[%s273 + $0x2c] sm:$0x1]
      %v391 = vld [vmem:[%s273 + $0x30] sm:$0xf]
      %v392 = vld [vmem:[%s273 + $0x34] sm:$0x1]
      %v393 = vld [vmem:[%s273 + $0x38] sm:$0xf]
      %v394 = vld [vmem:[%s273 + $0x3c] sm:$0x1]
      %vm395 = vsmask.f32 3328
      %vm396 = vsmask.f32 7440
      %vm397 = vmor %vm395, %vm396
      %v399 = vshrl.u32 %v379, 16
      %v401 = vrot.slane %v399, 4
      %v402 = vshll.u32 %v379, 16
      %v404 = vrot.slane %v402, 5
      %v405 = vor.u32 %v401, %v404
      %v406 = vrot.slane %v405, 4
      %v408 = vshll.u32 %v380, 16
      %v410 = vrot.slane %v408, 5
      %v411 = vsel %vm397, %v406, %v410
      %v413 = vshrl.u32 %v381, 16
      %v415 = vrot.slane %v413, 4
      %v416 = vshll.u32 %v381, 16
      %v418 = vrot.slane %v416, 5
      %v419 = vor.u32 %v415, %v418
      %v420 = vrot.slane %v419, 4
      %v422 = vshll.u32 %v382, 16
      %v424 = vrot.slane %v422, 5
      %v425 = vsel %vm397, %v420, %v424
      %v427 = vshrl.u32 %v383, 16
      %v429 = vrot.slane %v427, 4
      %v430 = vshll.u32 %v383, 16
      %v432 = vrot.slane %v430, 5
      %v433 = vor.u32 %v429, %v432
      %v434 = vrot.slane %v433, 4
      %v436 = vshll.u32 %v384, 16
      %v438 = vrot.slane %v436, 5
      %v439 = vsel %vm397, %v434, %v438
      %v441 = vshrl.u32 %v385, 16
      %v443 = vrot.slane %v441, 4
      %v444 = vshll.u32 %v385, 16
      %v446 = vrot.slane %v444, 5
      %v447 = vor.u32 %v443, %v446
      %v448 = vrot.slane %v447, 4
      %v450 = vshll.u32 %v386, 16
      %v452 = vrot.slane %v450, 5
      %v453 = vsel %vm397, %v448, %v452
      %v455 = vshrl.u32 %v387, 16
      %v457 = vrot.slane %v455, 4
      %v458 = vshll.u32 %v387, 16
      %v460 = vrot.slane %v458, 5
      %v461 = vor.u32 %v457, %v460
      %v462 = vrot.slane %v461, 4
      %v464 = vshll.u32 %v388, 16
      %v466 = vrot.slane %v464, 5
      %v467 = vsel %vm397, %v462, %v466
      %v469 = vshrl.u32 %v389, 16
      %v471 = vrot.slane %v469, 4
      %v472 = vshll.u32 %v389, 16
      %v474 = vrot.slane %v472, 5
      %v475 = vor.u32 %v471, %v474
      %v476 = vrot.slane %v475, 4
      %v478 = vshll.u32 %v390, 16
      %v480 = vrot.slane %v478, 5
      %v481 = vsel %vm397, %v476, %v480
      %v483 = vshrl.u32 %v391, 16
      %v485 = vrot.slane %v483, 4
      %v486 = vshll.u32 %v391, 16
      %v488 = vrot.slane %v486, 5
      %v489 = vor.u32 %v485, %v488
      %v490 = vrot.slane %v489, 4
      %v492 = vshll.u32 %v392, 16
      %v494 = vrot.slane %v492, 5
      %v495 = vsel %vm397, %v490, %v494
      %v497 = vshrl.u32 %v393, 16
      %v499 = vrot.slane %v497, 4
      %v500 = vshll.u32 %v393, 16
      %v502 = vrot.slane %v500, 5
      %v503 = vor.u32 %v499, %v502
      %v504 = vrot.slane %v503, 4
      %v506 = vshll.u32 %v394, 16
      %v508 = vrot.slane %v506, 5
      %v509 = vsel %vm397, %v504, %v508
      %v510 = vunpack.c.l.b16 %v411
      %v511 = vunpack.c.l.b16 %v425
      %v512 = vunpack.c.l.b16 %v439
      %v513 = vunpack.c.l.b16 %v453
      %v514 = vunpack.c.l.b16 %v467
      %v515 = vunpack.c.l.b16 %v481
      %v516 = vunpack.c.l.b16 %v495
      %v517 = vunpack.c.l.b16 %v509
      %v518 = vpack.c.b16 %v511, %v510
      %v519 = vpack.c.b16 %v513, %v512
      %v520 = vpack.c.b16 %v515, %v514
      %v521 = vpack.c.b16 %v517, %v516
      %522 = vrot.lane.b32.xlu0 %v518, 8
      %v523 = vpop.permute.xlu0 %522
      %524 = vrot.lane.b32.xlu0 %v519, 8
      %v525 = vpop.permute.xlu0 %524
      %526 = vrot.lane.b32.xlu0 %v520, 8
      %v527 = vpop.permute.xlu0 %526
      %528 = vrot.lane.b32.xlu0 %v521, 8
      %v529 = vpop.permute.xlu0 %528
      %vm534 = vcmask 97344
      %535 = vst.msk [vmem:[#allocation4] sm:$0xff] %vm534, %v523
      %536 = vst.msk [vmem:[#allocation4 + $0x8] sm:$0xff] %vm534, %v525
      %537 = vst.msk [vmem:[#allocation4 + $0x10] sm:$0xff] %vm534, %v527
      %538 = vst.msk [vmem:[#allocation4 + $0x18] sm:$0xff] %vm534, %v529
      %s539 = scalar_lea.vmem %s273, 144
      %v540 = vld [vmem:[%s539] sm:$0xf]
      %v541 = vld [vmem:[%s539 + $0x8] sm:$0xf]
      %v542 = vld [vmem:[%s539 + $0x10] sm:$0xf]
      %v543 = vld [vmem:[%s539 + $0x18] sm:$0xf]
      %v544 = vld [vmem:[%s539 + $0x20] sm:$0xf]
      %v545 = vld [vmem:[%s539 + $0x28] sm:$0xf]
      %v546 = vld [vmem:[%s539 + $0x30] sm:$0xf]
      %v547 = vld [vmem:[%s539 + $0x38] sm:$0xf]
      %v556 = vunpack.c.l.b16 %v540
      %v557 = vunpack.c.l.b16 %v541
      %v558 = vunpack.c.l.b16 %v542
      %v559 = vunpack.c.l.b16 %v543
      %v560 = vunpack.c.l.b16 %v544
      %v561 = vunpack.c.l.b16 %v545
      %v562 = vunpack.c.l.b16 %v546
      %v563 = vunpack.c.l.b16 %v547
      %v564 = vpack.c.b16 %v557, %v556
      %v565 = vpack.c.b16 %v559, %v558
      %v566 = vpack.c.b16 %v561, %v560
      %v567 = vpack.c.b16 %v563, %v562
      %568 = vrot.lane.b32.xlu0 %v564, 12
      %v569 = vpop.permute.xlu0 %568
      %570 = vrot.lane.b32.xlu0 %v565, 12
      %v571 = vpop.permute.xlu0 %570
      %572 = vrot.lane.b32.xlu0 %v566, 12
      %v573 = vpop.permute.xlu0 %572
      %574 = vrot.lane.b32.xlu0 %v567, 12
      %v575 = vpop.permute.xlu0 %574
      %vm580 = vcmask 130144
      %581 = vst.msk [vmem:[#allocation4] sm:$0xff] %vm580, %v569
      %582 = vst.msk [vmem:[#allocation4 + $0x8] sm:$0xff] %vm580, %v571
      %583 = vst.msk [vmem:[#allocation4 + $0x10] sm:$0xff] %vm580, %v573
      %584 = vst.msk [vmem:[#allocation4 + $0x18] sm:$0xff] %vm580, %v575
      %s585 = scalar_lea.vmem %s273, 216
      %v586 = vld [vmem:[%s585] sm:$0xf]
      %v587 = vld [vmem:[%s585 + $0x8] sm:$0xf]
      %v588 = vld [vmem:[%s585 + $0x10] sm:$0xf]
      %v589 = vld [vmem:[%s585 + $0x18] sm:$0xf]
      %v590 = vld [vmem:[%s585 + $0x20] sm:$0xf]
      %v591 = vld [vmem:[%s585 + $0x28] sm:$0xf]
      %v592 = vld [vmem:[%s585 + $0x30] sm:$0xf]
      %v593 = vld [vmem:[%s585 + $0x38] sm:$0xf]
      %v602 = vunpack.c.l.b16 %v586
      %v603 = vunpack.c.l.b16 %v587
      %v604 = vunpack.c.l.b16 %v588
      %v605 = vunpack.c.l.b16 %v589
      %v606 = vunpack.c.l.b16 %v590
      %v607 = vunpack.c.l.b16 %v591
      %v608 = vunpack.c.l.b16 %v592
      %v609 = vunpack.c.l.b16 %v593
      %v610 = vpack.c.b16 %v603, %v602
      %v611 = vpack.c.b16 %v605, %v604
      %v612 = vpack.c.b16 %v607, %v606
      %v613 = vpack.c.b16 %v609, %v608
      %614 = vrot.lane.b32.xlu0 %v610, 16
      %v615 = vpop.permute.xlu0 %614
      %616 = vrot.lane.b32.xlu0 %v611, 16
      %v617 = vpop.permute.xlu0 %616
      %618 = vrot.lane.b32.xlu0 %v612, 16
      %v619 = vpop.permute.xlu0 %618
      %620 = vrot.lane.b32.xlu0 %v613, 16
      %v621 = vpop.permute.xlu0 %620
      %vm626 = vcmask 162944
      %627 = vst.msk [vmem:[#allocation4] sm:$0xff] %vm626, %v615
      %628 = vst.msk [vmem:[#allocation4 + $0x8] sm:$0xff] %vm626, %v617
      %629 = vst.msk [vmem:[#allocation4 + $0x10] sm:$0xff] %vm626, %v619
      %630 = vst.msk [vmem:[#allocation4 + $0x18] sm:$0xff] %vm626, %v621
      %v631 = vld [vmem:[%s539] sm:$0xf]
      %v632 = vld [vmem:[%s539 + $0x4] sm:$0x1]
      %v633 = vld [vmem:[%s539 + $0x8] sm:$0xf]
      %v634 = vld [vmem:[%s539 + $0xc] sm:$0x1]
      %v635 = vld [vmem:[%s539 + $0x10] sm:$0xf]
      %v636 = vld [vmem:[%s539 + $0x14] sm:$0x1]
      %v637 = vld [vmem:[%s539 + $0x18] sm:$0xf]
      %v638 = vld [vmem:[%s539 + $0x1c] sm:$0x1]
      %v639 = vld [vmem:[%s539 + $0x20] sm:$0xf]
      %v640 = vld [vmem:[%s539 + $0x24] sm:$0x1]
      %v641 = vld [vmem:[%s539 + $0x28] sm:$0xf]
      %v642 = vld [vmem:[%s539 + $0x2c] sm:$0x1]
      %v643 = vld [vmem:[%s539 + $0x30] sm:$0xf]
      %v644 = vld [vmem:[%s539 + $0x34] sm:$0x1]
      %v645 = vld [vmem:[%s539 + $0x38] sm:$0xf]
      %v646 = vld [vmem:[%s539 + $0x3c] sm:$0x1]
      %v648 = vshrl.u32 %v631, 16
      %v650 = vrot.slane %v648, 4
      %v651 = vshll.u32 %v631, 16
      %v653 = vrot.slane %v651, 5
      %v654 = vor.u32 %v650, %v653
      %v655 = vrot.slane %v654, 4
      %v657 = vshll.u32 %v632, 16
      %v659 = vrot.slane %v657, 5
      %v660 = vsel %vm397, %v655, %v659
      %v662 = vshrl.u32 %v633, 16
      %v664 = vrot.slane %v662, 4
      %v665 = vshll.u32 %v633, 16
      %v667 = vrot.slane %v665, 5
      %v668 = vor.u32 %v664, %v667
      %v669 = vrot.slane %v668, 4
      %v671 = vshll.u32 %v634, 16
      %v673 = vrot.slane %v671, 5
      %v674 = vsel %vm397, %v669, %v673
      %v676 = vshrl.u32 %v635, 16
      %v678 = vrot.slane %v676, 4
      %v679 = vshll.u32 %v635, 16
      %v681 = vrot.slane %v679, 5
      %v682 = vor.u32 %v678, %v681
      %v683 = vrot.slane %v682, 4
      %v685 = vshll.u32 %v636, 16
      %v687 = vrot.slane %v685, 5
      %v688 = vsel %vm397, %v683, %v687
      %v690 = vshrl.u32 %v637, 16
      %v692 = vrot.slane %v690, 4
      %v693 = vshll.u32 %v637, 16
      %v695 = vrot.slane %v693, 5
      %v696 = vor.u32 %v692, %v695
      %v697 = vrot.slane %v696, 4
      %v699 = vshll.u32 %v638, 16
      %v701 = vrot.slane %v699, 5
      %v702 = vsel %vm397, %v697, %v701
      %v704 = vshrl.u32 %v639, 16
      %v706 = vrot.slane %v704, 4
      %v707 = vshll.u32 %v639, 16
      %v709 = vrot.slane %v707, 5
      %v710 = vor.u32 %v706, %v709
      %v711 = vrot.slane %v710, 4
      %v713 = vshll.u32 %v640, 16
      %v715 = vrot.slane %v713, 5
      %v716 = vsel %vm397, %v711, %v715
      %v718 = vshrl.u32 %v641, 16
      %v720 = vrot.slane %v718, 4
      %v721 = vshll.u32 %v641, 16
      %v723 = vrot.slane %v721, 5
      %v724 = vor.u32 %v720, %v723
      %v725 = vrot.slane %v724, 4
      %v727 = vshll.u32 %v642, 16
      %v729 = vrot.slane %v727, 5
      %v730 = vsel %vm397, %v725, %v729
      %v732 = vshrl.u32 %v643, 16
      %v734 = vrot.slane %v732, 4
      %v735 = vshll.u32 %v643, 16
      %v737 = vrot.slane %v735, 5
      %v738 = vor.u32 %v734, %v737
      %v739 = vrot.slane %v738, 4
      %v741 = vshll.u32 %v644, 16
      %v743 = vrot.slane %v741, 5
      %v744 = vsel %vm397, %v739, %v743
      %v746 = vshrl.u32 %v645, 16
      %v748 = vrot.slane %v746, 4
      %v749 = vshll.u32 %v645, 16
      %v751 = vrot.slane %v749, 5
      %v752 = vor.u32 %v748, %v751
      %v753 = vrot.slane %v752, 4
      %v755 = vshll.u32 %v646, 16
      %v757 = vrot.slane %v755, 5
      %v758 = vsel %vm397, %v753, %v757
      %v759 = vunpack.c.l.b16 %v660
      %v760 = vunpack.c.l.b16 %v674
      %v761 = vunpack.c.l.b16 %v688
      %v762 = vunpack.c.l.b16 %v702
      %v763 = vunpack.c.l.b16 %v716
      %v764 = vunpack.c.l.b16 %v730
      %v765 = vunpack.c.l.b16 %v744
      %v766 = vunpack.c.l.b16 %v758
      %v767 = vpack.c.b16 %v760, %v759
      %v768 = vpack.c.b16 %v762, %v761
      %v769 = vpack.c.b16 %v764, %v763
      %v770 = vpack.c.b16 %v766, %v765
      %771 = vrot.lane.b32.xlu0 %v767, 20
      %v772 = vpop.permute.xlu0 %771
      %773 = vrot.lane.b32.xlu0 %v768, 20
      %v774 = vpop.permute.xlu0 %773
      %775 = vrot.lane.b32.xlu0 %v769, 20
      %v776 = vpop.permute.xlu0 %775
      %777 = vrot.lane.b32.xlu0 %v770, 20
      %v778 = vpop.permute.xlu0 %777
      %vm783 = vcmask 195744
      %784 = vst.msk [vmem:[#allocation4] sm:$0xff] %vm783, %v772
      %785 = vst.msk [vmem:[#allocation4 + $0x8] sm:$0xff] %vm783, %v774
      %786 = vst.msk [vmem:[#allocation4 + $0x10] sm:$0xff] %vm783, %v776
      %787 = vst.msk [vmem:[#allocation4 + $0x18] sm:$0xff] %vm783, %v778
      %s788 = scalar_lea.vmem %s273, 8
      %v789 = vld [vmem:[%s788] sm:$0xf]
      %v790 = vld [vmem:[%s788 + $0x8] sm:$0xf]
      %v791 = vld [vmem:[%s788 + $0x10] sm:$0xf]
      %v792 = vld [vmem:[%s788 + $0x18] sm:$0xf]
      %v793 = vld [vmem:[%s788 + $0x20] sm:$0xf]
      %v794 = vld [vmem:[%s788 + $0x28] sm:$0xf]
      %v795 = vld [vmem:[%s788 + $0x30] sm:$0xf]
      %v796 = vld [vmem:[%s788 + $0x38] sm:$0xf]
      %v805 = vunpack.c.l.b16 %v789
      %v806 = vunpack.c.l.b16 %v790
      %v807 = vunpack.c.l.b16 %v791
      %v808 = vunpack.c.l.b16 %v792
      %v809 = vunpack.c.l.b16 %v793
      %v810 = vunpack.c.l.b16 %v794
      %v811 = vunpack.c.l.b16 %v795
      %v812 = vunpack.c.l.b16 %v796
      %v813 = vpack.c.b16 %v806, %v805
      %v814 = vpack.c.b16 %v808, %v807
      %v815 = vpack.c.b16 %v810, %v809
      %v816 = vpack.c.b16 %v812, %v811
      %817 = vrot.lane.b32.xlu0 %v813, 24
      %v818 = vpop.permute.xlu0 %817
      %819 = vrot.lane.b32.xlu0 %v814, 24
      %v820 = vpop.permute.xlu0 %819
      %821 = vrot.lane.b32.xlu0 %v815, 24
      %v822 = vpop.permute.xlu0 %821
      %823 = vrot.lane.b32.xlu0 %v816, 24
      %v824 = vpop.permute.xlu0 %823
      %vm829 = vcmask 228544
      %830 = vst.msk [vmem:[#allocation4] sm:$0xff] %vm829, %v818
      %831 = vst.msk [vmem:[#allocation4 + $0x8] sm:$0xff] %vm829, %v820
      %832 = vst.msk [vmem:[#allocation4 + $0x10] sm:$0xff] %vm829, %v822
      %833 = vst.msk [vmem:[#allocation4 + $0x18] sm:$0xff] %vm829, %v824
      %s834 = scalar_lea.vmem %s273, 80
      %v835 = vld [vmem:[%s834] sm:$0xf]
      %v836 = vld [vmem:[%s834 + $0x8] sm:$0xf]
      %v837 = vld [vmem:[%s834 + $0x10] sm:$0xf]
      %v838 = vld [vmem:[%s834 + $0x18] sm:$0xf]
      %v839 = vld [vmem:[%s834 + $0x20] sm:$0xf]
      %v840 = vld [vmem:[%s834 + $0x28] sm:$0xf]
      %v841 = vld [vmem:[%s834 + $0x30] sm:$0xf]
      %v842 = vld [vmem:[%s834 + $0x38] sm:$0xf]
      %v851 = vunpack.c.l.b16 %v835
      %v852 = vunpack.c.l.b16 %v836
      %v853 = vunpack.c.l.b16 %v837
      %v854 = vunpack.c.l.b16 %v838
      %v855 = vunpack.c.l.b16 %v839
      %v856 = vunpack.c.l.b16 %v840
      %v857 = vunpack.c.l.b16 %v841
      %v858 = vunpack.c.l.b16 %v842
      %v859 = vpack.c.b16 %v852, %v851
      %v860 = vpack.c.b16 %v854, %v853
      %v861 = vpack.c.b16 %v856, %v855
      %v862 = vpack.c.b16 %v858, %v857
      %863 = vrot.lane.b32.xlu0 %v859, 28
      %v864 = vpop.permute.xlu0 %863
      %865 = vrot.lane.b32.xlu0 %v860, 28
      %v866 = vpop.permute.xlu0 %865
      %867 = vrot.lane.b32.xlu0 %v861, 28
      %v868 = vpop.permute.xlu0 %867
      %869 = vrot.lane.b32.xlu0 %v862, 28
      %v870 = vpop.permute.xlu0 %869
      %vm875 = vcmask 261344
      %876 = vst.msk [vmem:[#allocation4] sm:$0xff] %vm875, %v864
      %877 = vst.msk [vmem:[#allocation4 + $0x8] sm:$0xff] %vm875, %v866
      %878 = vst.msk [vmem:[#allocation4 + $0x10] sm:$0xff] %vm875, %v868
      %879 = vst.msk [vmem:[#allocation4 + $0x18] sm:$0xff] %vm875, %v870
      %v880 = vld [vmem:[%s788] sm:$0xf]
      %v881 = vld [vmem:[%s788 + $0x4] sm:$0x1]
      %v882 = vld [vmem:[%s788 + $0x8] sm:$0xf]
      %v883 = vld [vmem:[%s788 + $0xc] sm:$0x1]
      %v884 = vld [vmem:[%s788 + $0x10] sm:$0xf]
      %v885 = vld [vmem:[%s788 + $0x14] sm:$0x1]
      %v886 = vld [vmem:[%s788 + $0x18] sm:$0xf]
      %v887 = vld [vmem:[%s788 + $0x1c] sm:$0x1]
      %v888 = vld [vmem:[%s788 + $0x20] sm:$0xf]
      %v889 = vld [vmem:[%s788 + $0x24] sm:$0x1]
      %v890 = vld [vmem:[%s788 + $0x28] sm:$0xf]
      %v891 = vld [vmem:[%s788 + $0x2c] sm:$0x1]
      %v892 = vld [vmem:[%s788 + $0x30] sm:$0xf]
      %v893 = vld [vmem:[%s788 + $0x34] sm:$0x1]
      %v894 = vld [vmem:[%s788 + $0x38] sm:$0xf]
      %v895 = vld [vmem:[%s788 + $0x3c] sm:$0x1]
      %v897 = vshrl.u32 %v880, 16
      %v899 = vrot.slane %v897, 4
      %v900 = vshll.u32 %v880, 16
      %v902 = vrot.slane %v900, 5
      %v903 = vor.u32 %v899, %v902
      %v904 = vrot.slane %v903, 4
      %v906 = vshll.u32 %v881, 16
      %v908 = vrot.slane %v906, 5
      %v909 = vsel %vm397, %v904, %v908
      %v911 = vshrl.u32 %v882, 16
      %v913 = vrot.slane %v911, 4
      %v914 = vshll.u32 %v882, 16
      %v916 = vrot.slane %v914, 5
      %v917 = vor.u32 %v913, %v916
      %v918 = vrot.slane %v917, 4
      %v920 = vshll.u32 %v883, 16
      %v922 = vrot.slane %v920, 5
      %v923 = vsel %vm397, %v918, %v922
      %v925 = vshrl.u32 %v884, 16
      %v927 = vrot.slane %v925, 4
      %v928 = vshll.u32 %v884, 16
      %v930 = vrot.slane %v928, 5
      %v931 = vor.u32 %v927, %v930
      %v932 = vrot.slane %v931, 4
      %v934 = vshll.u32 %v885, 16
      %v936 = vrot.slane %v934, 5
      %v937 = vsel %vm397, %v932, %v936
      %v939 = vshrl.u32 %v886, 16
      %v941 = vrot.slane %v939, 4
      %v942 = vshll.u32 %v886, 16
      %v944 = vrot.slane %v942, 5
      %v945 = vor.u32 %v941, %v944
      %v946 = vrot.slane %v945, 4
      %v948 = vshll.u32 %v887, 16
      %v950 = vrot.slane %v948, 5
      %v951 = vsel %vm397, %v946, %v950
      %v953 = vshrl.u32 %v888, 16
      %v955 = vrot.slane %v953, 4
      %v956 = vshll.u32 %v888, 16
      %v958 = vrot.slane %v956, 5
      %v959 = vor.u32 %v955, %v958
      %v960 = vrot.slane %v959, 4
      %v962 = vshll.u32 %v889, 16
      %v964 = vrot.slane %v962, 5
      %v965 = vsel %vm397, %v960, %v964
      %v967 = vshrl.u32 %v890, 16
      %v969 = vrot.slane %v967, 4
      %v970 = vshll.u32 %v890, 16
      %v972 = vrot.slane %v970, 5
      %v973 = vor.u32 %v969, %v972
      %v974 = vrot.slane %v973, 4
      %v976 = vshll.u32 %v891, 16
      %v978 = vrot.slane %v976, 5
      %v979 = vsel %vm397, %v974, %v978
      %v981 = vshrl.u32 %v892, 16
      %v983 = vrot.slane %v981, 4
      %v984 = vshll.u32 %v892, 16
      %v986 = vrot.slane %v984, 5
      %v987 = vor.u32 %v983, %v986
      %v988 = vrot.slane %v987, 4
      %v990 = vshll.u32 %v893, 16
      %v992 = vrot.slane %v990, 5
      %v993 = vsel %vm397, %v988, %v992
      %v995 = vshrl.u32 %v894, 16
      %v997 = vrot.slane %v995, 4
      %v998 = vshll.u32 %v894, 16
      %v1000 = vrot.slane %v998, 5
      %v1001 = vor.u32 %v997, %v1000
      %v1002 = vrot.slane %v1001, 4
      %v1004 = vshll.u32 %v895, 16
      %v1006 = vrot.slane %v1004, 5
      %v1007 = vsel %vm397, %v1002, %v1006
      %v1008 = vunpack.c.l.b16 %v909
      %v1009 = vunpack.c.l.b16 %v923
      %v1010 = vunpack.c.l.b16 %v937
      %v1011 = vunpack.c.l.b16 %v951
      %v1012 = vunpack.c.l.b16 %v965
      %v1013 = vunpack.c.l.b16 %v979
      %v1014 = vunpack.c.l.b16 %v993
      %v1015 = vunpack.c.l.b16 %v1007
      %v1016 = vpack.c.b16 %v1009, %v1008
      %v1017 = vpack.c.b16 %v1011, %v1010
      %v1018 = vpack.c.b16 %v1013, %v1012
      %v1019 = vpack.c.b16 %v1015, %v1014
      %1020 = vrot.lane.b32.xlu0 %v1016, 32
      %v1021 = vpop.permute.xlu0 %1020
      %1022 = vrot.lane.b32.xlu0 %v1017, 32
      %v1023 = vpop.permute.xlu0 %1022
      %1024 = vrot.lane.b32.xlu0 %v1018, 32
      %v1025 = vpop.permute.xlu0 %1024
      %1026 = vrot.lane.b32.xlu0 %v1019, 32
      %v1027 = vpop.permute.xlu0 %1026
      %vm1032 = vcmask 294144
      %1033 = vst.msk [vmem:[#allocation4] sm:$0xff] %vm1032, %v1021
      %1034 = vst.msk [vmem:[#allocation4 + $0x8] sm:$0xff] %vm1032, %v1023
      %1035 = vst.msk [vmem:[#allocation4 + $0x10] sm:$0xff] %vm1032, %v1025
      %1036 = vst.msk [vmem:[#allocation4 + $0x18] sm:$0xff] %vm1032, %v1027
      %v1037 = vld [vmem:[#allocation3] sm:$0xff]
      %v1038 = vld [vmem:[#allocation3 + $0x8] sm:$0xff]
      %v1039 = vld [vmem:[#allocation3 + $0x10] sm:$0xff]
      %v1040 = vld [vmem:[#allocation3 + $0x18] sm:$0xff]
      %v1041 = vld [vmem:[#allocation3 + $0x20] sm:$0xff]
      %v1042 = vld [vmem:[#allocation3 + $0x28] sm:$0xff]
      %v1043 = vld [vmem:[#allocation3 + $0x30] sm:$0xff]
      %v1044 = vld [vmem:[#allocation3 + $0x38] sm:$0xff]
      %v1045 = vld [vmem:[#allocation4] sm:$0xff]
      %v1046 = vld [vmem:[#allocation4 + $0x8] sm:$0xff]
      %v1047 = vld [vmem:[#allocation4 + $0x10] sm:$0xff]
      %v1048 = vld [vmem:[#allocation4 + $0x18] sm:$0xff]
      %v1049 = vld [vmem:[%s1] sm:$0xf]
      %v1050 = vld [vmem:[%s1 + $0x4] sm:$0xf]
      %v1051 = vld [vmem:[%s1 + $0x8] sm:$0xf]
      %v1052 = vld [vmem:[%s1 + $0xc] sm:$0xf]
      %v1053 = vld [vmem:[%s1 + $0x10] sm:$0x3]
      %v1059 = vunpack.c.l.b16 %v1049
      %v1060 = vunpack.c.l.b16 %v1050
      %v1061 = vunpack.c.l.b16 %v1051
      %v1062 = vunpack.c.l.b16 %v1052
      %v1063 = vunpack.c.l.b16 %v1053
      %v1064 = vpack.c.b16 %v1060, %v1059
      %v1065 = vpack.c.b16 %v1062, %v1061
      %v1066 = vpack.c.b16 %v1063, %v1063
      %vm1069 = vcmask 293888
      %v1071 = vsel %vm1069, %v1045, 0
      %v1074 = vsel %vm1069, %v1046, 0
      %v1077 = vsel %vm1069, %v1047, 0
      %v1080 = vsel %vm1069, %v1048, 0
      %vm1082 = vcmask 1041408
      %v1084 = vsel %vm1082, %v1066, 0
      %1086 = vmatprep.subr.bf16.mxu0 0
      %1087 = vmatpush1.bf16.msra.mxu0 %v1064
      %1088 = vmatprep.subr.bf16.mxu0 0
      %1089 = vmatpush1.bf16.msra.mxu0 %v1065
      %1090 = vmatprep.subr.bf16.mxu0 0
      %1091 = vmatpush1.bf16.msra.mxu0 %v1084
      %1092 = vmatprep.subr.bf16.mxu0 0
      %1093 = vmatpush1.bf16.msra.mxu0 0
      %1094 = vmatprep.subr.bf16.mxu0 0
      %1095 = vmatpush1.bf16.msra.mxu0 0
      %1096 = vmatprep.subr.bf16.mxu0 0
      %1097 = vmatpush1.bf16.msra.mxu0 0
      %1098 = vmatprep.subr.bf16.mxu0 0
      %1099 = vmatpush1.bf16.msra.mxu0 0
      %1100 = vmatprep.subr.bf16.mxu0 0
      %1101 = vmatpush1.bf16.msra.mxu0 0
      %1102 = vmatprep.subr.bf16.mxu0 0
      %1103 = vmatpush1.bf16.msra.mxu0 0
      %1104 = vmatprep.subr.bf16.mxu0 0
      %1105 = vmatpush1.bf16.msra.mxu0 0
      %1106 = vmatprep.subr.bf16.mxu0 0
      %1107 = vmatpush1.bf16.msra.mxu0 0
      %1108 = vmatprep.subr.bf16.mxu0 0
      %1109 = vmatpush1.bf16.msra.mxu0 0
      %1110 = vmatprep.subr.bf16.mxu0 0
      %1111 = vmatpush1.bf16.msra.mxu0 0
      %1112 = vmatprep.subr.bf16.mxu0 0
      %1113 = vmatpush1.bf16.msra.mxu0 0
      %1114 = vmatprep.subr.bf16.mxu0 0
      %1115 = vmatpush1.bf16.msra.mxu0 0
      %1116 = vmatprep.subr.bf16.mxu0 0
      %1117 = vmatpush1.bf16.msra.mxu0 0
      %1118 = vmatprep.mubr.bf16.mxu0 0
      %1119 = vmatmul.mubr.bf16.gmra.mrb[0].mxu0 %v1071
      %v1120 = vpop.f32.mrb[0].mxu0
      %v1121 = vadd.f32 0.0, %v1120
      %v1122 = vpop.f32.mrb[0].mxu0
      %v1123 = vpop.f32.mrb[0].mxu0
      %v1124 = vadd.f32 0.0, %v1123
      %v1125 = vpop.f32.mrb[0].mxu0
      %1126 = vmatprep.mubr.bf16.mxu0 0
      %1127 = vmatmul.mubr.bf16.gmra.mrb[0].mxu0 %v1074
      %v1128 = vpop.f32.mrb[0].mxu0
      %v1129 = vadd.f32 0.0, %v1128
      %v1130 = vpop.f32.mrb[0].mxu0
      %v1131 = vpop.f32.mrb[0].mxu0
      %v1132 = vadd.f32 0.0, %v1131
      %v1133 = vpop.f32.mrb[0].mxu0
      %1134 = vmatprep.mubr.bf16.mxu0 0
      %1135 = vmatmul.mubr.bf16.gmra.mrb[0].mxu0 %v1077
      %v1136 = vpop.f32.mrb[0].mxu0
      %v1137 = vadd.f32 0.0, %v1136
      %v1138 = vpop.f32.mrb[0].mxu0
      %v1139 = vpop.f32.mrb[0].mxu0
      %v1140 = vadd.f32 0.0, %v1139
      %v1141 = vpop.f32.mrb[0].mxu0
      %1142 = vmatprep.mubr.bf16.mxu0 0
      %1143 = vmatmul.mubr.bf16.gmra.mrb[0].mxu0 %v1080
      %v1144 = vpop.f32.mrb[0].mxu0
      %v1145 = vadd.f32 0.0, %v1144
      %v1146 = vpop.f32.mrb[0].mxu0
      %v1147 = vpop.f32.mrb[0].mxu0
      %v1148 = vadd.f32 0.0, %v1147
      %v1149 = vpop.f32.mrb[0].mxu0
      %1150 = vdwg.mxu0
      %v1151 = vadd.f32 %v1037, %v1121
      %v1152 = vadd.f32 %v1038, %v1124
      %v1153 = vadd.f32 %v1039, %v1129
      %v1154 = vadd.f32 %v1040, %v1132
      %v1155 = vadd.f32 %v1041, %v1137
      %v1156 = vadd.f32 %v1042, %v1140
      %v1157 = vadd.f32 %v1043, %v1145
      %v1158 = vadd.f32 %v1044, %v1148
      %1159 = vst.msk [vmem:[#allocation3] sm:$0xff] %vm287, %v1151
      %1160 = vst.msk [vmem:[#allocation3 + $0x8] sm:$0xff] %vm287, %v1152
      %1161 = vst.msk [vmem:[#allocation3 + $0x10] sm:$0xff] %vm287, %v1153
      %1162 = vst.msk [vmem:[#allocation3 + $0x18] sm:$0xff] %vm287, %v1154
      %1163 = vst.msk [vmem:[#allocation3 + $0x20] sm:$0xff] %vm287, %v1155
      %1164 = vst.msk [vmem:[#allocation3 + $0x28] sm:$0xff] %vm287, %v1156
      %1165 = vst.msk [vmem:[#allocation3 + $0x30] sm:$0xff] %vm287, %v1157
      %1166 = vst.msk [vmem:[#allocation3 + $0x38] sm:$0xff] %vm287, %v1158
      %vm1167 = vcmask 60416
      %1168 = vst.msk [vmem:[#allocation2] sm:$0xf] %vm1167, 0
      %vm1169 = vcmask 57344
      %1170 = vst.msk [vmem:[#allocation2 + $0x4] sm:$0x1] %vm1169, 0
      %1171 = vst.msk [vmem:[#allocation2 + $0x8] sm:$0xf] %vm1167, 0
      %1172 = vst.msk [vmem:[#allocation2 + $0xc] sm:$0x1] %vm1169, 0
      %1173 = vst.msk [vmem:[#allocation2 + $0x10] sm:$0xf] %vm1167, 0
      %1174 = vst.msk [vmem:[#allocation2 + $0x14] sm:$0x1] %vm1169, 0
      %1175 = vst.msk [vmem:[#allocation2 + $0x18] sm:$0xf] %vm1167, 0
      %1176 = vst.msk [vmem:[#allocation2 + $0x1c] sm:$0x1] %vm1169, 0
      %1177 = vst.msk [vmem:[#allocation2 + $0x20] sm:$0xf] %vm1167, 0
      %1178 = vst.msk [vmem:[#allocation2 + $0x24] sm:$0x1] %vm1169, 0
      %1179 = vst.msk [vmem:[#allocation2 + $0x28] sm:$0xf] %vm1167, 0
      %1180 = vst.msk [vmem:[#allocation2 + $0x2c] sm:$0x1] %vm1169, 0
      %1181 = vst.msk [vmem:[#allocation2 + $0x30] sm:$0xf] %vm1167, 0
      %1182 = vst.msk [vmem:[#allocation2 + $0x34] sm:$0x1] %vm1169, 0
      %1183 = vst.msk [vmem:[#allocation2 + $0x38] sm:$0xf] %vm1167, 0
      %1184 = vst.msk [vmem:[#allocation2 + $0x3c] sm:$0x1] %vm1169, 0
      %1185 = vst.msk [vmem:[#allocation2 + $0x40] sm:$0xf] %vm1167, 0
      %1186 = vst.msk [vmem:[#allocation2 + $0x44] sm:$0x1] %vm1169, 0
      %1187 = vst.msk [vmem:[#allocation2 + $0x48] sm:$0xf] %vm1167, 0
      %1188 = vst.msk [vmem:[#allocation2 + $0x4c] sm:$0x1] %vm1169, 0
      %v1189 = vld [vmem:[#allocation3] sm:$0xff]
      %v1190 = vld [vmem:[#allocation3 + $0x8] sm:$0xff]
      %v1191 = vld [vmem:[#allocation3 + $0x10] sm:$0xff]
      %v1192 = vld [vmem:[#allocation3 + $0x18] sm:$0xff]
      %v1193 = vld [vmem:[#allocation3 + $0x20] sm:$0xff]
      %v1194 = vld [vmem:[#allocation3 + $0x28] sm:$0xff]
      %v1195 = vld [vmem:[#allocation3 + $0x30] sm:$0xff]
      %v1196 = vld [vmem:[#allocation3 + $0x38] sm:$0xff]
      %v1197 = vmul.f32 %v1189, 0.25
      %v1198 = vmul.f32 %v1190, 0.25
      %v1199 = vmul.f32 %v1191, 0.25
      %v1200 = vmul.f32 %v1192, 0.25
      %v1201 = vmul.f32 %v1193, 0.25
      %v1202 = vmul.f32 %v1194, 0.25
      %v1203 = vmul.f32 %v1195, 0.25
      %v1204 = vmul.f32 %v1196, 0.25
      %v1205 = vadd.f32 %v1197, 1.49
      %v1206 = vadd.f32 %v1198, 1.49
      %v1207 = vadd.f32 %v1199, 1.49
      %v1208 = vadd.f32 %v1200, 1.49
      %v1209 = vadd.f32 %v1201, 1.49
      %v1210 = vadd.f32 %v1202, 1.49
      %v1211 = vadd.f32 %v1203, 1.49
      %v1212 = vadd.f32 %v1204, 1.49
      %v1213 = vmul.f32 %v1189, %v1205
      %v1214 = vmul.f32 %v1190, %v1206
      %v1215 = vmul.f32 %v1191, %v1207
      %v1216 = vmul.f32 %v1192, %v1208
      %v1217 = vmul.f32 %v1193, %v1209
      %v1218 = vmul.f32 %v1194, %v1210
      %v1219 = vmul.f32 %v1195, %v1211
      %v1220 = vmul.f32 %v1196, %v1212
      %v1221 = vadd.f32 %v1213, 3.05
      %v1222 = vadd.f32 %v1214, 3.05
      %v1223 = vadd.f32 %v1215, 3.05
      %v1224 = vadd.f32 %v1216, 3.05
      %v1225 = vadd.f32 %v1217, 3.05
      %v1226 = vadd.f32 %v1218, 3.05
      %v1227 = vadd.f32 %v1219, 3.05
      %v1228 = vadd.f32 %v1220, 3.05
      %v1229 = vmul.f32 %v1189, %v1221
      %v1230 = vmul.f32 %v1190, %v1222
      %v1231 = vmul.f32 %v1191, %v1223
      %v1232 = vmul.f32 %v1192, %v1224
      %v1233 = vmul.f32 %v1193, %v1225
      %v1234 = vmul.f32 %v1194, %v1226
      %v1235 = vmul.f32 %v1195, %v1227
      %v1236 = vmul.f32 %v1196, %v1228
      %v1237 = vadd.f32 %v1229, 2.32
      %v1238 = vadd.f32 %v1230, 2.32
      %v1239 = vadd.f32 %v1231, 2.32
      %v1240 = vadd.f32 %v1232, 2.32
      %v1241 = vadd.f32 %v1233, 2.32
      %v1242 = vadd.f32 %v1234, 2.32
      %v1243 = vadd.f32 %v1235, 2.32
      %v1244 = vadd.f32 %v1236, 2.32
      %v1245 = vmul.f32 %v1189, %v1237
      %v1246 = vmul.f32 %v1190, %v1238
      %v1247 = vmul.f32 %v1191, %v1239
      %v1248 = vmul.f32 %v1192, %v1240
      %v1249 = vmul.f32 %v1193, %v1241
      %v1250 = vmul.f32 %v1194, %v1242
      %v1251 = vmul.f32 %v1195, %v1243
      %v1252 = vmul.f32 %v1196, %v1244
      %v1253 = vadd.f32 %v1245, 0.62
      %v1254 = vadd.f32 %v1246, 0.62
      %v1255 = vadd.f32 %v1247, 0.62
      %v1256 = vadd.f32 %v1248, 0.62
      %v1257 = vadd.f32 %v1249, 0.62
      %v1258 = vadd.f32 %v1250, 0.62
      %v1259 = vadd.f32 %v1251, 0.62
      %v1260 = vadd.f32 %v1252, 0.62
      %v1261 = vmul.f32 %v1189, %v1253
      %v1262 = vmul.f32 %v1190, %v1254
      %v1263 = vmul.f32 %v1191, %v1255
      %v1264 = vmul.f32 %v1192, %v1256
      %v1265 = vmul.f32 %v1193, %v1257
      %v1266 = vmul.f32 %v1194, %v1258
      %v1267 = vmul.f32 %v1195, %v1259
      %v1268 = vmul.f32 %v1196, %v1260
      %v1269 = vadd.f32 %v1261, 0.03
      %v1270 = vadd.f32 %v1262, 0.03
      %v1271 = vadd.f32 %v1263, 0.03
      %v1272 = vadd.f32 %v1264, 0.03
      %v1273 = vadd.f32 %v1265, 0.03
      %v1274 = vadd.f32 %v1266, 0.03
      %v1275 = vadd.f32 %v1267, 0.03
      %v1276 = vadd.f32 %v1268, 0.03
      %v1277 = vmul.f32 %v1189, 0.05
      %v1278 = vmul.f32 %v1190, 0.05
      %v1279 = vmul.f32 %v1191, 0.05
      %v1280 = vmul.f32 %v1192, 0.05
      %v1281 = vmul.f32 %v1193, 0.05
      %v1282 = vmul.f32 %v1194, 0.05
      %v1283 = vmul.f32 %v1195, 0.05
      %v1284 = vmul.f32 %v1196, 0.05
      %v1285 = vadd.f32 %v1277, 1.2
      %v1286 = vadd.f32 %v1278, 1.2
      %v1287 = vadd.f32 %v1279, 1.2
      %v1288 = vadd.f32 %v1280, 1.2
      %v1289 = vadd.f32 %v1281, 1.2
      %v1290 = vadd.f32 %v1282, 1.2
      %v1291 = vadd.f32 %v1283, 1.2
      %v1292 = vadd.f32 %v1284, 1.2
      %v1293 = vmul.f32 %v1189, %v1285
      %v1294 = vmul.f32 %v1190, %v1286
      %v1295 = vmul.f32 %v1191, %v1287
      %v1296 = vmul.f32 %v1192, %v1288
      %v1297 = vmul.f32 %v1193, %v1289
      %v1298 = vmul.f32 %v1194, %v1290
      %v1299 = vmul.f32 %v1195, %v1291
      %v1300 = vmul.f32 %v1196, %v1292
      %v1301 = vadd.f32 %v1293, 0.25
      %v1302 = vadd.f32 %v1294, 0.25
      %v1303 = vadd.f32 %v1295, 0.25
      %v1304 = vadd.f32 %v1296, 0.25
      %v1305 = vadd.f32 %v1297, 0.25
      %v1306 = vadd.f32 %v1298, 0.25
      %v1307 = vadd.f32 %v1299, 0.25
      %v1308 = vadd.f32 %v1300, 0.25
      %v1309 = vmul.f32 %v1189, %v1301
      %v1310 = vmul.f32 %v1190, %v1302
      %v1311 = vmul.f32 %v1191, %v1303
      %v1312 = vmul.f32 %v1192, %v1304
      %v1313 = vmul.f32 %v1193, %v1305
      %v1314 = vmul.f32 %v1194, %v1306
      %v1315 = vmul.f32 %v1195, %v1307
      %v1316 = vmul.f32 %v1196, %v1308
      %v1317 = vadd.f32 %v1309, 2.4
      %v1318 = vadd.f32 %v1310, 2.4
      %v1319 = vadd.f32 %v1311, 2.4
      %v1320 = vadd.f32 %v1312, 2.4
      %v1321 = vadd.f32 %v1313, 2.4
      %v1322 = vadd.f32 %v1314, 2.4
      %v1323 = vadd.f32 %v1315, 2.4
      %v1324 = vadd.f32 %v1316, 2.4
      %v1325 = vmul.f32 %v1189, %v1317
      %v1326 = vmul.f32 %v1190, %v1318
      %v1327 = vmul.f32 %v1191, %v1319
      %v1328 = vmul.f32 %v1192, %v1320
      %v1329 = vmul.f32 %v1193, %v1321
      %v1330 = vmul.f32 %v1194, %v1322
      %v1331 = vmul.f32 %v1195, %v1323
      %v1332 = vmul.f32 %v1196, %v1324
      %v1333 = vand.u32 2147483647, %v1325
      %v1334 = vand.u32 2147483647, %v1326
      %v1335 = vand.u32 2147483647, %v1327
      %v1336 = vand.u32 2147483647, %v1328
      %v1337 = vand.u32 2147483647, %v1329
      %v1338 = vand.u32 2147483647, %v1330
      %v1339 = vand.u32 2147483647, %v1331
      %v1340 = vand.u32 2147483647, %v1332
      %v1341 = vadd.f32 %v1333, 1.0
      %v1342 = vadd.f32 %v1334, 1.0
      %v1343 = vadd.f32 %v1335, 1.0
      %v1344 = vadd.f32 %v1336, 1.0
      %v1345 = vadd.f32 %v1337, 1.0
      %v1346 = vadd.f32 %v1338, 1.0
      %v1347 = vadd.f32 %v1339, 1.0
      %v1348 = vadd.f32 %v1340, 1.0
      %v1349 = vrcp.pop %v1341
      %v1350 = vrcp.pop %v1342
      %v1351 = vrcp.pop %v1343
      %v1352 = vrcp.pop %v1344
      %v1353 = vrcp.pop %v1345
      %v1354 = vrcp.pop %v1346
      %v1355 = vrcp.pop %v1347
      %v1356 = vrcp.pop %v1348
      %v1357 = vmul.f32 %v1269, %v1349
      %v1358 = vmul.f32 %v1270, %v1350
      %v1359 = vmul.f32 %v1271, %v1351
      %v1360 = vmul.f32 %v1272, %v1352
      %v1361 = vmul.f32 %v1273, %v1353
      %v1362 = vmul.f32 %v1274, %v1354
      %v1363 = vmul.f32 %v1275, %v1355
      %v1364 = vmul.f32 %v1276, %v1356
      %v1365 = vpack.c.bf16 %v1358, %v1357
      %v1366 = vpack.c.bf16 %v1360, %v1359
      %v1367 = vpack.c.bf16 %v1362, %v1361
      %v1368 = vpack.c.bf16 %v1364, %v1363
      %v1373 = vunpack.c.l.b16 %v1365
      %v1374 = vunpack.c.h.b16 %v1365
      %v1375 = vunpack.c.l.b16 %v1366
      %v1376 = vunpack.c.h.b16 %v1366
      %v1377 = vunpack.c.l.b16 %v1367
      %v1378 = vunpack.c.h.b16 %v1367
      %v1379 = vunpack.c.l.b16 %v1368
      %v1380 = vunpack.c.h.b16 %v1368
      %v1381 = vpack.c.b16 %v1373, %v1373
      %v1382 = vpack.c.b16 %v1374, %v1374
      %v1383 = vpack.c.b16 %v1375, %v1375
      %v1384 = vpack.c.b16 %v1376, %v1376
      %v1385 = vpack.c.b16 %v1377, %v1377
      %v1386 = vpack.c.b16 %v1378, %v1378
      %v1387 = vpack.c.b16 %v1379, %v1379
      %v1388 = vpack.c.b16 %v1380, %v1380
      %v1390 = vshrl.u32 %v1381, 16
      %v1392 = vrot.slane %v1390, 7
      %v1393 = vshll.u32 %v1381, 16
      %v1395 = vor.u32 %v1392, %v1393
      %v1396 = vrot.slane %v1392, 4
      %v1398 = vshrl.u32 %v1382, 16
      %v1400 = vrot.slane %v1398, 7
      %v1401 = vshll.u32 %v1382, 16
      %v1403 = vor.u32 %v1400, %v1401
      %v1404 = vrot.slane %v1400, 4
      %v1406 = vshrl.u32 %v1383, 16
      %v1408 = vrot.slane %v1406, 7
      %v1409 = vshll.u32 %v1383, 16
      %v1411 = vor.u32 %v1408, %v1409
      %v1412 = vrot.slane %v1408, 4
      %v1414 = vshrl.u32 %v1384, 16
      %v1416 = vrot.slane %v1414, 7
      %v1417 = vshll.u32 %v1384, 16
      %v1419 = vor.u32 %v1416, %v1417
      %v1420 = vrot.slane %v1416, 4
      %v1422 = vshrl.u32 %v1385, 16
      %v1424 = vrot.slane %v1422, 7
      %v1425 = vshll.u32 %v1385, 16
      %v1427 = vor.u32 %v1424, %v1425
      %v1428 = vrot.slane %v1424, 4
      %v1430 = vshrl.u32 %v1386, 16
      %v1432 = vrot.slane %v1430, 7
      %v1433 = vshll.u32 %v1386, 16
      %v1435 = vor.u32 %v1432, %v1433
      %v1436 = vrot.slane %v1432, 4
      %v1438 = vshrl.u32 %v1387, 16
      %v1440 = vrot.slane %v1438, 7
      %v1441 = vshll.u32 %v1387, 16
      %v1443 = vor.u32 %v1440, %v1441
      %v1444 = vrot.slane %v1440, 4
      %v1446 = vshrl.u32 %v1388, 16
      %v1448 = vrot.slane %v1446, 7
      %v1449 = vshll.u32 %v1388, 16
      %v1451 = vor.u32 %v1448, %v1449
      %v1452 = vrot.slane %v1448, 4
      %s1469 = scalar_lea.vmem [#allocation2], 8
      %vm1470 = vcmask 60416
      %vm1471 = vsmask.f32 7938
      %vm1472 = vmand %vm1470, %vm1471
      %v1473 = vld [vmem:[%s1469] sm:$0xf]
      %v1474 = vsel %vm1472, %v1395, %v1473
      %1475 = vst [vmem:[%s1469] sm:$0xf] %v1474
      %vm1476 = vcmask 57344
      %vm1477 = vsmask.f32 256
      %vm1478 = vmand %vm1476, %vm1477
      %v1479 = vld [vmem:[%s1469 + $0x4] sm:$0x1]
      %v1480 = vsel %vm1478, %v1396, %v1479
      %1481 = vst [vmem:[%s1469 + $0x4] sm:$0x1] %v1480
      %v1482 = vld [vmem:[%s1469 + $0x8] sm:$0xf]
      %v1483 = vsel %vm1472, %v1403, %v1482
      %1484 = vst [vmem:[%s1469 + $0x8] sm:$0xf] %v1483
      %v1485 = vld [vmem:[%s1469 + $0xc] sm:$0x1]
      %v1486 = vsel %vm1478, %v1404, %v1485
      %1487 = vst [vmem:[%s1469 + $0xc] sm:$0x1] %v1486
      %v1488 = vld [vmem:[%s1469 + $0x10] sm:$0xf]
      %v1489 = vsel %vm1472, %v1411, %v1488
      %1490 = vst [vmem:[%s1469 + $0x10] sm:$0xf] %v1489
      %v1491 = vld [vmem:[%s1469 + $0x14] sm:$0x1]
      %v1492 = vsel %vm1478, %v1412, %v1491
      %1493 = vst [vmem:[%s1469 + $0x14] sm:$0x1] %v1492
      %v1494 = vld [vmem:[%s1469 + $0x18] sm:$0xf]
      %v1495 = vsel %vm1472, %v1419, %v1494
      %1496 = vst [vmem:[%s1469 + $0x18] sm:$0xf] %v1495
      %v1497 = vld [vmem:[%s1469 + $0x1c] sm:$0x1]
      %v1498 = vsel %vm1478, %v1420, %v1497
      %1499 = vst [vmem:[%s1469 + $0x1c] sm:$0x1] %v1498
      %v1500 = vld [vmem:[%s1469 + $0x20] sm:$0xf]
      %v1501 = vsel %vm1472, %v1427, %v1500
      %1502 = vst [vmem:[%s1469 + $0x20] sm:$0xf] %v1501
      %v1503 = vld [vmem:[%s1469 + $0x24] sm:$0x1]
      %v1504 = vsel %vm1478, %v1428, %v1503
      %1505 = vst [vmem:[%s1469 + $0x24] sm:$0x1] %v1504
      %v1506 = vld [vmem:[%s1469 + $0x28] sm:$0xf]
      %v1507 = vsel %vm1472, %v1435, %v1506
      %1508 = vst [vmem:[%s1469 + $0x28] sm:$0xf] %v1507
      %v1509 = vld [vmem:[%s1469 + $0x2c] sm:$0x1]
      %v1510 = vsel %vm1478, %v1436, %v1509
      %1511 = vst [vmem:[%s1469 + $0x2c] sm:$0x1] %v1510
      %v1512 = vld [vmem:[%s1469 + $0x30] sm:$0xf]
      %v1513 = vsel %vm1472, %v1443, %v1512
      %1514 = vst [vmem:[%s1469 + $0x30] sm:$0xf] %v1513
      %v1515 = vld [vmem:[%s1469 + $0x34] sm:$0x1]
      %v1516 = vsel %vm1478, %v1444, %v1515
      %1517 = vst [vmem:[%s1469 + $0x34] sm:$0x1] %v1516
      %v1518 = vld [vmem:[%s1469 + $0x38] sm:$0xf]
      %v1519 = vsel %vm1472, %v1451, %v1518
      %1520 = vst [vmem:[%s1469 + $0x38] sm:$0xf] %v1519
      %v1521 = vld [vmem:[%s1469 + $0x3c] sm:$0x1]
      %v1522 = vsel %vm1478, %v1452, %v1521
      %1523 = vst [vmem:[%s1469 + $0x3c] sm:$0x1] %v1522
      %v1524 = vld [vmem:[%s4] sm:$0x1]
      %v1526 = vlaneseq
      %v1527 = vshrl.u32 %v1526, 7
      %v1528 = vsub.s32 0, %v1527
      %v1529 = vrot.slane %v1524, %v1528
      %1531 = vst.msk [vmem:[#allocation3] sm:$0xff] %vm287, %v1529
      %1532 = vst.msk [vmem:[#allocation3 + $0x8] sm:$0xff] %vm287, %v1529
      %1533 = vst.msk [vmem:[#allocation3 + $0x10] sm:$0xff] %vm287, %v1529
      %1534 = vst.msk [vmem:[#allocation3 + $0x18] sm:$0xff] %vm287, %v1529
      %1535 = vst.msk [vmem:[#allocation3 + $0x20] sm:$0xff] %vm287, %v1529
      %1536 = vst.msk [vmem:[#allocation3 + $0x28] sm:$0xff] %vm287, %v1529
      %1537 = vst.msk [vmem:[#allocation3 + $0x30] sm:$0xff] %vm287, %v1529
      %1538 = vst.msk [vmem:[#allocation3 + $0x38] sm:$0xff] %vm287, %v1529
      %v1539 = vld [vmem:[#allocation2] sm:$0xf]
      %v1540 = vld [vmem:[#allocation2 + $0x8] sm:$0xf]
      %v1541 = vld [vmem:[#allocation2 + $0x10] sm:$0xf]
      %v1542 = vld [vmem:[#allocation2 + $0x18] sm:$0xf]
      %v1543 = vld [vmem:[#allocation2 + $0x20] sm:$0xf]
      %v1544 = vld [vmem:[#allocation2 + $0x28] sm:$0xf]
      %v1545 = vld [vmem:[#allocation2 + $0x30] sm:$0xf]
      %v1546 = vld [vmem:[#allocation2 + $0x38] sm:$0xf]
      %v1555 = vunpack.c.l.b16 %v1539
      %v1556 = vunpack.c.l.b16 %v1540
      %v1557 = vunpack.c.l.b16 %v1541
      %v1558 = vunpack.c.l.b16 %v1542
      %v1559 = vunpack.c.l.b16 %v1543
      %v1560 = vunpack.c.l.b16 %v1544
      %v1561 = vunpack.c.l.b16 %v1545
      %v1562 = vunpack.c.l.b16 %v1546
      %v1563 = vpack.c.b16 %v1556, %v1555
      %v1564 = vpack.c.b16 %v1558, %v1557
      %v1565 = vpack.c.b16 %v1560, %v1559
      %v1566 = vpack.c.b16 %v1562, %v1561
      %1571 = vst.msk [vmem:[#allocation4] sm:$0xff] %vm287, %v1563
      %1572 = vst.msk [vmem:[#allocation4 + $0x8] sm:$0xff] %vm287, %v1564
      %1573 = vst.msk [vmem:[#allocation4 + $0x10] sm:$0xff] %vm287, %v1565
      %1574 = vst.msk [vmem:[#allocation4 + $0x18] sm:$0xff] %vm287, %v1566
      %v1575 = vld [vmem:[#allocation2] sm:$0xf]
      %v1576 = vld [vmem:[#allocation2 + $0x4] sm:$0x1]
      %v1577 = vld [vmem:[#allocation2 + $0x8] sm:$0xf]
      %v1578 = vld [vmem:[#allocation2 + $0xc] sm:$0x1]
      %v1579 = vld [vmem:[#allocation2 + $0x10] sm:$0xf]
      %v1580 = vld [vmem:[#allocation2 + $0x14] sm:$0x1]
      %v1581 = vld [vmem:[#allocation2 + $0x18] sm:$0xf]
      %v1582 = vld [vmem:[#allocation2 + $0x1c] sm:$0x1]
      %v1583 = vld [vmem:[#allocation2 + $0x20] sm:$0xf]
      %v1584 = vld [vmem:[#allocation2 + $0x24] sm:$0x1]
      %v1585 = vld [vmem:[#allocation2 + $0x28] sm:$0xf]
      %v1586 = vld [vmem:[#allocation2 + $0x2c] sm:$0x1]
      %v1587 = vld [vmem:[#allocation2 + $0x30] sm:$0xf]
      %v1588 = vld [vmem:[#allocation2 + $0x34] sm:$0x1]
      %v1589 = vld [vmem:[#allocation2 + $0x38] sm:$0xf]
      %v1590 = vld [vmem:[#allocation2 + $0x3c] sm:$0x1]
      %v1592 = vshrl.u32 %v1575, 16
      %v1594 = vrot.slane %v1592, 4
      %v1595 = vshll.u32 %v1575, 16
      %v1597 = vrot.slane %v1595, 5
      %v1598 = vor.u32 %v1594, %v1597
      %v1599 = vrot.slane %v1598, 4
      %v1601 = vshll.u32 %v1576, 16
      %v1603 = vrot.slane %v1601, 5
      %v1604 = vsel %vm397, %v1599, %v1603
      %v1606 = vshrl.u32 %v1577, 16
      %v1608 = vrot.slane %v1606, 4
      %v1609 = vshll.u32 %v1577, 16
      %v1611 = vrot.slane %v1609, 5
      %v1612 = vor.u32 %v1608, %v1611
      %v1613 = vrot.slane %v1612, 4
      %v1615 = vshll.u32 %v1578, 16
      %v1617 = vrot.slane %v1615, 5
      %v1618 = vsel %vm397, %v1613, %v1617
      %v1620 = vshrl.u32 %v1579, 16
      %v1622 = vrot.slane %v1620, 4
      %v1623 = vshll.u32 %v1579, 16
      %v1625 = vrot.slane %v1623, 5
      %v1626 = vor.u32 %v1622, %v1625
      %v1627 = vrot.slane %v1626, 4
      %v1629 = vshll.u32 %v1580, 16
      %v1631 = vrot.slane %v1629, 5
      %v1632 = vsel %vm397, %v1627, %v1631
      %v1634 = vshrl.u32 %v1581, 16
      %v1636 = vrot.slane %v1634, 4
      %v1637 = vshll.u32 %v1581, 16
      %v1639 = vrot.slane %v1637, 5
      %v1640 = vor.u32 %v1636, %v1639
      %v1641 = vrot.slane %v1640, 4
      %v1643 = vshll.u32 %v1582, 16
      %v1645 = vrot.slane %v1643, 5
      %v1646 = vsel %vm397, %v1641, %v1645
      %v1648 = vshrl.u32 %v1583, 16
      %v1650 = vrot.slane %v1648, 4
      %v1651 = vshll.u32 %v1583, 16
      %v1653 = vrot.slane %v1651, 5
      %v1654 = vor.u32 %v1650, %v1653
      %v1655 = vrot.slane %v1654, 4
      %v1657 = vshll.u32 %v1584, 16
      %v1659 = vrot.slane %v1657, 5
      %v1660 = vsel %vm397, %v1655, %v1659
      %v1662 = vshrl.u32 %v1585, 16
      %v1664 = vrot.slane %v1662, 4
      %v1665 = vshll.u32 %v1585, 16
      %v1667 = vrot.slane %v1665, 5
      %v1668 = vor.u32 %v1664, %v1667
      %v1669 = vrot.slane %v1668, 4
      %v1671 = vshll.u32 %v1586, 16
      %v1673 = vrot.slane %v1671, 5
      %v1674 = vsel %vm397, %v1669, %v1673
      %v1676 = vshrl.u32 %v1587, 16
      %v1678 = vrot.slane %v1676, 4
      %v1679 = vshll.u32 %v1587, 16
      %v1681 = vrot.slane %v1679, 5
      %v1682 = vor.u32 %v1678, %v1681
      %v1683 = vrot.slane %v1682, 4
      %v1685 = vshll.u32 %v1588, 16
      %v1687 = vrot.slane %v1685, 5
      %v1688 = vsel %vm397, %v1683, %v1687
      %v1690 = vshrl.u32 %v1589, 16
      %v1692 = vrot.slane %v1690, 4
      %v1693 = vshll.u32 %v1589, 16
      %v1695 = vrot.slane %v1693, 5
      %v1696 = vor.u32 %v1692, %v1695
      %v1697 = vrot.slane %v1696, 4
      %v1699 = vshll.u32 %v1590, 16
      %v1701 = vrot.slane %v1699, 5
      %v1702 = vsel %vm397, %v1697, %v1701
      %v1703 = vunpack.c.l.b16 %v1604
      %v1704 = vunpack.c.l.b16 %v1618
      %v1705 = vunpack.c.l.b16 %v1632
      %v1706 = vunpack.c.l.b16 %v1646
      %v1707 = vunpack.c.l.b16 %v1660
      %v1708 = vunpack.c.l.b16 %v1674
      %v1709 = vunpack.c.l.b16 %v1688
      %v1710 = vunpack.c.l.b16 %v1702
      %v1711 = vpack.c.b16 %v1704, %v1703
      %v1712 = vpack.c.b16 %v1706, %v1705
      %v1713 = vpack.c.b16 %v1708, %v1707
      %v1714 = vpack.c.b16 %v1710, %v1709
      %1715 = vrot.lane.b32.xlu0 %v1711, 8
      %v1716 = vpop.permute.xlu0 %1715
      %1717 = vrot.lane.b32.xlu0 %v1712, 8
      %v1718 = vpop.permute.xlu0 %1717
      %1719 = vrot.lane.b32.xlu0 %v1713, 8
      %v1720 = vpop.permute.xlu0 %1719
      %1721 = vrot.lane.b32.xlu0 %v1714, 8
      %v1722 = vpop.permute.xlu0 %1721
      %vm1727 = vcmask 130112
      %1728 = vst.msk [vmem:[#allocation4] sm:$0xff] %vm1727, %v1716
      %1729 = vst.msk [vmem:[#allocation4 + $0x8] sm:$0xff] %vm1727, %v1718
      %1730 = vst.msk [vmem:[#allocation4 + $0x10] sm:$0xff] %vm1727, %v1720
      %1731 = vst.msk [vmem:[#allocation4 + $0x18] sm:$0xff] %vm1727, %v1722
      %v1732 = vld [vmem:[#allocation2] sm:$0xe]
      %v1733 = vld [vmem:[#allocation2 + $0x4] sm:$0x1]
      %v1734 = vld [vmem:[#allocation2 + $0x8] sm:$0xe]
      %v1735 = vld [vmem:[#allocation2 + $0xc] sm:$0x1]
      %v1736 = vld [vmem:[#allocation2 + $0x10] sm:$0xe]
      %v1737 = vld [vmem:[#allocation2 + $0x14] sm:$0x1]
      %v1738 = vld [vmem:[#allocation2 + $0x18] sm:$0xe]
      %v1739 = vld [vmem:[#allocation2 + $0x1c] sm:$0x1]
      %v1740 = vld [vmem:[#allocation2 + $0x20] sm:$0xe]
      %v1741 = vld [vmem:[#allocation2 + $0x24] sm:$0x1]
      %v1742 = vld [vmem:[#allocation2 + $0x28] sm:$0xe]
      %v1743 = vld [vmem:[#allocation2 + $0x2c] sm:$0x1]
      %v1744 = vld [vmem:[#allocation2 + $0x30] sm:$0xe]
      %v1745 = vld [vmem:[#allocation2 + $0x34] sm:$0x1]
      %v1746 = vld [vmem:[#allocation2 + $0x38] sm:$0xe]
      %v1747 = vld [vmem:[#allocation2 + $0x3c] sm:$0x1]
      %vm1764 = vcmask 1042432
      %vm1765 = vcmask 1046532
      %vm1766 = vmor %vm1764, %vm1765
      %v1767 = vrot.slane %v1732, 5
      %v1768 = vrot.slane %v1767, 4
      %v1769 = vrot.slane %v1733, 5
      %v1770 = vsel %vm1766, %v1768, %v1769
      %v1771 = vrot.slane %v1734, 5
      %v1772 = vrot.slane %v1771, 4
      %v1773 = vrot.slane %v1735, 5
      %v1774 = vsel %vm1766, %v1772, %v1773
      %v1775 = vrot.slane %v1736, 5
      %v1776 = vrot.slane %v1775, 4
      %v1777 = vrot.slane %v1737, 5
      %v1778 = vsel %vm1766, %v1776, %v1777
      %v1779 = vrot.slane %v1738, 5
      %v1780 = vrot.slane %v1779, 4
      %v1781 = vrot.slane %v1739, 5
      %v1782 = vsel %vm1766, %v1780, %v1781
      %v1783 = vrot.slane %v1740, 5
      %v1784 = vrot.slane %v1783, 4
      %v1785 = vrot.slane %v1741, 5
      %v1786 = vsel %vm1766, %v1784, %v1785
      %v1787 = vrot.slane %v1742, 5
      %v1788 = vrot.slane %v1787, 4
      %v1789 = vrot.slane %v1743, 5
      %v1790 = vsel %vm1766, %v1788, %v1789
      %v1791 = vrot.slane %v1744, 5
      %v1792 = vrot.slane %v1791, 4
      %v1793 = vrot.slane %v1745, 5
      %v1794 = vsel %vm1766, %v1792, %v1793
      %v1795 = vrot.slane %v1746, 5
      %v1796 = vrot.slane %v1795, 4
      %v1797 = vrot.slane %v1747, 5
      %v1798 = vsel %vm1766, %v1796, %v1797
      %v1799 = vunpack.c.l.b16 %v1770
      %v1800 = vunpack.c.l.b16 %v1774
      %v1801 = vunpack.c.l.b16 %v1778
      %v1802 = vunpack.c.l.b16 %v1782
      %v1803 = vunpack.c.l.b16 %v1786
      %v1804 = vunpack.c.l.b16 %v1790
      %v1805 = vunpack.c.l.b16 %v1794
      %v1806 = vunpack.c.l.b16 %v1798
      %v1807 = vpack.c.b16 %v1800, %v1799
      %v1808 = vpack.c.b16 %v1802, %v1801
      %v1809 = vpack.c.b16 %v1804, %v1803
      %v1810 = vpack.c.b16 %v1806, %v1805
      %1811 = vrot.lane.b32.xlu0 %v1807, 16
      %v1812 = vpop.permute.xlu0 %1811
      %1813 = vrot.lane.b32.xlu0 %v1808, 16
      %v1814 = vpop.permute.xlu0 %1813
      %1815 = vrot.lane.b32.xlu0 %v1809, 16
      %v1816 = vpop.permute.xlu0 %1815
      %1817 = vrot.lane.b32.xlu0 %v1810, 16
      %v1818 = vpop.permute.xlu0 %1817
      %vm1823 = vcmask 195712
      %1824 = vst.msk [vmem:[#allocation4] sm:$0xff] %vm1823, %v1812
      %1825 = vst.msk [vmem:[#allocation4 + $0x8] sm:$0xff] %vm1823, %v1814
      %1826 = vst.msk [vmem:[#allocation4 + $0x10] sm:$0xff] %vm1823, %v1816
      %1827 = vst.msk [vmem:[#allocation4 + $0x18] sm:$0xff] %vm1823, %v1818
      %v1828 = vld [vmem:[%s1469] sm:$0xf]
      %v1829 = vld [vmem:[%s1469 + $0x8] sm:$0xf]
      %v1830 = vld [vmem:[%s1469 + $0x10] sm:$0xf]
      %v1831 = vld [vmem:[%s1469 + $0x18] sm:$0xf]
      %v1832 = vld [vmem:[%s1469 + $0x20] sm:$0xf]
      %v1833 = vld [vmem:[%s1469 + $0x28] sm:$0xf]
      %v1834 = vld [vmem:[%s1469 + $0x30] sm:$0xf]
      %v1835 = vld [vmem:[%s1469 + $0x38] sm:$0xf]
      %v1844 = vunpack.c.l.b16 %v1828
      %v1845 = vunpack.c.l.b16 %v1829
      %v1846 = vunpack.c.l.b16 %v1830
      %v1847 = vunpack.c.l.b16 %v1831
      %v1848 = vunpack.c.l.b16 %v1832
      %v1849 = vunpack.c.l.b16 %v1833
      %v1850 = vunpack.c.l.b16 %v1834
      %v1851 = vunpack.c.l.b16 %v1835
      %v1852 = vpack.c.b16 %v1845, %v1844
      %v1853 = vpack.c.b16 %v1847, %v1846
      %v1854 = vpack.c.b16 %v1849, %v1848
      %v1855 = vpack.c.b16 %v1851, %v1850
      %1856 = vrot.lane.b32.xlu0 %v1852, 24
      %v1857 = vpop.permute.xlu0 %1856
      %1858 = vrot.lane.b32.xlu0 %v1853, 24
      %v1859 = vpop.permute.xlu0 %1858
      %1860 = vrot.lane.b32.xlu0 %v1854, 24
      %v1861 = vpop.permute.xlu0 %1860
      %1862 = vrot.lane.b32.xlu0 %v1855, 24
      %v1863 = vpop.permute.xlu0 %1862
      %vm1868 = vcmask 261312
      %1869 = vst.msk [vmem:[#allocation4] sm:$0xff] %vm1868, %v1857
      %1870 = vst.msk [vmem:[#allocation4 + $0x8] sm:$0xff] %vm1868, %v1859
      %1871 = vst.msk [vmem:[#allocation4 + $0x10] sm:$0xff] %vm1868, %v1861
      %1872 = vst.msk [vmem:[#allocation4 + $0x18] sm:$0xff] %vm1868, %v1863
      %v1873 = vld [vmem:[%s1469] sm:$0xf]
      %v1874 = vld [vmem:[%s1469 + $0x4] sm:$0x1]
      %v1875 = vld [vmem:[%s1469 + $0x8] sm:$0xf]
      %v1876 = vld [vmem:[%s1469 + $0xc] sm:$0x1]
      %v1877 = vld [vmem:[%s1469 + $0x10] sm:$0xf]
      %v1878 = vld [vmem:[%s1469 + $0x14] sm:$0x1]
      %v1879 = vld [vmem:[%s1469 + $0x18] sm:$0xf]
      %v1880 = vld [vmem:[%s1469 + $0x1c] sm:$0x1]
      %v1881 = vld [vmem:[%s1469 + $0x20] sm:$0xf]
      %v1882 = vld [vmem:[%s1469 + $0x24] sm:$0x1]
      %v1883 = vld [vmem:[%s1469 + $0x28] sm:$0xf]
      %v1884 = vld [vmem:[%s1469 + $0x2c] sm:$0x1]
      %v1885 = vld [vmem:[%s1469 + $0x30] sm:$0xf]
      %v1886 = vld [vmem:[%s1469 + $0x34] sm:$0x1]
      %v1887 = vld [vmem:[%s1469 + $0x38] sm:$0xf]
      %v1888 = vld [vmem:[%s1469 + $0x3c] sm:$0x1]
      %v1890 = vshrl.u32 %v1873, 16
      %v1892 = vrot.slane %v1890, 4
      %v1893 = vshll.u32 %v1873, 16
      %v1895 = vrot.slane %v1893, 5
      %v1896 = vor.u32 %v1892, %v1895
      %v1897 = vrot.slane %v1896, 4
      %v1899 = vshll.u32 %v1874, 16
      %v1901 = vrot.slane %v1899, 5
      %v1902 = vsel %vm397, %v1897, %v1901
      %v1904 = vshrl.u32 %v1875, 16
      %v1906 = vrot.slane %v1904, 4
      %v1907 = vshll.u32 %v1875, 16
      %v1909 = vrot.slane %v1907, 5
      %v1910 = vor.u32 %v1906, %v1909
      %v1911 = vrot.slane %v1910, 4
      %v1913 = vshll.u32 %v1876, 16
      %v1915 = vrot.slane %v1913, 5
      %v1916 = vsel %vm397, %v1911, %v1915
      %v1918 = vshrl.u32 %v1877, 16
      %v1920 = vrot.slane %v1918, 4
      %v1921 = vshll.u32 %v1877, 16
      %v1923 = vrot.slane %v1921, 5
      %v1924 = vor.u32 %v1920, %v1923
      %v1925 = vrot.slane %v1924, 4
      %v1927 = vshll.u32 %v1878, 16
      %v1929 = vrot.slane %v1927, 5
      %v1930 = vsel %vm397, %v1925, %v1929
      %v1932 = vshrl.u32 %v1879, 16
      %v1934 = vrot.slane %v1932, 4
      %v1935 = vshll.u32 %v1879, 16
      %v1937 = vrot.slane %v1935, 5
      %v1938 = vor.u32 %v1934, %v1937
      %v1939 = vrot.slane %v1938, 4
      %v1941 = vshll.u32 %v1880, 16
      %v1943 = vrot.slane %v1941, 5
      %v1944 = vsel %vm397, %v1939, %v1943
      %v1946 = vshrl.u32 %v1881, 16
      %v1948 = vrot.slane %v1946, 4
      %v1949 = vshll.u32 %v1881, 16
      %v1951 = vrot.slane %v1949, 5
      %v1952 = vor.u32 %v1948, %v1951
      %v1953 = vrot.slane %v1952, 4
      %v1955 = vshll.u32 %v1882, 16
      %v1957 = vrot.slane %v1955, 5
      %v1958 = vsel %vm397, %v1953, %v1957
      %v1960 = vshrl.u32 %v1883, 16
      %v1962 = vrot.slane %v1960, 4
      %v1963 = vshll.u32 %v1883, 16
      %v1965 = vrot.slane %v1963, 5
      %v1966 = vor.u32 %v1962, %v1965
      %v1967 = vrot.slane %v1966, 4
      %v1969 = vshll.u32 %v1884, 16
      %v1971 = vrot.slane %v1969, 5
      %v1972 = vsel %vm397, %v1967, %v1971
      %v1974 = vshrl.u32 %v1885, 16
      %v1976 = vrot.slane %v1974, 4
      %v1977 = vshll.u32 %v1885, 16
      %v1979 = vrot.slane %v1977, 5
      %v1980 = vor.u32 %v1976, %v1979
      %v1981 = vrot.slane %v1980, 4
      %v1983 = vshll.u32 %v1886, 16
      %v1985 = vrot.slane %v1983, 5
      %v1986 = vsel %vm397, %v1981, %v1985
      %v1988 = vshrl.u32 %v1887, 16
      %v1990 = vrot.slane %v1988, 4
      %v1991 = vshll.u32 %v1887, 16
      %v1993 = vrot.slane %v1991, 5
      %v1994 = vor.u32 %v1990, %v1993
      %v1995 = vrot.slane %v1994, 4
      %v1997 = vshll.u32 %v1888, 16
      %v1999 = vrot.slane %v1997, 5
      %v2000 = vsel %vm397, %v1995, %v1999
      %v2001 = vunpack.c.l.b16 %v1902
      %v2002 = vunpack.c.l.b16 %v1916
      %v2003 = vunpack.c.l.b16 %v1930
      %v2004 = vunpack.c.l.b16 %v1944
      %v2005 = vunpack.c.l.b16 %v1958
      %v2006 = vunpack.c.l.b16 %v1972
      %v2007 = vunpack.c.l.b16 %v1986
      %v2008 = vunpack.c.l.b16 %v2000
      %v2009 = vpack.c.b16 %v2002, %v2001
      %v2010 = vpack.c.b16 %v2004, %v2003
      %v2011 = vpack.c.b16 %v2006, %v2005
      %v2012 = vpack.c.b16 %v2008, %v2007
      %2013 = vrot.lane.b32.xlu0 %v2009, 32
      %v2014 = vpop.permute.xlu0 %2013
      %2015 = vrot.lane.b32.xlu0 %v2010, 32
      %v2016 = vpop.permute.xlu0 %2015
      %2017 = vrot.lane.b32.xlu0 %v2011, 32
      %v2018 = vpop.permute.xlu0 %2017
      %2019 = vrot.lane.b32.xlu0 %v2012, 32
      %v2020 = vpop.permute.xlu0 %2019
      %vm2025 = vcmask 326912
      %2026 = vst.msk [vmem:[#allocation4] sm:$0xff] %vm2025, %v2014
      %2027 = vst.msk [vmem:[#allocation4 + $0x8] sm:$0xff] %vm2025, %v2016
      %2028 = vst.msk [vmem:[#allocation4 + $0x10] sm:$0xff] %vm2025, %v2018
      %2029 = vst.msk [vmem:[#allocation4 + $0x18] sm:$0xff] %vm2025, %v2020
      %v2030 = vld [vmem:[%s1469] sm:$0xe]
      %v2031 = vld [vmem:[%s1469 + $0x4] sm:$0x1]
      %v2032 = vld [vmem:[%s1469 + $0x8] sm:$0xe]
      %v2033 = vld [vmem:[%s1469 + $0xc] sm:$0x1]
      %v2034 = vld [vmem:[%s1469 + $0x10] sm:$0xe]
      %v2035 = vld [vmem:[%s1469 + $0x14] sm:$0x1]
      %v2036 = vld [vmem:[%s1469 + $0x18] sm:$0xe]
      %v2037 = vld [vmem:[%s1469 + $0x1c] sm:$0x1]
      %v2038 = vld [vmem:[%s1469 + $0x20] sm:$0xe]
      %v2039 = vld [vmem:[%s1469 + $0x24] sm:$0x1]
      %v2040 = vld [vmem:[%s1469 + $0x28] sm:$0xe]
      %v2041 = vld [vmem:[%s1469 + $0x2c] sm:$0x1]
      %v2042 = vld [vmem:[%s1469 + $0x30] sm:$0xe]
      %v2043 = vld [vmem:[%s1469 + $0x34] sm:$0x1]
      %v2044 = vld [vmem:[%s1469 + $0x38] sm:$0xe]
      %v2045 = vld [vmem:[%s1469 + $0x3c] sm:$0x1]
      %v2062 = vrot.slane %v2030, 5
      %v2063 = vrot.slane %v2062, 4
      %v2064 = vrot.slane %v2031, 5
      %v2065 = vsel %vm1766, %v2063, %v2064
      %v2066 = vrot.slane %v2032, 5
      %v2067 = vrot.slane %v2066, 4
      %v2068 = vrot.slane %v2033, 5
      %v2069 = vsel %vm1766, %v2067, %v2068
      %v2070 = vrot.slane %v2034, 5
      %v2071 = vrot.slane %v2070, 4
      %v2072 = vrot.slane %v2035, 5
      %v2073 = vsel %vm1766, %v2071, %v2072
      %v2074 = vrot.slane %v2036, 5
      %v2075 = vrot.slane %v2074, 4
      %v2076 = vrot.slane %v2037, 5
      %v2077 = vsel %vm1766, %v2075, %v2076
      %v2078 = vrot.slane %v2038, 5
      %v2079 = vrot.slane %v2078, 4
      %v2080 = vrot.slane %v2039, 5
      %v2081 = vsel %vm1766, %v2079, %v2080
      %v2082 = vrot.slane %v2040, 5
      %v2083 = vrot.slane %v2082, 4
      %v2084 = vrot.slane %v2041, 5
      %v2085 = vsel %vm1766, %v2083, %v2084
      %v2086 = vrot.slane %v2042, 5
      %v2087 = vrot.slane %v2086, 4
      %v2088 = vrot.slane %v2043, 5
      %v2089 = vsel %vm1766, %v2087, %v2088
      %v2090 = vrot.slane %v2044, 5
      %v2091 = vrot.slane %v2090, 4
      %v2092 = vrot.slane %v2045, 5
      %v2093 = vsel %vm1766, %v2091, %v2092
      %v2094 = vunpack.c.l.b16 %v2065
      %v2095 = vunpack.c.l.b16 %v2069
      %v2096 = vunpack.c.l.b16 %v2073
      %v2097 = vunpack.c.l.b16 %v2077
      %v2098 = vunpack.c.l.b16 %v2081
      %v2099 = vunpack.c.l.b16 %v2085
      %v2100 = vunpack.c.l.b16 %v2089
      %v2101 = vunpack.c.l.b16 %v2093
      %v2102 = vpack.c.b16 %v2095, %v2094
      %v2103 = vpack.c.b16 %v2097, %v2096
      %v2104 = vpack.c.b16 %v2099, %v2098
      %v2105 = vpack.c.b16 %v2101, %v2100
      %2106 = vrot.lane.b32.xlu0 %v2102, 40
      %v2107 = vpop.permute.xlu0 %2106
      %2108 = vrot.lane.b32.xlu0 %v2103, 40
      %v2109 = vpop.permute.xlu0 %2108
      %2110 = vrot.lane.b32.xlu0 %v2104, 40
      %v2111 = vpop.permute.xlu0 %2110
      %2112 = vrot.lane.b32.xlu0 %v2105, 40
      %v2113 = vpop.permute.xlu0 %2112
      %vm2118 = vcmask 392512
      %2119 = vst.msk [vmem:[#allocation4] sm:$0xff] %vm2118, %v2107
      %2120 = vst.msk [vmem:[#allocation4 + $0x8] sm:$0xff] %vm2118, %v2109
      %2121 = vst.msk [vmem:[#allocation4 + $0x10] sm:$0xff] %vm2118, %v2111
      %2122 = vst.msk [vmem:[#allocation4 + $0x18] sm:$0xff] %vm2118, %v2113
      %s2123 = scalar_lea.vmem [#allocation2], 16
      %v2124 = vld [vmem:[%s2123] sm:$0xf]
      %v2125 = vld [vmem:[%s2123 + $0x8] sm:$0xf]
      %v2126 = vld [vmem:[%s2123 + $0x10] sm:$0xf]
      %v2127 = vld [vmem:[%s2123 + $0x18] sm:$0xf]
      %v2128 = vld [vmem:[%s2123 + $0x20] sm:$0xf]
      %v2129 = vld [vmem:[%s2123 + $0x28] sm:$0xf]
      %v2130 = vld [vmem:[%s2123 + $0x30] sm:$0xf]
      %v2131 = vld [vmem:[%s2123 + $0x38] sm:$0xf]
      %v2140 = vunpack.c.l.b16 %v2124
      %v2141 = vunpack.c.l.b16 %v2125
      %v2142 = vunpack.c.l.b16 %v2126
      %v2143 = vunpack.c.l.b16 %v2127
      %v2144 = vunpack.c.l.b16 %v2128
      %v2145 = vunpack.c.l.b16 %v2129
      %v2146 = vunpack.c.l.b16 %v2130
      %v2147 = vunpack.c.l.b16 %v2131
      %v2148 = vpack.c.b16 %v2141, %v2140
      %v2149 = vpack.c.b16 %v2143, %v2142
      %v2150 = vpack.c.b16 %v2145, %v2144
      %v2151 = vpack.c.b16 %v2147, %v2146
      %2152 = vrot.lane.b32.xlu0 %v2148, 48
      %v2153 = vpop.permute.xlu0 %2152
      %2154 = vrot.lane.b32.xlu0 %v2149, 48
      %v2155 = vpop.permute.xlu0 %2154
      %2156 = vrot.lane.b32.xlu0 %v2150, 48
      %v2157 = vpop.permute.xlu0 %2156
      %2158 = vrot.lane.b32.xlu0 %v2151, 48
      %v2159 = vpop.permute.xlu0 %2158
      %vm2164 = vcmask 458112
      %2165 = vst.msk [vmem:[#allocation4] sm:$0xff] %vm2164, %v2153
      %2166 = vst.msk [vmem:[#allocation4 + $0x8] sm:$0xff] %vm2164, %v2155
      %2167 = vst.msk [vmem:[#allocation4 + $0x10] sm:$0xff] %vm2164, %v2157
      %2168 = vst.msk [vmem:[#allocation4 + $0x18] sm:$0xff] %vm2164, %v2159
      %v2169 = vld [vmem:[%s2123] sm:$0xf]
      %v2170 = vld [vmem:[%s2123 + $0x4] sm:$0x1]
      %v2171 = vld [vmem:[%s2123 + $0x8] sm:$0xf]
      %v2172 = vld [vmem:[%s2123 + $0xc] sm:$0x1]
      %v2173 = vld [vmem:[%s2123 + $0x10] sm:$0xf]
      %v2174 = vld [vmem:[%s2123 + $0x14] sm:$0x1]
      %v2175 = vld [vmem:[%s2123 + $0x18] sm:$0xf]
      %v2176 = vld [vmem:[%s2123 + $0x1c] sm:$0x1]
      %v2177 = vld [vmem:[%s2123 + $0x20] sm:$0xf]
      %v2178 = vld [vmem:[%s2123 + $0x24] sm:$0x1]
      %v2179 = vld [vmem:[%s2123 + $0x28] sm:$0xf]
      %v2180 = vld [vmem:[%s2123 + $0x2c] sm:$0x1]
      %v2181 = vld [vmem:[%s2123 + $0x30] sm:$0xf]
      %v2182 = vld [vmem:[%s2123 + $0x34] sm:$0x1]
      %v2183 = vld [vmem:[%s2123 + $0x38] sm:$0xf]
      %v2184 = vld [vmem:[%s2123 + $0x3c] sm:$0x1]
      %v2186 = vshrl.u32 %v2169, 16
      %v2188 = vrot.slane %v2186, 4
      %v2189 = vshll.u32 %v2169, 16
      %v2191 = vrot.slane %v2189, 5
      %v2192 = vor.u32 %v2188, %v2191
      %v2193 = vrot.slane %v2192, 4
      %v2195 = vshll.u32 %v2170, 16
      %v2197 = vrot.slane %v2195, 5
      %v2198 = vsel %vm397, %v2193, %v2197
      %v2200 = vshrl.u32 %v2171, 16
      %v2202 = vrot.slane %v2200, 4
      %v2203 = vshll.u32 %v2171, 16
      %v2205 = vrot.slane %v2203, 5
      %v2206 = vor.u32 %v2202, %v2205
      %v2207 = vrot.slane %v2206, 4
      %v2209 = vshll.u32 %v2172, 16
      %v2211 = vrot.slane %v2209, 5
      %v2212 = vsel %vm397, %v2207, %v2211
      %v2214 = vshrl.u32 %v2173, 16
      %v2216 = vrot.slane %v2214, 4
      %v2217 = vshll.u32 %v2173, 16
      %v2219 = vrot.slane %v2217, 5
      %v2220 = vor.u32 %v2216, %v2219
      %v2221 = vrot.slane %v2220, 4
      %v2223 = vshll.u32 %v2174, 16
      %v2225 = vrot.slane %v2223, 5
      %v2226 = vsel %vm397, %v2221, %v2225
      %v2228 = vshrl.u32 %v2175, 16
      %v2230 = vrot.slane %v2228, 4
      %v2231 = vshll.u32 %v2175, 16
      %v2233 = vrot.slane %v2231, 5
      %v2234 = vor.u32 %v2230, %v2233
      %v2235 = vrot.slane %v2234, 4
      %v2237 = vshll.u32 %v2176, 16
      %v2239 = vrot.slane %v2237, 5
      %v2240 = vsel %vm397, %v2235, %v2239
      %v2242 = vshrl.u32 %v2177, 16
      %v2244 = vrot.slane %v2242, 4
      %v2245 = vshll.u32 %v2177, 16
      %v2247 = vrot.slane %v2245, 5
      %v2248 = vor.u32 %v2244, %v2247
      %v2249 = vrot.slane %v2248, 4
      %v2251 = vshll.u32 %v2178, 16
      %v2253 = vrot.slane %v2251, 5
      %v2254 = vsel %vm397, %v2249, %v2253
      %v2256 = vshrl.u32 %v2179, 16
      %v2258 = vrot.slane %v2256, 4
      %v2259 = vshll.u32 %v2179, 16
      %v2261 = vrot.slane %v2259, 5
      %v2262 = vor.u32 %v2258, %v2261
      %v2263 = vrot.slane %v2262, 4
      %v2265 = vshll.u32 %v2180, 16
      %v2267 = vrot.slane %v2265, 5
      %v2268 = vsel %vm397, %v2263, %v2267
      %v2270 = vshrl.u32 %v2181, 16
      %v2272 = vrot.slane %v2270, 4
      %v2273 = vshll.u32 %v2181, 16
      %v2275 = vrot.slane %v2273, 5
      %v2276 = vor.u32 %v2272, %v2275
      %v2277 = vrot.slane %v2276, 4
      %v2279 = vshll.u32 %v2182, 16
      %v2281 = vrot.slane %v2279, 5
      %v2282 = vsel %vm397, %v2277, %v2281
      %v2284 = vshrl.u32 %v2183, 16
      %v2286 = vrot.slane %v2284, 4
      %v2287 = vshll.u32 %v2183, 16
      %v2289 = vrot.slane %v2287, 5
      %v2290 = vor.u32 %v2286, %v2289
      %v2291 = vrot.slane %v2290, 4
      %v2293 = vshll.u32 %v2184, 16
      %v2295 = vrot.slane %v2293, 5
      %v2296 = vsel %vm397, %v2291, %v2295
      %v2297 = vunpack.c.l.b16 %v2198
      %v2298 = vunpack.c.l.b16 %v2212
      %v2299 = vunpack.c.l.b16 %v2226
      %v2300 = vunpack.c.l.b16 %v2240
      %v2301 = vunpack.c.l.b16 %v2254
      %v2302 = vunpack.c.l.b16 %v2268
      %v2303 = vunpack.c.l.b16 %v2282
      %v2304 = vunpack.c.l.b16 %v2296
      %v2305 = vpack.c.b16 %v2298, %v2297
      %v2306 = vpack.c.b16 %v2300, %v2299
      %v2307 = vpack.c.b16 %v2302, %v2301
      %v2308 = vpack.c.b16 %v2304, %v2303
      %2309 = vrot.lane.b32.xlu0 %v2305, 56
      %v2310 = vpop.permute.xlu0 %2309
      %2311 = vrot.lane.b32.xlu0 %v2306, 56
      %v2312 = vpop.permute.xlu0 %2311
      %2313 = vrot.lane.b32.xlu0 %v2307, 56
      %v2314 = vpop.permute.xlu0 %2313
      %2315 = vrot.lane.b32.xlu0 %v2308, 56
      %v2316 = vpop.permute.xlu0 %2315
      %vm2321 = vcmask 523712
      %2322 = vst.msk [vmem:[#allocation4] sm:$0xff] %vm2321, %v2310
      %2323 = vst.msk [vmem:[#allocation4 + $0x8] sm:$0xff] %vm2321, %v2312
      %2324 = vst.msk [vmem:[#allocation4 + $0x10] sm:$0xff] %vm2321, %v2314
      %2325 = vst.msk [vmem:[#allocation4 + $0x18] sm:$0xff] %vm2321, %v2316
      %v2326 = vld [vmem:[%s2123] sm:$0xe]
      %v2327 = vld [vmem:[%s2123 + $0x4] sm:$0x1]
      %v2328 = vld [vmem:[%s2123 + $0x8] sm:$0xe]
      %v2329 = vld [vmem:[%s2123 + $0xc] sm:$0x1]
      %v2330 = vld [vmem:[%s2123 + $0x10] sm:$0xe]
      %v2331 = vld [vmem:[%s2123 + $0x14] sm:$0x1]
      %v2332 = vld [vmem:[%s2123 + $0x18] sm:$0xe]
      %v2333 = vld [vmem:[%s2123 + $0x1c] sm:$0x1]
      %v2334 = vld [vmem:[%s2123 + $0x20] sm:$0xe]
      %v2335 = vld [vmem:[%s2123 + $0x24] sm:$0x1]
      %v2336 = vld [vmem:[%s2123 + $0x28] sm:$0xe]
      %v2337 = vld [vmem:[%s2123 + $0x2c] sm:$0x1]
      %v2338 = vld [vmem:[%s2123 + $0x30] sm:$0xe]
      %v2339 = vld [vmem:[%s2123 + $0x34] sm:$0x1]
      %v2340 = vld [vmem:[%s2123 + $0x38] sm:$0xe]
      %v2341 = vld [vmem:[%s2123 + $0x3c] sm:$0x1]
      %v2358 = vrot.slane %v2326, 5
      %v2359 = vrot.slane %v2358, 4
      %v2360 = vrot.slane %v2327, 5
      %v2361 = vsel %vm1766, %v2359, %v2360
      %v2362 = vrot.slane %v2328, 5
      %v2363 = vrot.slane %v2362, 4
      %v2364 = vrot.slane %v2329, 5
      %v2365 = vsel %vm1766, %v2363, %v2364
      %v2366 = vrot.slane %v2330, 5
      %v2367 = vrot.slane %v2366, 4
      %v2368 = vrot.slane %v2331, 5
      %v2369 = vsel %vm1766, %v2367, %v2368
      %v2370 = vrot.slane %v2332, 5
      %v2371 = vrot.slane %v2370, 4
      %v2372 = vrot.slane %v2333, 5
      %v2373 = vsel %vm1766, %v2371, %v2372
      %v2374 = vrot.slane %v2334, 5
      %v2375 = vrot.slane %v2374, 4
      %v2376 = vrot.slane %v2335, 5
      %v2377 = vsel %vm1766, %v2375, %v2376
      %v2378 = vrot.slane %v2336, 5
      %v2379 = vrot.slane %v2378, 4
      %v2380 = vrot.slane %v2337, 5
      %v2381 = vsel %vm1766, %v2379, %v2380
      %v2382 = vrot.slane %v2338, 5
      %v2383 = vrot.slane %v2382, 4
      %v2384 = vrot.slane %v2339, 5
      %v2385 = vsel %vm1766, %v2383, %v2384
      %v2386 = vrot.slane %v2340, 5
      %v2387 = vrot.slane %v2386, 4
      %v2388 = vrot.slane %v2341, 5
      %v2389 = vsel %vm1766, %v2387, %v2388
      %v2390 = vunpack.c.l.b16 %v2361
      %v2391 = vunpack.c.l.b16 %v2365
      %v2392 = vunpack.c.l.b16 %v2369
      %v2393 = vunpack.c.l.b16 %v2373
      %v2394 = vunpack.c.l.b16 %v2377
      %v2395 = vunpack.c.l.b16 %v2381
      %v2396 = vunpack.c.l.b16 %v2385
      %v2397 = vunpack.c.l.b16 %v2389
      %v2398 = vpack.c.b16 %v2391, %v2390
      %v2399 = vpack.c.b16 %v2393, %v2392
      %v2400 = vpack.c.b16 %v2395, %v2394
      %v2401 = vpack.c.b16 %v2397, %v2396
      %2402 = vrot.lane.b32.xlu0 %v2398, 64
      %v2403 = vpop.permute.xlu0 %2402
      %2404 = vrot.lane.b32.xlu0 %v2399, 64
      %v2405 = vpop.permute.xlu0 %2404
      %2406 = vrot.lane.b32.xlu0 %v2400, 64
      %v2407 = vpop.permute.xlu0 %2406
      %2408 = vrot.lane.b32.xlu0 %v2401, 64
      %v2409 = vpop.permute.xlu0 %2408
      %vm2414 = vcmask 589312
      %2415 = vst.msk [vmem:[#allocation4] sm:$0xff] %vm2414, %v2403
      %2416 = vst.msk [vmem:[#allocation4 + $0x8] sm:$0xff] %vm2414, %v2405
      %2417 = vst.msk [vmem:[#allocation4 + $0x10] sm:$0xff] %vm2414, %v2407
      %2418 = vst.msk [vmem:[#allocation4 + $0x18] sm:$0xff] %vm2414, %v2409
      %v2419 = vld [vmem:[#allocation3] sm:$0xff]
      %v2420 = vld [vmem:[#allocation3 + $0x8] sm:$0xff]
      %v2421 = vld [vmem:[#allocation3 + $0x10] sm:$0xff]
      %v2422 = vld [vmem:[#allocation3 + $0x18] sm:$0xff]
      %v2423 = vld [vmem:[#allocation3 + $0x20] sm:$0xff]
      %v2424 = vld [vmem:[#allocation3 + $0x28] sm:$0xff]
      %v2425 = vld [vmem:[#allocation3 + $0x30] sm:$0xff]
      %v2426 = vld [vmem:[#allocation3 + $0x38] sm:$0xff]
      %v2427 = vld [vmem:[#allocation4] sm:$0xff]
      %v2428 = vld [vmem:[#allocation4 + $0x8] sm:$0xff]
      %v2429 = vld [vmem:[#allocation4 + $0x10] sm:$0xff]
      %v2430 = vld [vmem:[#allocation4 + $0x18] sm:$0xff]
      %v2431 = vld [vmem:[%s3] sm:$0xf]
      %v2432 = vld [vmem:[%s3 + $0x4] sm:$0xf]
      %v2433 = vld [vmem:[%s3 + $0x8] sm:$0xf]
      %v2434 = vld [vmem:[%s3 + $0xc] sm:$0xf]
      %v2435 = vld [vmem:[%s3 + $0x10] sm:$0xf]
      %v2436 = vld [vmem:[%s3 + $0x14] sm:$0xf]
      %v2437 = vld [vmem:[%s3 + $0x18] sm:$0xf]
      %v2438 = vld [vmem:[%s3 + $0x1c] sm:$0xf]
      %v2439 = vld [vmem:[%s3 + $0x20] sm:$0xf]
      %v2449 = vunpack.c.l.b16 %v2431
      %v2450 = vunpack.c.l.b16 %v2432
      %v2451 = vunpack.c.l.b16 %v2433
      %v2452 = vunpack.c.l.b16 %v2434
      %v2453 = vunpack.c.l.b16 %v2435
      %v2454 = vunpack.c.l.b16 %v2436
      %v2455 = vunpack.c.l.b16 %v2437
      %v2456 = vunpack.c.l.b16 %v2438
      %v2457 = vunpack.c.l.b16 %v2439
      %v2458 = vpack.c.b16 %v2450, %v2449
      %v2459 = vpack.c.b16 %v2452, %v2451
      %v2460 = vpack.c.b16 %v2454, %v2453
      %v2461 = vpack.c.b16 %v2456, %v2455
      %v2462 = vpack.c.b16 %v2457, %v2457
      %vm2467 = vcmask 588800
      %v2469 = vsel %vm2467, %v2427, 0
      %v2472 = vsel %vm2467, %v2428, 0
      %v2475 = vsel %vm2467, %v2429, 0
      %v2478 = vsel %vm2467, %v2430, 0
      %vm2480 = vcmask 1043456
      %v2482 = vsel %vm2480, %v2462, 0
      %2484 = vmatprep.subr.bf16.mxu0 0
      %2485 = vmatpush1.bf16.msra.mxu0 %v2458
      %2486 = vmatprep.subr.bf16.mxu0 0
      %2487 = vmatpush1.bf16.msra.mxu0 %v2459
      %2488 = vmatprep.subr.bf16.mxu0 0
      %2489 = vmatpush1.bf16.msra.mxu0 %v2460
      %2490 = vmatprep.subr.bf16.mxu0 0
      %2491 = vmatpush1.bf16.msra.mxu0 %v2461
      %2492 = vmatprep.subr.bf16.mxu0 0
      %2493 = vmatpush1.bf16.msra.mxu0 %v2482
      %2494 = vmatprep.subr.bf16.mxu0 0
      %2495 = vmatpush1.bf16.msra.mxu0 0
      %2496 = vmatprep.subr.bf16.mxu0 0
      %2497 = vmatpush1.bf16.msra.mxu0 0
      %2498 = vmatprep.subr.bf16.mxu0 0
      %2499 = vmatpush1.bf16.msra.mxu0 0
      %2500 = vmatprep.subr.bf16.mxu0 0
      %2501 = vmatpush1.bf16.msra.mxu0 0
      %2502 = vmatprep.subr.bf16.mxu0 0
      %2503 = vmatpush1.bf16.msra.mxu0 0
      %2504 = vmatprep.subr.bf16.mxu0 0
      %2505 = vmatpush1.bf16.msra.mxu0 0
      %2506 = vmatprep.subr.bf16.mxu0 0
      %2507 = vmatpush1.bf16.msra.mxu0 0
      %2508 = vmatprep.subr.bf16.mxu0 0
      %2509 = vmatpush1.bf16.msra.mxu0 0
      %2510 = vmatprep.subr.bf16.mxu0 0
      %2511 = vmatpush1.bf16.msra.mxu0 0
      %2512 = vmatprep.subr.bf16.mxu0 0
      %2513 = vmatpush1.bf16.msra.mxu0 0
      %2514 = vmatprep.subr.bf16.mxu0 0
      %2515 = vmatpush1.bf16.msra.mxu0 0
      %2516 = vmatprep.mubr.bf16.mxu0 0
      %2517 = vmatmul.mubr.bf16.gmra.mrb[0].mxu0 %v2469
      %v2518 = vpop.f32.mrb[0].mxu0
      %v2519 = vadd.f32 0.0, %v2518
      %v2520 = vpop.f32.mrb[0].mxu0
      %v2521 = vpop.f32.mrb[0].mxu0
      %v2522 = vadd.f32 0.0, %v2521
      %v2523 = vpop.f32.mrb[0].mxu0
      %2524 = vmatprep.mubr.bf16.mxu0 0
      %2525 = vmatmul.mubr.bf16.gmra.mrb[0].mxu0 %v2472
      %v2526 = vpop.f32.mrb[0].mxu0
      %v2527 = vadd.f32 0.0, %v2526
      %v2528 = vpop.f32.mrb[0].mxu0
      %v2529 = vpop.f32.mrb[0].mxu0
      %v2530 = vadd.f32 0.0, %v2529
      %v2531 = vpop.f32.mrb[0].mxu0
      %2532 = vmatprep.mubr.bf16.mxu0 0
      %2533 = vmatmul.mubr.bf16.gmra.mrb[0].mxu0 %v2475
      %v2534 = vpop.f32.mrb[0].mxu0
      %v2535 = vadd.f32 0.0, %v2534
      %v2536 = vpop.f32.mrb[0].mxu0
      %v2537 = vpop.f32.mrb[0].mxu0
      %v2538 = vadd.f32 0.0, %v2537
      %v2539 = vpop.f32.mrb[0].mxu0
      %2540 = vmatprep.mubr.bf16.mxu0 0
      %2541 = vmatmul.mubr.bf16.gmra.mrb[0].mxu0 %v2478
      %v2542 = vpop.f32.mrb[0].mxu0
      %v2543 = vadd.f32 0.0, %v2542
      %v2544 = vpop.f32.mrb[0].mxu0
      %v2545 = vpop.f32.mrb[0].mxu0
      %v2546 = vadd.f32 0.0, %v2545
      %v2547 = vpop.f32.mrb[0].mxu0
      %2548 = vdwg.mxu0
      %v2549 = vadd.f32 %v2419, %v2519
      %v2550 = vadd.f32 %v2420, %v2522
      %v2551 = vadd.f32 %v2421, %v2527
      %v2552 = vadd.f32 %v2422, %v2530
      %v2553 = vadd.f32 %v2423, %v2535
      %v2554 = vadd.f32 %v2424, %v2538
      %v2555 = vadd.f32 %v2425, %v2543
      %v2556 = vadd.f32 %v2426, %v2546
      %2557 = vst.msk [vmem:[#allocation3] sm:$0xff] %vm287, %v2549
      %2558 = vst.msk [vmem:[#allocation3 + $0x8] sm:$0xff] %vm287, %v2550
      %2559 = vst.msk [vmem:[#allocation3 + $0x10] sm:$0xff] %vm287, %v2551
      %2560 = vst.msk [vmem:[#allocation3 + $0x18] sm:$0xff] %vm287, %v2552
      %2561 = vst.msk [vmem:[#allocation3 + $0x20] sm:$0xff] %vm287, %v2553
      %2562 = vst.msk [vmem:[#allocation3 + $0x28] sm:$0xff] %vm287, %v2554
      %2563 = vst.msk [vmem:[#allocation3 + $0x30] sm:$0xff] %vm287, %v2555
      %2564 = vst.msk [vmem:[#allocation3 + $0x38] sm:$0xff] %vm287, %v2556
      %v2565 = vld [vmem:[%s585] sm:$0xf]
      %v2566 = vld [vmem:[%s585 + $0x8] sm:$0xf]
      %v2567 = vld [vmem:[%s585 + $0x10] sm:$0xf]
      %v2568 = vld [vmem:[%s585 + $0x18] sm:$0xf]
      %v2569 = vld [vmem:[%s585 + $0x20] sm:$0xf]
      %v2570 = vld [vmem:[%s585 + $0x28] sm:$0xf]
      %v2571 = vld [vmem:[%s585 + $0x30] sm:$0xf]
      %v2572 = vld [vmem:[%s585 + $0x38] sm:$0xf]
      %v2573 = vld [vmem:[#allocation3] sm:$0xff]
      %v2574 = vld [vmem:[#allocation3 + $0x8] sm:$0xff]
      %v2575 = vld [vmem:[#allocation3 + $0x10] sm:$0xff]
      %v2576 = vld [vmem:[#allocation3 + $0x18] sm:$0xff]
      %v2577 = vld [vmem:[#allocation3 + $0x20] sm:$0xff]
      %v2578 = vld [vmem:[#allocation3 + $0x28] sm:$0xff]
      %v2579 = vld [vmem:[#allocation3 + $0x30] sm:$0xff]
      %v2580 = vld [vmem:[#allocation3 + $0x38] sm:$0xff]
      %v2581 = vld [vmem:[%s5] sm:$0x3]
      %v2582 = vld [vmem:[%s6] sm:$0x1]
      %v2584 = vlaneseq
      %v2585 = vshrl.u32 %v2584, 7
      %v2586 = vsub.s32 0, %v2585
      %v2587 = vrot.slane %v2582, %v2586
      %v2597 = vunpack.c.l.b16 %v2565
      %v2598 = vunpack.c.l.b16 %v2566
      %v2599 = vunpack.c.l.b16 %v2567
      %v2600 = vunpack.c.l.b16 %v2568
      %v2601 = vunpack.c.l.b16 %v2569
      %v2602 = vunpack.c.l.b16 %v2570
      %v2603 = vunpack.c.l.b16 %v2571
      %v2604 = vunpack.c.l.b16 %v2572
      %v2605 = vpack.c.b16 %v2598, %v2597
      %v2606 = vpack.c.b16 %v2600, %v2599
      %v2607 = vpack.c.b16 %v2602, %v2601
      %v2608 = vpack.c.b16 %v2604, %v2603
      %v2610 = vsel %vm328, %v2605, 0
      %v2613 = vsel %vm328, %v2606, 0
      %v2616 = vsel %vm328, %v2607, 0
      %v2619 = vsel %vm328, %v2608, 0
      %v2622 = vsel %vm1082, %v2581, 0
      %2624 = vmatprep.subr.bf16.mxu0 0
      %2625 = vmatpush1.bf16.msra.mxu0 %v2622
      %2626 = vmatprep.subr.bf16.mxu0 0
      %2627 = vmatpush1.bf16.msra.mxu0 0
      %2628 = vmatprep.subr.bf16.mxu0 0
      %2629 = vmatpush1.bf16.msra.mxu0 0
      %2630 = vmatprep.subr.bf16.mxu0 0
      %2631 = vmatpush1.bf16.msra.mxu0 0
      %2632 = vmatprep.subr.bf16.mxu0 0
      %2633 = vmatpush1.bf16.msra.mxu0 0
      %2634 = vmatprep.subr.bf16.mxu0 0
      %2635 = vmatpush1.bf16.msra.mxu0 0
      %2636 = vmatprep.subr.bf16.mxu0 0
      %2637 = vmatpush1.bf16.msra.mxu0 0
      %2638 = vmatprep.subr.bf16.mxu0 0
      %2639 = vmatpush1.bf16.msra.mxu0 0
      %2640 = vmatprep.subr.bf16.mxu0 0
      %2641 = vmatpush1.bf16.msra.mxu0 0
      %2642 = vmatprep.subr.bf16.mxu0 0
      %2643 = vmatpush1.bf16.msra.mxu0 0
      %2644 = vmatprep.subr.bf16.mxu0 0
      %2645 = vmatpush1.bf16.msra.mxu0 0
      %2646 = vmatprep.subr.bf16.mxu0 0
      %2647 = vmatpush1.bf16.msra.mxu0 0
      %2648 = vmatprep.subr.bf16.mxu0 0
      %2649 = vmatpush1.bf16.msra.mxu0 0
      %2650 = vmatprep.subr.bf16.mxu0 0
      %2651 = vmatpush1.bf16.msra.mxu0 0
      %2652 = vmatprep.subr.bf16.mxu0 0
      %2653 = vmatpush1.bf16.msra.mxu0 0
      %2654 = vmatprep.subr.bf16.mxu0 0
      %2655 = vmatpush1.bf16.msra.mxu0 0
      %2656 = vmatprep.mubr.bf16.mxu0 0
      %2657 = vmatmul.mubr.bf16.gmra.mrb[0].mxu0 %v2610
      %v2658 = vpop.f32.mrb[0].mxu0
      %v2659 = vadd.f32 %v2587, %v2658
      %v2660 = vpop.f32.mrb[0].mxu0
      %v2661 = vpop.f32.mrb[0].mxu0
      %v2662 = vadd.f32 %v2587, %v2661
      %v2663 = vpop.f32.mrb[0].mxu0
      %2664 = vmatprep.mubr.bf16.mxu0 0
      %2665 = vmatmul.mubr.bf16.gmra.mrb[0].mxu0 %v2613
      %v2666 = vpop.f32.mrb[0].mxu0
      %v2667 = vadd.f32 %v2587, %v2666
      %v2668 = vpop.f32.mrb[0].mxu0
      %v2669 = vpop.f32.mrb[0].mxu0
      %v2670 = vadd.f32 %v2587, %v2669
      %v2671 = vpop.f32.mrb[0].mxu0
      %2672 = vmatprep.mubr.bf16.mxu0 0
      %2673 = vmatmul.mubr.bf16.gmra.mrb[0].mxu0 %v2616
      %v2674 = vpop.f32.mrb[0].mxu0
      %v2675 = vadd.f32 %v2587, %v2674
      %v2676 = vpop.f32.mrb[0].mxu0
      %v2677 = vpop.f32.mrb[0].mxu0
      %v2678 = vadd.f32 %v2587, %v2677
      %v2679 = vpop.f32.mrb[0].mxu0
      %2680 = vmatprep.mubr.bf16.mxu0 0
      %2681 = vmatmul.mubr.bf16.gmra.mrb[0].mxu0 %v2619
      %v2682 = vpop.f32.mrb[0].mxu0
      %v2683 = vadd.f32 %v2587, %v2682
      %v2684 = vpop.f32.mrb[0].mxu0
      %v2685 = vpop.f32.mrb[0].mxu0
      %v2686 = vadd.f32 %v2587, %v2685
      %v2687 = vpop.f32.mrb[0].mxu0
      %2688 = vdwg.mxu0
      %v2689 = vadd.f32 %v2573, %v2659
      %v2690 = vadd.f32 %v2574, %v2662
      %v2691 = vadd.f32 %v2575, %v2667
      %v2692 = vadd.f32 %v2576, %v2670
      %v2693 = vadd.f32 %v2577, %v2675
      %v2694 = vadd.f32 %v2578, %v2678
      %v2695 = vadd.f32 %v2579, %v2683
      %v2696 = vadd.f32 %v2580, %v2686
      %2697 = vst.msk [vmem:[#allocation3] sm:$0xff] %vm287, %v2689
      %2698 = vst.msk [vmem:[#allocation3 + $0x8] sm:$0xff] %vm287, %v2690
      %2699 = vst.msk [vmem:[#allocation3 + $0x10] sm:$0xff] %vm287, %v2691
      %2700 = vst.msk [vmem:[#allocation3 + $0x18] sm:$0xff] %vm287, %v2692
      %2701 = vst.msk [vmem:[#allocation3 + $0x20] sm:$0xff] %vm287, %v2693
      %2702 = vst.msk [vmem:[#allocation3 + $0x28] sm:$0xff] %vm287, %v2694
      %2703 = vst.msk [vmem:[#allocation3 + $0x30] sm:$0xff] %vm287, %v2695
      %2704 = vst.msk [vmem:[#allocation3 + $0x38] sm:$0xff] %vm287, %v2696
      %v2705 = vld [vmem:[#allocation3] sm:$0xff]
      %v2706 = vld [vmem:[#allocation3 + $0x8] sm:$0xff]
      %v2707 = vld [vmem:[#allocation3 + $0x10] sm:$0xff]
      %v2708 = vld [vmem:[#allocation3 + $0x18] sm:$0xff]
      %v2709 = vld [vmem:[#allocation3 + $0x20] sm:$0xff]
      %v2710 = vld [vmem:[#allocation3 + $0x28] sm:$0xff]
      %v2711 = vld [vmem:[#allocation3 + $0x30] sm:$0xff]
      %v2712 = vld [vmem:[#allocation3 + $0x38] sm:$0xff]
      %v2713 = vmul.f32 %v2705, 0.25
      %v2714 = vmul.f32 %v2706, 0.25
      %v2715 = vmul.f32 %v2707, 0.25
      %v2716 = vmul.f32 %v2708, 0.25
      %v2717 = vmul.f32 %v2709, 0.25
      %v2718 = vmul.f32 %v2710, 0.25
      %v2719 = vmul.f32 %v2711, 0.25
      %v2720 = vmul.f32 %v2712, 0.25
      %v2721 = vadd.f32 %v2713, 1.49
      %v2722 = vadd.f32 %v2714, 1.49
      %v2723 = vadd.f32 %v2715, 1.49
      %v2724 = vadd.f32 %v2716, 1.49
      %v2725 = vadd.f32 %v2717, 1.49
      %v2726 = vadd.f32 %v2718, 1.49
      %v2727 = vadd.f32 %v2719, 1.49
      %v2728 = vadd.f32 %v2720, 1.49
      %v2729 = vmul.f32 %v2705, %v2721
      %v2730 = vmul.f32 %v2706, %v2722
      %v2731 = vmul.f32 %v2707, %v2723
      %v2732 = vmul.f32 %v2708, %v2724
      %v2733 = vmul.f32 %v2709, %v2725
      %v2734 = vmul.f32 %v2710, %v2726
      %v2735 = vmul.f32 %v2711, %v2727
      %v2736 = vmul.f32 %v2712, %v2728
      %v2737 = vadd.f32 %v2729, 3.05
      %v2738 = vadd.f32 %v2730, 3.05
      %v2739 = vadd.f32 %v2731, 3.05
      %v2740 = vadd.f32 %v2732, 3.05
      %v2741 = vadd.f32 %v2733, 3.05
      %v2742 = vadd.f32 %v2734, 3.05
      %v2743 = vadd.f32 %v2735, 3.05
      %v2744 = vadd.f32 %v2736, 3.05
      %v2745 = vmul.f32 %v2705, %v2737
      %v2746 = vmul.f32 %v2706, %v2738
      %v2747 = vmul.f32 %v2707, %v2739
      %v2748 = vmul.f32 %v2708, %v2740
      %v2749 = vmul.f32 %v2709, %v2741
      %v2750 = vmul.f32 %v2710, %v2742
      %v2751 = vmul.f32 %v2711, %v2743
      %v2752 = vmul.f32 %v2712, %v2744
      %v2753 = vadd.f32 %v2745, 2.32
      %v2754 = vadd.f32 %v2746, 2.32
      %v2755 = vadd.f32 %v2747, 2.32
      %v2756 = vadd.f32 %v2748, 2.32
      %v2757 = vadd.f32 %v2749, 2.32
      %v2758 = vadd.f32 %v2750, 2.32
      %v2759 = vadd.f32 %v2751, 2.32
      %v2760 = vadd.f32 %v2752, 2.32
      %v2761 = vmul.f32 %v2705, %v2753
      %v2762 = vmul.f32 %v2706, %v2754
      %v2763 = vmul.f32 %v2707, %v2755
      %v2764 = vmul.f32 %v2708, %v2756
      %v2765 = vmul.f32 %v2709, %v2757
      %v2766 = vmul.f32 %v2710, %v2758
      %v2767 = vmul.f32 %v2711, %v2759
      %v2768 = vmul.f32 %v2712, %v2760
      %v2769 = vadd.f32 %v2761, 0.62
      %v2770 = vadd.f32 %v2762, 0.62
      %v2771 = vadd.f32 %v2763, 0.62
      %v2772 = vadd.f32 %v2764, 0.62
      %v2773 = vadd.f32 %v2765, 0.62
      %v2774 = vadd.f32 %v2766, 0.62
      %v2775 = vadd.f32 %v2767, 0.62
      %v2776 = vadd.f32 %v2768, 0.62
      %v2777 = vmul.f32 %v2705, %v2769
      %v2778 = vmul.f32 %v2706, %v2770
      %v2779 = vmul.f32 %v2707, %v2771
      %v2780 = vmul.f32 %v2708, %v2772
      %v2781 = vmul.f32 %v2709, %v2773
      %v2782 = vmul.f32 %v2710, %v2774
      %v2783 = vmul.f32 %v2711, %v2775
      %v2784 = vmul.f32 %v2712, %v2776
      %v2785 = vadd.f32 %v2777, 0.03
      %v2786 = vadd.f32 %v2778, 0.03
      %v2787 = vadd.f32 %v2779, 0.03
      %v2788 = vadd.f32 %v2780, 0.03
      %v2789 = vadd.f32 %v2781, 0.03
      %v2790 = vadd.f32 %v2782, 0.03
      %v2791 = vadd.f32 %v2783, 0.03
      %v2792 = vadd.f32 %v2784, 0.03
      %v2793 = vmul.f32 %v2705, 0.05
      %v2794 = vmul.f32 %v2706, 0.05
      %v2795 = vmul.f32 %v2707, 0.05
      %v2796 = vmul.f32 %v2708, 0.05
      %v2797 = vmul.f32 %v2709, 0.05
      %v2798 = vmul.f32 %v2710, 0.05
      %v2799 = vmul.f32 %v2711, 0.05
      %v2800 = vmul.f32 %v2712, 0.05
      %v2801 = vadd.f32 %v2793, 1.2
      %v2802 = vadd.f32 %v2794, 1.2
      %v2803 = vadd.f32 %v2795, 1.2
      %v2804 = vadd.f32 %v2796, 1.2
      %v2805 = vadd.f32 %v2797, 1.2
      %v2806 = vadd.f32 %v2798, 1.2
      %v2807 = vadd.f32 %v2799, 1.2
      %v2808 = vadd.f32 %v2800, 1.2
      %v2809 = vmul.f32 %v2705, %v2801
      %v2810 = vmul.f32 %v2706, %v2802
      %v2811 = vmul.f32 %v2707, %v2803
      %v2812 = vmul.f32 %v2708, %v2804
      %v2813 = vmul.f32 %v2709, %v2805
      %v2814 = vmul.f32 %v2710, %v2806
      %v2815 = vmul.f32 %v2711, %v2807
      %v2816 = vmul.f32 %v2712, %v2808
      %v2817 = vadd.f32 %v2809, 0.25
      %v2818 = vadd.f32 %v2810, 0.25
      %v2819 = vadd.f32 %v2811, 0.25
      %v2820 = vadd.f32 %v2812, 0.25
      %v2821 = vadd.f32 %v2813, 0.25
      %v2822 = vadd.f32 %v2814, 0.25
      %v2823 = vadd.f32 %v2815, 0.25
      %v2824 = vadd.f32 %v2816, 0.25
      %v2825 = vmul.f32 %v2705, %v2817
      %v2826 = vmul.f32 %v2706, %v2818
      %v2827 = vmul.f32 %v2707, %v2819
      %v2828 = vmul.f32 %v2708, %v2820
      %v2829 = vmul.f32 %v2709, %v2821
      %v2830 = vmul.f32 %v2710, %v2822
      %v2831 = vmul.f32 %v2711, %v2823
      %v2832 = vmul.f32 %v2712, %v2824
      %v2833 = vadd.f32 %v2825, 2.4
      %v2834 = vadd.f32 %v2826, 2.4
      %v2835 = vadd.f32 %v2827, 2.4
      %v2836 = vadd.f32 %v2828, 2.4
      %v2837 = vadd.f32 %v2829, 2.4
      %v2838 = vadd.f32 %v2830, 2.4
      %v2839 = vadd.f32 %v2831, 2.4
      %v2840 = vadd.f32 %v2832, 2.4
      %v2841 = vmul.f32 %v2705, %v2833
      %v2842 = vmul.f32 %v2706, %v2834
      %v2843 = vmul.f32 %v2707, %v2835
      %v2844 = vmul.f32 %v2708, %v2836
      %v2845 = vmul.f32 %v2709, %v2837
      %v2846 = vmul.f32 %v2710, %v2838
      %v2847 = vmul.f32 %v2711, %v2839
      %v2848 = vmul.f32 %v2712, %v2840
      %v2849 = vand.u32 2147483647, %v2841
      %v2850 = vand.u32 2147483647, %v2842
      %v2851 = vand.u32 2147483647, %v2843
      %v2852 = vand.u32 2147483647, %v2844
      %v2853 = vand.u32 2147483647, %v2845
      %v2854 = vand.u32 2147483647, %v2846
      %v2855 = vand.u32 2147483647, %v2847
      %v2856 = vand.u32 2147483647, %v2848
      %v2857 = vadd.f32 %v2849, 1.0
      %v2858 = vadd.f32 %v2850, 1.0
      %v2859 = vadd.f32 %v2851, 1.0
      %v2860 = vadd.f32 %v2852, 1.0
      %v2861 = vadd.f32 %v2853, 1.0
      %v2862 = vadd.f32 %v2854, 1.0
      %v2863 = vadd.f32 %v2855, 1.0
      %v2864 = vadd.f32 %v2856, 1.0
      %v2865 = vrcp.pop %v2857
      %v2866 = vrcp.pop %v2858
      %v2867 = vrcp.pop %v2859
      %v2868 = vrcp.pop %v2860
      %v2869 = vrcp.pop %v2861
      %v2870 = vrcp.pop %v2862
      %v2871 = vrcp.pop %v2863
      %v2872 = vrcp.pop %v2864
      %v2873 = vmul.f32 %v2785, %v2865
      %v2874 = vmul.f32 %v2786, %v2866
      %v2875 = vmul.f32 %v2787, %v2867
      %v2876 = vmul.f32 %v2788, %v2868
      %v2877 = vmul.f32 %v2789, %v2869
      %v2878 = vmul.f32 %v2790, %v2870
      %v2879 = vmul.f32 %v2791, %v2871
      %v2880 = vmul.f32 %v2792, %v2872
      %v2881 = vpack.c.bf16 %v2874, %v2873
      %v2882 = vpack.c.bf16 %v2876, %v2875
      %v2883 = vpack.c.bf16 %v2878, %v2877
      %v2884 = vpack.c.bf16 %v2880, %v2879
      %v2889 = vunpack.c.l.b16 %v2881
      %v2890 = vunpack.c.h.b16 %v2881
      %v2891 = vunpack.c.l.b16 %v2882
      %v2892 = vunpack.c.h.b16 %v2882
      %v2893 = vunpack.c.l.b16 %v2883
      %v2894 = vunpack.c.h.b16 %v2883
      %v2895 = vunpack.c.l.b16 %v2884
      %v2896 = vunpack.c.h.b16 %v2884
      %v2897 = vpack.c.b16 %v2889, %v2889
      %v2898 = vpack.c.b16 %v2890, %v2890
      %v2899 = vpack.c.b16 %v2891, %v2891
      %v2900 = vpack.c.b16 %v2892, %v2892
      %v2901 = vpack.c.b16 %v2893, %v2893
      %v2902 = vpack.c.b16 %v2894, %v2894
      %v2903 = vpack.c.b16 %v2895, %v2895
      %v2904 = vpack.c.b16 %v2896, %v2896
      %2913 = vst.msk [vmem:[%s278] sm:$0xf] %vm1167, %v2897
      %2914 = vst.msk [vmem:[%s278 + $0x4] sm:$0xf] %vm1167, %v2898
      %2915 = vst.msk [vmem:[%s278 + $0x8] sm:$0xf] %vm1167, %v2899
      %2916 = vst.msk [vmem:[%s278 + $0xc] sm:$0xf] %vm1167, %v2900
      %2917 = vst.msk [vmem:[%s278 + $0x10] sm:$0xf] %vm1167, %v2901
      %2918 = vst.msk [vmem:[%s278 + $0x14] sm:$0xf] %vm1167, %v2902
      %2919 = vst.msk [vmem:[%s278 + $0x18] sm:$0xf] %vm1167, %v2903
      %2920 = vst.msk [vmem:[%s278 + $0x1c] sm:$0xf] %vm1167, %v2904
      %p2921 = scmp.lt.s32.totalorder %s18, 1
      %s2922 = scalar_select %p2921, %s18, 1
      %s2923 = smul.addr %s2922, 8
      %s2924 = smul.addr %s2923, 4
      %s2925 = scalar_lea.vmem %s7, %s2924
      // Predicated region
      $region49: #{_lambda_.2} parent=47 // pred_check
        %p2926 = pneg %p188
      $region50: #{_lambda_.2} parent=47 // pred_check_branch
        %2928 = sbr.rel (%p2926) target = $region52
      $region51: #{_lambda_.2} parent=47 // pred_region
        _
      $region52: #{_lambda_.2} parent=47 // pred_fallthru
        _
    $region48: #{_lambda_.2} parent=5 // pred_fallthru
      _
    %p2929 = scmp.le.s32.totalorder 2, %s13
    // Predicated region
    $region53: #{_lambda_.2} parent=5 // pred_check
      %p2930 = pneg %p2929
    $region54: #{_lambda_.2} parent=5 // pred_check_branch
      %2932 = sbr.rel (%p2930) target = $region56
    $region55: #{_lambda_.2} parent=5 // pred_region
      %s2933 = ssub.s32 %s13, 2
      // Predicated region
      $region57: #{_lambda_.2} parent=55 // pred_check
        %p2934 = pneg %p194
      $region58: #{_lambda_.2} parent=55 // pred_check_branch
        %2936 = sbr.rel (%p2934) target = $region60
      $region59: #{_lambda_.2} parent=55 // pred_region
        %p2937 = scmp.lt.s32.totalorder %s19, 1
        %s2938 = scalar_select %p2937, %s19, 1
        %s2939 = smul.addr %s2938, 8
        %s2940 = smul.addr %s2939, 4
        %s2941 = scalar_lea.vmem %s7, %s2940
      $region60: #{_lambda_.2} parent=55 // pred_fallthru
        _
    $region56: #{_lambda_.2} parent=5 // pred_fallthru
      _
  $region6: #{_lambda_.2} parent=0 // loop_footer
    %s17 = sadd.s32 1, %s13
  $region7: #{_lambda_.2} parent=0 // loop_footer_branch
    %12 = sbr.rel target = $region3
  $region8: #{_lambda_.2} parent=0 // loop_exit
    _

</llo_original>
